<compile_context>
chip_gen: v7x
topology: tpu7x:2x2x1
jax: 0.10.0
libtpu: 0.0.40
codegen_flags: <defaults>
</compile_context>

<pallas_src>
import functools
import math

import jax
import jax.numpy as jnp
from jax.experimental import pallas as pl
from jax.experimental.pallas import tpu as pltpu

# ----------------------------- config ---------------------------------------
VOCAB = 32
TYPE_VOCAB = 2
MAX_POS = 16
HIDDEN = 128
N_HEADS = 2
HEAD_DIM = HIDDEN // N_HEADS          # 64 (logical)
DH_PAD = 128                          # lane-aligned head slab width
QKV_W = 3 * N_HEADS * DH_PAD          # 768 fused, head-padded QKV output width
CTX_W = N_HEADS * DH_PAD              # 256 padded context width feeding W_O
INTERMEDIATE = 256
N_LAYERS = 2
CLASS_SIZE = 2
CLS_PAD = 128                         # pad classifier output to a full lane width
LN_EPS = 1e-12

BATCH = 2
SEQ = 8


# ----------------------------- fused kernel ---------------------------------
def _bert_fused_kernel(
    x_in_ref, mask_ref, emb_g_ref, emb_b_ref,
    wqkv_ref, bqkv_ref, wo_ref, bo_ref,
    ln1_g_ref, ln1_b_ref,
    w1_ref, b1_ref, w2_ref, b2_ref,
    ln2_g_ref, ln2_b_ref,
    pool_w_ref, pool_b_ref,
    cls_w_ref, cls_b_ref,
    out_ref,
    x_scr, ctx_scr,
    *, batch, seq,
):
    """One encoder layer per grid step; pooler + classifier on the last step."""
    layer = pl.program_id(0)
    scale = 1.0 / math.sqrt(HEAD_DIM)
    bf16 = jnp.bfloat16

    def layernorm(v, g, b):
        mean = jnp.mean(v, axis=-1, keepdims=True)
        cent = v - mean
        var = jnp.mean(cent * cent, axis=-1, keepdims=True)
        return cent * jax.lax.rsqrt(var + LN_EPS) * g + b

    # --- embedding LayerNorm once, on the first grid step; activations then
    #     live in x_scr (VMEM) for the whole forward pass ---
    @pl.when(layer == 0)
    def _():
        x_scr[...] = layernorm(x_in_ref[...], emb_g_ref[...], emb_b_ref[...])

    x = x_scr[...]                                   # (B*S, H) f32
    mask = mask_ref[...]                             # (B, S) additive mask

    # --- fused, head-padded QKV projection (bf16 MXU operands, f32 acc) ---
    qkv = jnp.dot(x.astype(bf16), wqkv_ref[...],
                  preferred_element_type=jnp.float32) + bqkv_ref[...]   # (B*S, QKV_W)

    # --- attention: static (batch, head) tiles; each head slab is a full
    #     128-lane block, results written straight into ctx scratch ---
    for b in range(batch):
        r0 = b * seq
        m_b = mask[b:b + 1, :]                       # (1, S)
        for h in range(N_HEADS):
            c0 = 3 * h * DH_PAD
            qb = qkv[r0:r0 + seq, c0:c0 + DH_PAD]                    # (S, 128)
            kb = qkv[r0:r0 + seq, c0 + DH_PAD:c0 + 2 * DH_PAD]       # (S, 128)
            vb = qkv[r0:r0 + seq, c0 + 2 * DH_PAD:c0 + 3 * DH_PAD]   # (S, 128)
            # padded lanes of q/k are exactly zero, so contracting over 128
            # dims equals the logical 64-dim head dot product.
            s = jax.lax.dot_general(
                qb.astype(bf16), kb.astype(bf16),
                dimension_numbers=(((1,), (1,)), ((), ())),
                preferred_element_type=jnp.float32) * scale + m_b    # (S, S)
            # No max-subtraction: LayerNormed inputs, scale=1/8, mask >= -1e4
            # => exp() cannot overflow in f32; masked entries underflow to 0.
            p = jnp.exp(s)
            p = p * pl.reciprocal(jnp.sum(p, axis=-1, keepdims=True), approx=True)
            pv = jnp.dot(p.astype(bf16), vb.astype(bf16),
                         preferred_element_type=jnp.float32)         # (S, 128)
            ctx_scr[r0:r0 + seq, h * DH_PAD:(h + 1) * DH_PAD] = pv

    # output projection (padded ctx rows of wo are zero -> identical result)
    attn = jnp.dot(ctx_scr[...].astype(bf16), wo_ref[...],
                   preferred_element_type=jnp.float32) + bo_ref[...]
    x = layernorm(attn + x, ln1_g_ref[...], ln1_b_ref[...])

    # --- feed-forward (bf16 MXU operands, f32 elementwise) ---
    h1 = jnp.dot(x.astype(bf16), w1_ref[...],
                 preferred_element_type=jnp.float32) + b1_ref[...]
    # tanh-approx GELU kept in f32.
    # TODO(synk): exact erf-GELU to match HF BERT bit-for-bit.
    h1 = 0.5 * h1 * (1.0 + jnp.tanh(
        0.7978845608028654 * (h1 + 0.044715 * h1 * h1 * h1)))
    ff = jnp.dot(h1.astype(bf16), w2_ref[...],
                 preferred_element_type=jnp.float32) + b2_ref[...]
    x = layernorm(ff + x, ln2_g_ref[...], ln2_b_ref[...])
    x_scr[...] = x

    # --- pooler + classifier on the last grid step ---
    @pl.when(layer == pl.num_programs(0) - 1)
    def _():
        # CLS rows via one strided VMEM read (rows 0, seq, 2*seq, ...).
        cls_tok = x_scr[pl.ds(0, batch, stride=seq), :]              # (B, H)
        pooled = jnp.tanh(
            jnp.dot(cls_tok.astype(bf16), pool_w_ref[...],
                    preferred_element_type=jnp.float32) + pool_b_ref[...])
        out_ref[...] = (jnp.dot(pooled.astype(bf16), cls_w_ref[...],
                                preferred_element_type=jnp.float32)
                        + cls_b_ref[...])


# ----------------------------- weight packing --------------------------------
def _pack_qkv(wq, wk, wv, bq, bk, bv):
    """Pack per-head Q/K/V into one lane-aligned (H, 3*NH*128) slab.

    Head h's Q/K/V occupy the 128-lane column blocks (3h+0/1/2)*128; only the
    first HEAD_DIM columns of each block carry data, the rest are zero so the
    padded lanes contribute nothing to scores or context."""
    w = jnp.zeros((HIDDEN, QKV_W), jnp.float32)
    b = jnp.zeros((QKV_W,), jnp.float32)
    for h in range(N_HEADS):
        for j, (wj, bj) in enumerate(((wq, bq), (wk, bk), (wv, bv))):
            c0 = (3 * h + j) * DH_PAD
            w = w.at[:, c0:c0 + HEAD_DIM].set(wj[:, h * HEAD_DIM:(h + 1) * HEAD_DIM])
            b = b.at[c0:c0 + HEAD_DIM].set(bj[h * HEAD_DIM:(h + 1) * HEAD_DIM])
    return w, b[None, :]


def _pack_wo(wo):
    """Zero-pad attention output-projection rows to match the 128-lane head slabs."""
    w = jnp.zeros((CTX_W, HIDDEN), jnp.float32)
    for h in range(N_HEADS):
        w = w.at[h * DH_PAD:h * DH_PAD + HEAD_DIM, :].set(
            wo[h * HEAD_DIM:(h + 1) * HEAD_DIM, :])
    return w


# ----------------------------- parameters -----------------------------------
def init_params(key):
    def nrm(k, shape, scale=0.02):
        return (scale * jax.random.normal(k, shape)).astype(jnp.float32)

    keys = iter(jax.random.split(key, 32))
    zb = jnp.zeros((HIDDEN,), jnp.float32)

    wqkv_l, bqkv_l, wo_l, w1_l, w2_l = [], [], [], [], []
    for _ in range(N_LAYERS):
        wq = nrm(next(keys), (HIDDEN, HIDDEN))
        wk = nrm(next(keys), (HIDDEN, HIDDEN))
        wv = nrm(next(keys), (HIDDEN, HIDDEN))
        w_pack, b_pack = _pack_qkv(wq, wk, wv, zb, zb, zb)
        wqkv_l.append(w_pack)
        bqkv_l.append(b_pack)
        wo_l.append(_pack_wo(nrm(next(keys), (HIDDEN, HIDDEN))))
        w1_l.append(nrm(next(keys), (HIDDEN, INTERMEDIATE)))
        w2_l.append(nrm(next(keys), (INTERMEDIATE, HIDDEN)))

    p = {
        "word_emb": nrm(next(keys), (VOCAB, HIDDEN)),
        "type_emb": nrm(next(keys), (TYPE_VOCAB, HIDDEN)),
        "pos_emb": nrm(next(keys), (MAX_POS, HIDDEN)),
        "emb_ln_g": jnp.ones((1, HIDDEN), jnp.float32),
        "emb_ln_b": jnp.zeros((1, HIDDEN), jnp.float32),
        # per-layer weights: MXU operands stored bf16, biases / LN params f32
        "wqkv": jnp.stack(wqkv_l).astype(jnp.bfloat16),            # (L, H, QKV_W)
        "bqkv": jnp.stack(bqkv_l),                                  # (L, 1, QKV_W)
        "wo": jnp.stack(wo_l).astype(jnp.bfloat16),                 # (L, CTX_W, H)
        "bo": jnp.zeros((N_LAYERS, 1, HIDDEN), jnp.float32),
        "ln1_g": jnp.ones((N_LAYERS, 1, HIDDEN), jnp.float32),
        "ln1_b": jnp.zeros((N_LAYERS, 1, HIDDEN), jnp.float32),
        "w1": jnp.stack(w1_l).astype(jnp.bfloat16),                 # (L, H, I)
        "b1": jnp.zeros((N_LAYERS, 1, INTERMEDIATE), jnp.float32),
        "w2": jnp.stack(w2_l).astype(jnp.bfloat16),                 # (L, I, H)
        "b2": jnp.zeros((N_LAYERS, 1, HIDDEN), jnp.float32),
        "ln2_g": jnp.ones((N_LAYERS, 1, HIDDEN), jnp.float32),
        "ln2_b": jnp.zeros((N_LAYERS, 1, HIDDEN), jnp.float32),
        "pool_w": nrm(next(keys), (HIDDEN, HIDDEN)).astype(jnp.bfloat16),
        "pool_b": jnp.zeros((1, HIDDEN), jnp.float32),
        "cls_w_pad": jnp.pad(nrm(next(keys), (HIDDEN, CLASS_SIZE)),
                             ((0, 0), (0, CLS_PAD - CLASS_SIZE))).astype(jnp.bfloat16),
        "cls_b_pad": jnp.zeros((1, CLS_PAD), jnp.float32),
    }
    return p


# ----------------------------- forward pass ----------------------------------
def bert_sst2_forward(params, input_ids, input_tyi, input_attn_mask):
    B, S = input_ids.shape

    # --- embeddings (gathers are glue, done in plain JAX) ---
    pos_ids = jnp.arange(S)
    emb = (jnp.take(params["word_emb"], input_ids, axis=0)
           + jnp.take(params["type_emb"], input_tyi, axis=0)
           + params["pos_emb"][pos_ids][None, :, :])                # (B, S, H)
    x = emb.reshape(B * S, HIDDEN).astype(jnp.float32)

    # additive attention mask (B, S): 0 where attend, -10000 where masked
    add_mask = (1.0 - input_attn_mask.astype(jnp.float32)) * -10000.0

    def rep(shape):                       # grid-invariant (resident) block
        return pl.BlockSpec(shape, lambda l: (0,) * len(shape))

    def per_layer(tail):                  # one layer slab per grid step
        return pl.BlockSpec((None,) + tail, lambda l: (l,) + (0,) * len(tail))

    grid_spec = pltpu.PrefetchScalarGridSpec(
        num_scalar_prefetch=0,
        grid=(N_LAYERS,),
        in_specs=[
            rep((B * S, HIDDEN)),                    # embeddings
            rep((B, S)),                             # additive mask
            rep((1, HIDDEN)), rep((1, HIDDEN)),      # embedding LN
            per_layer((HIDDEN, QKV_W)), per_layer((1, QKV_W)),          # QKV
            per_layer((CTX_W, HIDDEN)), per_layer((1, HIDDEN)),         # W_O
            per_layer((1, HIDDEN)), per_layer((1, HIDDEN)),             # LN1
            per_layer((HIDDEN, INTERMEDIATE)), per_layer((1, INTERMEDIATE)),  # W1
            per_layer((INTERMEDIATE, HIDDEN)), per_layer((1, HIDDEN)),  # W2
            per_layer((1, HIDDEN)), per_layer((1, HIDDEN)),             # LN2
            rep((HIDDEN, HIDDEN)), rep((1, HIDDEN)),                    # pooler
            rep((HIDDEN, CLS_PAD)), rep((1, CLS_PAD)),                  # classifier
        ],
        out_specs=pl.BlockSpec((B, CLS_PAD), lambda l: (0, 0)),
        scratch_shapes=[
            pltpu.VMEM((B * S, HIDDEN), jnp.float32),   # residual stream
            pltpu.VMEM((B * S, CTX_W), jnp.float32),    # attention context
        ],
    )

    logits_pad = pl.pallas_call(
        functools.partial(_bert_fused_kernel, batch=B, seq=S),
        out_shape=jax.ShapeDtypeStruct((B, CLS_PAD), jnp.float32),
        grid_spec=grid_spec,
        compiler_params=pltpu.CompilerParams(
            dimension_semantics=("arbitrary",)),
    )(
        x, add_mask,
        params["emb_ln_g"], params["emb_ln_b"],
        params["wqkv"], params["bqkv"], params["wo"], params["bo"],
        params["ln1_g"], params["ln1_b"],
        params["w1"], params["b1"], params["w2"], params["b2"],
        params["ln2_g"], params["ln2_b"],
        params["pool_w"], params["pool_b"],
        params["cls_w_pad"], params["cls_b_pad"],
    )
    return logits_pad[:, :CLASS_SIZE]                               # (B, CLASS_SIZE)


# ----------------------------- main ------------------------------------------
if __name__ == "__main__":
    key = jax.random.PRNGKey(0)
    pkey, ikey = jax.random.split(key)

    params = init_params(pkey)

    input_ids = jax.random.randint(ikey, (BATCH, SEQ), 0, VOCAB, dtype=jnp.int32)
    input_tyi = jnp.zeros((BATCH, SEQ), dtype=jnp.int32)
    # mask out the last two tokens of the second example to exercise masking
    input_attn_mask = jnp.array(
        [[1] * SEQ, [1] * (SEQ - 2) + [0, 0]], dtype=jnp.int32)

    logits = jax.jit(bert_sst2_forward)(params, input_ids, input_tyi, input_attn_mask)
    logits = jax.block_until_ready(logits)

    assert logits.shape == (BATCH, CLASS_SIZE)
    assert bool(jnp.all(jnp.isfinite(logits)))
    print("KERNEL_OK")
</pallas_src>

<mosaic_0001>
module attributes {stable_mosaic.version = 11 : i64} {
  func.func @_bert_fused_kernel(%arg0: i32, %arg1: memref<16x128xf32, #tpu.memory_space<vmem>>, %arg2: memref<2x8xf32, #tpu.memory_space<vmem>>, %arg3: memref<1x128xf32, #tpu.memory_space<vmem>>, %arg4: memref<1x128xf32, #tpu.memory_space<vmem>>, %arg5: memref<1x128x768xbf16, #tpu.memory_space<vmem>>, %arg6: memref<1x1x768xf32, #tpu.memory_space<vmem>>, %arg7: memref<1x256x128xbf16, #tpu.memory_space<vmem>>, %arg8: memref<1x1x128xf32, #tpu.memory_space<vmem>>, %arg9: memref<1x1x128xf32, #tpu.memory_space<vmem>>, %arg10: memref<1x1x128xf32, #tpu.memory_space<vmem>>, %arg11: memref<1x128x256xbf16, #tpu.memory_space<vmem>>, %arg12: memref<1x1x256xf32, #tpu.memory_space<vmem>>, %arg13: memref<1x256x128xbf16, #tpu.memory_space<vmem>>, %arg14: memref<1x1x128xf32, #tpu.memory_space<vmem>>, %arg15: memref<1x1x128xf32, #tpu.memory_space<vmem>>, %arg16: memref<1x1x128xf32, #tpu.memory_space<vmem>>, %arg17: memref<128x128xbf16, #tpu.memory_space<vmem>>, %arg18: memref<1x128xf32, #tpu.memory_space<vmem>>, %arg19: memref<128x128xbf16, #tpu.memory_space<vmem>>, %arg20: memref<1x128xf32, #tpu.memory_space<vmem>>, %arg21: memref<2x128xf32, #tpu.memory_space<vmem>>, %arg22: memref<16x128xf32, #tpu.memory_space<vmem>>, %arg23: memref<16x256xf32, #tpu.memory_space<vmem>>) attributes {dimension_semantics = [#tpu.dimension_semantics<arbitrary>], iteration_bounds = array<i64: 2>, scalar_prefetch = 0 : i64, scratch_operands = 2 : i64, tpu.core_type = #tpu.core_type<tc>, window_params = [{pipeline_mode = #tpu.pipeline_mode<synchronous>, transform_indices = @transform_0, window_bounds = array<i64: 16, 128>}, {pipeline_mode = #tpu.pipeline_mode<synchronous>, transform_indices = @transform_1, window_bounds = array<i64: 2, 8>}, {pipeline_mode = #tpu.pipeline_mode<synchronous>, transform_indices = @transform_2, window_bounds = array<i64: 1, 128>}, {pipeline_mode = #tpu.pipeline_mode<synchronous>, transform_indices = @transform_3, window_bounds = array<i64: 1, 128>}, {transform_indices = @transform_4, window_bounds = array<i64: 1, 128, 768>}, {transform_indices = @transform_5, window_bounds = array<i64: 1, 1, 768>}, {transform_indices = @transform_6, window_bounds = array<i64: 1, 256, 128>}, {transform_indices = @transform_7, window_bounds = array<i64: 1, 1, 128>}, {transform_indices = @transform_8, window_bounds = array<i64: 1, 1, 128>}, {transform_indices = @transform_9, window_bounds = array<i64: 1, 1, 128>}, {transform_indices = @transform_10, window_bounds = array<i64: 1, 128, 256>}, {transform_indices = @transform_11, window_bounds = array<i64: 1, 1, 256>}, {transform_indices = @transform_12, window_bounds = array<i64: 1, 256, 128>}, {transform_indices = @transform_13, window_bounds = array<i64: 1, 1, 128>}, {transform_indices = @transform_14, window_bounds = array<i64: 1, 1, 128>}, {transform_indices = @transform_15, window_bounds = array<i64: 1, 1, 128>}, {pipeline_mode = #tpu.pipeline_mode<synchronous>, transform_indices = @transform_16, window_bounds = array<i64: 128, 128>}, {pipeline_mode = #tpu.pipeline_mode<synchronous>, transform_indices = @transform_17, window_bounds = array<i64: 1, 128>}, {pipeline_mode = #tpu.pipeline_mode<synchronous>, transform_indices = @transform_18, window_bounds = array<i64: 128, 128>}, {pipeline_mode = #tpu.pipeline_mode<synchronous>, transform_indices = @transform_19, window_bounds = array<i64: 1, 128>}, {pipeline_mode = #tpu.pipeline_mode<synchronous>, transform_indices = @transform_20, window_bounds = array<i64: 2, 128>}]} {
    %c0_i32 = arith.constant 0 : i32
    %0 = arith.cmpi eq, %arg0, %c0_i32 : i32
    %1 = arith.extui %0 : i1 to i32
    %c0_i32_0 = arith.constant 0 : i32
    %2 = arith.cmpi ne, %1, %c0_i32_0 : i32
    scf.if %2 {
      %c0_84 = arith.constant 0 : index
      %c0_85 = arith.constant 0 : index
      %187 = vector.load %arg1[%c0_84, %c0_85] : memref<16x128xf32, #tpu.memory_space<vmem>>, vector<16x128xf32>
      %c0_86 = arith.constant 0 : index
      %c0_87 = arith.constant 0 : index
      %188 = vector.load %arg3[%c0_86, %c0_87] : memref<1x128xf32, #tpu.memory_space<vmem>>, vector<1x128xf32>
      %c0_88 = arith.constant 0 : index
      %c0_89 = arith.constant 0 : index
      %189 = vector.load %arg4[%c0_88, %c0_89] : memref<1x128xf32, #tpu.memory_space<vmem>>, vector<1x128xf32>
      %cst_90 = arith.constant dense<0.000000e+00> : vector<16xf32>
      %190 = vector.multi_reduction <add>, %187, %cst_90 [1] : vector<16x128xf32> to vector<16xf32>
      %191 = vector.shape_cast %190 : vector<16xf32> to vector<16x1xf32>
      %cst_91 = arith.constant 1.280000e+02 : f32
      %192 = vector.broadcast %cst_91 : f32 to vector<16x1xf32>
      %193 = arith.divf %191, %192 : vector<16x1xf32>
      %194 = vector.broadcast %193 : vector<16x1xf32> to vector<16x128xf32>
      %195 = arith.subf %187, %194 : vector<16x128xf32>
      %196 = arith.mulf %195, %195 : vector<16x128xf32>
      %cst_92 = arith.constant dense<0.000000e+00> : vector<16xf32>
      %197 = vector.multi_reduction <add>, %196, %cst_92 [1] : vector<16x128xf32> to vector<16xf32>
      %198 = vector.shape_cast %197 : vector<16xf32> to vector<16x1xf32>
      %cst_93 = arith.constant 1.280000e+02 : f32
      %199 = vector.broadcast %cst_93 : f32 to vector<16x1xf32>
      %200 = arith.divf %198, %199 : vector<16x1xf32>
      %cst_94 = arith.constant 9.99999996E-13 : f32
      %201 = vector.broadcast %cst_94 : f32 to vector<16x1xf32>
      %202 = arith.addf %200, %201 : vector<16x1xf32>
      %203 = math.rsqrt %202 : vector<16x1xf32>
      %204 = vector.broadcast %203 : vector<16x1xf32> to vector<16x128xf32>
      %205 = arith.mulf %195, %204 : vector<16x128xf32>
      %206 = vector.broadcast %188 : vector<1x128xf32> to vector<16x128xf32>
      %207 = arith.mulf %205, %206 : vector<16x128xf32>
      %208 = vector.broadcast %189 : vector<1x128xf32> to vector<16x128xf32>
      %209 = arith.addf %207, %208 : vector<16x128xf32>
      %c0_95 = arith.constant 0 : index
      %c0_96 = arith.constant 0 : index
      %210 = vector.load %arg22[%c0_95, %c0_96] : memref<16x128xf32, #tpu.memory_space<vmem>>, vector<16x128xf32>
      tpu.vector_store %arg22[%c0_95, %c0_96], %209 {strides = array<i32>} : memref<16x128xf32, #tpu.memory_space<vmem>>, vector<16x128xf32>,
    } else {
    }
    %c0 = arith.constant 0 : index
    %c0_1 = arith.constant 0 : index
    %3 = vector.load %arg22[%c0, %c0_1] : memref<16x128xf32, #tpu.memory_space<vmem>>, vector<16x128xf32>
    %c0_2 = arith.constant 0 : index
    %c0_3 = arith.constant 0 : index
    %4 = vector.load %arg2[%c0_2, %c0_3] : memref<2x8xf32, #tpu.memory_space<vmem>>, vector<2x8xf32>
    %5 = arith.truncf %3 : vector<16x128xf32> to vector<16x128xbf16>
    %c0_4 = arith.constant 0 : index
    %c0_5 = arith.constant 0 : index
    %c0_6 = arith.constant 0 : index
    %6 = vector.load %arg5[%c0_4, %c0_5, %c0_6] : memref<1x128x768xbf16, #tpu.memory_space<vmem>>, vector<1x128x768xbf16>
    %7 = vector.shape_cast %6 : vector<1x128x768xbf16> to vector<128x768xbf16>
    %cst = arith.constant dense<0.000000e+00> : vector<16x768xf32>
    %8 = tpu.matmul %5, %7, %cst {dimension_numbers = #tpu.dot_dimension_numbers<[1], [0], [0], [1], [0, 0, 1, 1], [], []>} : vector<16x128xbf16>, vector<128x768xbf16>, vector<16x768xf32> -> vector<16x768xf32>
    %c0_7 = arith.constant 0 : index
    %c0_8 = arith.constant 0 : index
    %c0_9 = arith.constant 0 : index
    %9 = vector.load %arg6[%c0_7, %c0_8, %c0_9] : memref<1x1x768xf32, #tpu.memory_space<vmem>>, vector<1x1x768xf32>
    %10 = vector.shape_cast %9 : vector<1x1x768xf32> to vector<1x768xf32>
    %11 = vector.broadcast %10 : vector<1x768xf32> to vector<16x768xf32>
    %12 = arith.addf %8, %11 : vector<16x768xf32>
    %13 = vector.extract_strided_slice %4 {offsets = [0, 0], sizes = [1, 8], strides = [1, 1]} : vector<2x8xf32> to vector<1x8xf32>
    %14 = vector.extract_strided_slice %12 {offsets = [0, 0], sizes = [8, 128], strides = [1, 1]} : vector<16x768xf32> to vector<8x128xf32>
    %15 = vector.extract_strided_slice %12 {offsets = [0, 128], sizes = [8, 128], strides = [1, 1]} : vector<16x768xf32> to vector<8x128xf32>
    %16 = vector.extract_strided_slice %12 {offsets = [0, 256], sizes = [8, 128], strides = [1, 1]} : vector<16x768xf32> to vector<8x128xf32>
    %17 = arith.truncf %14 : vector<8x128xf32> to vector<8x128xbf16>
    %18 = arith.truncf %15 : vector<8x128xf32> to vector<8x128xbf16>
    %cst_10 = arith.constant dense<0.000000e+00> : vector<8x8xf32>
    %19 = tpu.matmul %17, %18, %cst_10 {dimension_numbers = #tpu.dot_dimension_numbers<[1], [1], [0], [0], [0, 0, 1, 0], [], []>} : vector<8x128xbf16>, vector<8x128xbf16>, vector<8x8xf32> -> vector<8x8xf32>
    %cst_11 = arith.constant 1.250000e-01 : f32
    %20 = vector.broadcast %cst_11 : f32 to vector<8x8xf32>
    %21 = arith.mulf %19, %20 : vector<8x8xf32>
    %22 = vector.broadcast %13 : vector<1x8xf32> to vector<8x8xf32>
    %23 = arith.addf %21, %22 : vector<8x8xf32>
    %24 = math.exp %23 : vector<8x8xf32>
    %cst_12 = arith.constant dense<0.000000e+00> : vector<8xf32>
    %25 = vector.multi_reduction <add>, %24, %cst_12 [1] : vector<8x8xf32> to vector<8xf32>
    %26 = vector.shape_cast %25 : vector<8xf32> to vector<8x1xf32>
    %27 = tpu.reciprocal %26 {approx = true} : vector<8x1xf32> -> vector<8x1xf32>
    %28 = vector.broadcast %27 : vector<8x1xf32> to vector<8x8xf32>
    %29 = arith.mulf %24, %28 : vector<8x8xf32>
    %30 = arith.truncf %29 : vector<8x8xf32> to vector<8x8xbf16>
    %31 = arith.truncf %16 : vector<8x128xf32> to vector<8x128xbf16>
    %cst_13 = arith.constant dense<0.000000e+00> : vector<8x128xf32>
    %32 = tpu.matmul %30, %31, %cst_13 {dimension_numbers = #tpu.dot_dimension_numbers<[1], [0], [0], [1], [0, 0, 1, 1], [], []>} : vector<8x8xbf16>, vector<8x128xbf16>, vector<8x128xf32> -> vector<8x128xf32>
    %c0_14 = arith.constant 0 : index
    %c0_15 = arith.constant 0 : index
    %33 = vector.load %arg23[%c0_14, %c0_15] : memref<16x256xf32, #tpu.memory_space<vmem>>, vector<8x128xf32>
    tpu.vector_store %arg23[%c0_14, %c0_15], %32 {strides = array<i32>} : memref<16x256xf32, #tpu.memory_space<vmem>>, vector<8x128xf32>,
    %34 = vector.extract_strided_slice %12 {offsets = [0, 384], sizes = [8, 128], strides = [1, 1]} : vector<16x768xf32> to vector<8x128xf32>
    %35 = vector.extract_strided_slice %12 {offsets = [0, 512], sizes = [8, 128], strides = [1, 1]} : vector<16x768xf32> to vector<8x128xf32>
    %36 = vector.extract_strided_slice %12 {offsets = [0, 640], sizes = [8, 128], strides = [1, 1]} : vector<16x768xf32> to vector<8x128xf32>
    %37 = arith.truncf %34 : vector<8x128xf32> to vector<8x128xbf16>
    %38 = arith.truncf %35 : vector<8x128xf32> to vector<8x128xbf16>
    %cst_16 = arith.constant dense<0.000000e+00> : vector<8x8xf32>
    %39 = tpu.matmul %37, %38, %cst_16 {dimension_numbers = #tpu.dot_dimension_numbers<[1], [1], [0], [0], [0, 0, 1, 0], [], []>} : vector<8x128xbf16>, vector<8x128xbf16>, vector<8x8xf32> -> vector<8x8xf32>
    %cst_17 = arith.constant 1.250000e-01 : f32
    %40 = vector.broadcast %cst_17 : f32 to vector<8x8xf32>
    %41 = arith.mulf %39, %40 : vector<8x8xf32>
    %42 = vector.broadcast %13 : vector<1x8xf32> to vector<8x8xf32>
    %43 = arith.addf %41, %42 : vector<8x8xf32>
    %44 = math.exp %43 : vector<8x8xf32>
    %cst_18 = arith.constant dense<0.000000e+00> : vector<8xf32>
    %45 = vector.multi_reduction <add>, %44, %cst_18 [1] : vector<8x8xf32> to vector<8xf32>
    %46 = vector.shape_cast %45 : vector<8xf32> to vector<8x1xf32>
    %47 = tpu.reciprocal %46 {approx = true} : vector<8x1xf32> -> vector<8x1xf32>
    %48 = vector.broadcast %47 : vector<8x1xf32> to vector<8x8xf32>
    %49 = arith.mulf %44, %48 : vector<8x8xf32>
    %50 = arith.truncf %49 : vector<8x8xf32> to vector<8x8xbf16>
    %51 = arith.truncf %36 : vector<8x128xf32> to vector<8x128xbf16>
    %cst_19 = arith.constant dense<0.000000e+00> : vector<8x128xf32>
    %52 = tpu.matmul %50, %51, %cst_19 {dimension_numbers = #tpu.dot_dimension_numbers<[1], [0], [0], [1], [0, 0, 1, 1], [], []>} : vector<8x8xbf16>, vector<8x128xbf16>, vector<8x128xf32> -> vector<8x128xf32>
    %c0_20 = arith.constant 0 : index
    %c128 = arith.constant 128 : index
    %53 = vector.load %arg23[%c0_20, %c128] : memref<16x256xf32, #tpu.memory_space<vmem>>, vector<8x128xf32>
    tpu.vector_store %arg23[%c0_20, %c128], %52 {strides = array<i32>} : memref<16x256xf32, #tpu.memory_space<vmem>>, vector<8x128xf32>,
    %54 = vector.extract_strided_slice %4 {offsets = [1, 0], sizes = [1, 8], strides = [1, 1]} : vector<2x8xf32> to vector<1x8xf32>
    %55 = vector.extract_strided_slice %12 {offsets = [8, 0], sizes = [8, 128], strides = [1, 1]} : vector<16x768xf32> to vector<8x128xf32>
    %56 = vector.extract_strided_slice %12 {offsets = [8, 128], sizes = [8, 128], strides = [1, 1]} : vector<16x768xf32> to vector<8x128xf32>
    %57 = vector.extract_strided_slice %12 {offsets = [8, 256], sizes = [8, 128], strides = [1, 1]} : vector<16x768xf32> to vector<8x128xf32>
    %58 = arith.truncf %55 : vector<8x128xf32> to vector<8x128xbf16>
    %59 = arith.truncf %56 : vector<8x128xf32> to vector<8x128xbf16>
    %cst_21 = arith.constant dense<0.000000e+00> : vector<8x8xf32>
    %60 = tpu.matmul %58, %59, %cst_21 {dimension_numbers = #tpu.dot_dimension_numbers<[1], [1], [0], [0], [0, 0, 1, 0], [], []>} : vector<8x128xbf16>, vector<8x128xbf16>, vector<8x8xf32> -> vector<8x8xf32>
    %cst_22 = arith.constant 1.250000e-01 : f32
    %61 = vector.broadcast %cst_22 : f32 to vector<8x8xf32>
    %62 = arith.mulf %60, %61 : vector<8x8xf32>
    %63 = vector.broadcast %54 : vector<1x8xf32> to vector<8x8xf32>
    %64 = arith.addf %62, %63 : vector<8x8xf32>
    %65 = math.exp %64 : vector<8x8xf32>
    %cst_23 = arith.constant dense<0.000000e+00> : vector<8xf32>
    %66 = vector.multi_reduction <add>, %65, %cst_23 [1] : vector<8x8xf32> to vector<8xf32>
    %67 = vector.shape_cast %66 : vector<8xf32> to vector<8x1xf32>
    %68 = tpu.reciprocal %67 {approx = true} : vector<8x1xf32> -> vector<8x1xf32>
    %69 = vector.broadcast %68 : vector<8x1xf32> to vector<8x8xf32>
    %70 = arith.mulf %65, %69 : vector<8x8xf32>
    %71 = arith.truncf %70 : vector<8x8xf32> to vector<8x8xbf16>
    %72 = arith.truncf %57 : vector<8x128xf32> to vector<8x128xbf16>
    %cst_24 = arith.constant dense<0.000000e+00> : vector<8x128xf32>
    %73 = tpu.matmul %71, %72, %cst_24 {dimension_numbers = #tpu.dot_dimension_numbers<[1], [0], [0], [1], [0, 0, 1, 1], [], []>} : vector<8x8xbf16>, vector<8x128xbf16>, vector<8x128xf32> -> vector<8x128xf32>
    %c8 = arith.constant 8 : index
    %c0_25 = arith.constant 0 : index
    %74 = vector.load %arg23[%c8, %c0_25] : memref<16x256xf32, #tpu.memory_space<vmem>>, vector<8x128xf32>
    tpu.vector_store %arg23[%c8, %c0_25], %73 {strides = array<i32>} : memref<16x256xf32, #tpu.memory_space<vmem>>, vector<8x128xf32>,
    %75 = vector.extract_strided_slice %12 {offsets = [8, 384], sizes = [8, 128], strides = [1, 1]} : vector<16x768xf32> to vector<8x128xf32>
    %76 = vector.extract_strided_slice %12 {offsets = [8, 512], sizes = [8, 128], strides = [1, 1]} : vector<16x768xf32> to vector<8x128xf32>
    %77 = vector.extract_strided_slice %12 {offsets = [8, 640], sizes = [8, 128], strides = [1, 1]} : vector<16x768xf32> to vector<8x128xf32>
    %78 = arith.truncf %75 : vector<8x128xf32> to vector<8x128xbf16>
    %79 = arith.truncf %76 : vector<8x128xf32> to vector<8x128xbf16>
    %cst_26 = arith.constant dense<0.000000e+00> : vector<8x8xf32>
    %80 = tpu.matmul %78, %79, %cst_26 {dimension_numbers = #tpu.dot_dimension_numbers<[1], [1], [0], [0], [0, 0, 1, 0], [], []>} : vector<8x128xbf16>, vector<8x128xbf16>, vector<8x8xf32> -> vector<8x8xf32>
    %cst_27 = arith.constant 1.250000e-01 : f32
    %81 = vector.broadcast %cst_27 : f32 to vector<8x8xf32>
    %82 = arith.mulf %80, %81 : vector<8x8xf32>
    %83 = vector.broadcast %54 : vector<1x8xf32> to vector<8x8xf32>
    %84 = arith.addf %82, %83 : vector<8x8xf32>
    %85 = math.exp %84 : vector<8x8xf32>
    %cst_28 = arith.constant dense<0.000000e+00> : vector<8xf32>
    %86 = vector.multi_reduction <add>, %85, %cst_28 [1] : vector<8x8xf32> to vector<8xf32>
    %87 = vector.shape_cast %86 : vector<8xf32> to vector<8x1xf32>
    %88 = tpu.reciprocal %87 {approx = true} : vector<8x1xf32> -> vector<8x1xf32>
    %89 = vector.broadcast %88 : vector<8x1xf32> to vector<8x8xf32>
    %90 = arith.mulf %85, %89 : vector<8x8xf32>
    %91 = arith.truncf %90 : vector<8x8xf32> to vector<8x8xbf16>
    %92 = arith.truncf %77 : vector<8x128xf32> to vector<8x128xbf16>
    %cst_29 = arith.constant dense<0.000000e+00> : vector<8x128xf32>
    %93 = tpu.matmul %91, %92, %cst_29 {dimension_numbers = #tpu.dot_dimension_numbers<[1], [0], [0], [1], [0, 0, 1, 1], [], []>} : vector<8x8xbf16>, vector<8x128xbf16>, vector<8x128xf32> -> vector<8x128xf32>
    %c8_30 = arith.constant 8 : index
    %c128_31 = arith.constant 128 : index
    %94 = vector.load %arg23[%c8_30, %c128_31] : memref<16x256xf32, #tpu.memory_space<vmem>>, vector<8x128xf32>
    tpu.vector_store %arg23[%c8_30, %c128_31], %93 {strides = array<i32>} : memref<16x256xf32, #tpu.memory_space<vmem>>, vector<8x128xf32>,
    %c0_32 = arith.constant 0 : index
    %c0_33 = arith.constant 0 : index
    %95 = vector.load %arg23[%c0_32, %c0_33] : memref<16x256xf32, #tpu.memory_space<vmem>>, vector<16x256xf32>
    %96 = arith.truncf %95 : vector<16x256xf32> to vector<16x256xbf16>
    %c0_34 = arith.constant 0 : index
    %c0_35 = arith.constant 0 : index
    %c0_36 = arith.constant 0 : index
    %97 = vector.load %arg7[%c0_34, %c0_35, %c0_36] : memref<1x256x128xbf16, #tpu.memory_space<vmem>>, vector<1x256x128xbf16>
    %98 = vector.shape_cast %97 : vector<1x256x128xbf16> to vector<256x128xbf16>
    %cst_37 = arith.constant dense<0.000000e+00> : vector<16x128xf32>
    %99 = tpu.matmul %96, %98, %cst_37 {dimension_numbers = #tpu.dot_dimension_numbers<[1], [0], [0], [1], [0, 0, 1, 1], [], []>} : vector<16x256xbf16>, vector<256x128xbf16>, vector<16x128xf32> -> vector<16x128xf32>
    %c0_38 = arith.constant 0 : index
    %c0_39 = arith.constant 0 : index
    %c0_40 = arith.constant 0 : index
    %100 = vector.load %arg8[%c0_38, %c0_39, %c0_40] : memref<1x1x128xf32, #tpu.memory_space<vmem>>, vector<1x1x128xf32>
    %101 = vector.shape_cast %100 : vector<1x1x128xf32> to vector<1x128xf32>
    %102 = vector.broadcast %101 : vector<1x128xf32> to vector<16x128xf32>
    %103 = arith.addf %99, %102 : vector<16x128xf32>
    %104 = arith.addf %103, %3 : vector<16x128xf32>
    %c0_41 = arith.constant 0 : index
    %c0_42 = arith.constant 0 : index
    %c0_43 = arith.constant 0 : index
    %105 = vector.load %arg9[%c0_41, %c0_42, %c0_43] : memref<1x1x128xf32, #tpu.memory_space<vmem>>, vector<1x1x128xf32>
    %106 = vector.shape_cast %105 : vector<1x1x128xf32> to vector<1x128xf32>
    %c0_44 = arith.constant 0 : index
    %c0_45 = arith.constant 0 : index
    %c0_46 = arith.constant 0 : index
    %107 = vector.load %arg10[%c0_44, %c0_45, %c0_46] : memref<1x1x128xf32, #tpu.memory_space<vmem>>, vector<1x1x128xf32>
    %108 = vector.shape_cast %107 : vector<1x1x128xf32> to vector<1x128xf32>
    %cst_47 = arith.constant dense<0.000000e+00> : vector<16xf32>
    %109 = vector.multi_reduction <add>, %104, %cst_47 [1] : vector<16x128xf32> to vector<16xf32>
    %110 = vector.shape_cast %109 : vector<16xf32> to vector<16x1xf32>
    %cst_48 = arith.constant 1.280000e+02 : f32
    %111 = vector.broadcast %cst_48 : f32 to vector<16x1xf32>
    %112 = arith.divf %110, %111 : vector<16x1xf32>
    %113 = vector.broadcast %112 : vector<16x1xf32> to vector<16x128xf32>
    %114 = arith.subf %104, %113 : vector<16x128xf32>
    %115 = arith.mulf %114, %114 : vector<16x128xf32>
    %cst_49 = arith.constant dense<0.000000e+00> : vector<16xf32>
    %116 = vector.multi_reduction <add>, %115, %cst_49 [1] : vector<16x128xf32> to vector<16xf32>
    %117 = vector.shape_cast %116 : vector<16xf32> to vector<16x1xf32>
    %cst_50 = arith.constant 1.280000e+02 : f32
    %118 = vector.broadcast %cst_50 : f32 to vector<16x1xf32>
    %119 = arith.divf %117, %118 : vector<16x1xf32>
    %cst_51 = arith.constant 9.99999996E-13 : f32
    %120 = vector.broadcast %cst_51 : f32 to vector<16x1xf32>
    %121 = arith.addf %119, %120 : vector<16x1xf32>
    %122 = math.rsqrt %121 : vector<16x1xf32>
    %123 = vector.broadcast %122 : vector<16x1xf32> to vector<16x128xf32>
    %124 = arith.mulf %114, %123 : vector<16x128xf32>
    %125 = vector.broadcast %106 : vector<1x128xf32> to vector<16x128xf32>
    %126 = arith.mulf %124, %125 : vector<16x128xf32>
    %127 = vector.broadcast %108 : vector<1x128xf32> to vector<16x128xf32>
    %128 = arith.addf %126, %127 : vector<16x128xf32>
    %129 = arith.truncf %128 : vector<16x128xf32> to vector<16x128xbf16>
    %c0_52 = arith.constant 0 : index
    %c0_53 = arith.constant 0 : index
    %c0_54 = arith.constant 0 : index
    %130 = vector.load %arg11[%c0_52, %c0_53, %c0_54] : memref<1x128x256xbf16, #tpu.memory_space<vmem>>, vector<1x128x256xbf16>
    %131 = vector.shape_cast %130 : vector<1x128x256xbf16> to vector<128x256xbf16>
    %cst_55 = arith.constant dense<0.000000e+00> : vector<16x256xf32>
    %132 = tpu.matmul %129, %131, %cst_55 {dimension_numbers = #tpu.dot_dimension_numbers<[1], [0], [0], [1], [0, 0, 1, 1], [], []>} : vector<16x128xbf16>, vector<128x256xbf16>, vector<16x256xf32> -> vector<16x256xf32>
    %c0_56 = arith.constant 0 : index
    %c0_57 = arith.constant 0 : index
    %c0_58 = arith.constant 0 : index
    %133 = vector.load %arg12[%c0_56, %c0_57, %c0_58] : memref<1x1x256xf32, #tpu.memory_space<vmem>>, vector<1x1x256xf32>
    %134 = vector.shape_cast %133 : vector<1x1x256xf32> to vector<1x256xf32>
    %135 = vector.broadcast %134 : vector<1x256xf32> to vector<16x256xf32>
    %136 = arith.addf %132, %135 : vector<16x256xf32>
    %cst_59 = arith.constant 5.000000e-01 : f32
    %137 = vector.broadcast %cst_59 : f32 to vector<16x256xf32>
    %138 = arith.mulf %137, %136 : vector<16x256xf32>
    %cst_60 = arith.constant 4.471500e-02 : f32
    %139 = vector.broadcast %cst_60 : f32 to vector<16x256xf32>
    %140 = arith.mulf %139, %136 : vector<16x256xf32>
    %141 = arith.mulf %140, %136 : vector<16x256xf32>
    %142 = arith.mulf %141, %136 : vector<16x256xf32>
    %143 = arith.addf %136, %142 : vector<16x256xf32>
    %cst_61 = arith.constant 0.797884583 : f32
    %144 = vector.broadcast %cst_61 : f32 to vector<16x256xf32>
    %145 = arith.mulf %144, %143 : vector<16x256xf32>
    %146 = math.tanh %145 : vector<16x256xf32>
    %cst_62 = arith.constant 1.000000e+00 : f32
    %147 = vector.broadcast %cst_62 : f32 to vector<16x256xf32>
    %148 = arith.addf %147, %146 : vector<16x256xf32>
    %149 = arith.mulf %138, %148 : vector<16x256xf32>
    %150 = arith.truncf %149 : vector<16x256xf32> to vector<16x256xbf16>
    %c0_63 = arith.constant 0 : index
    %c0_64 = arith.constant 0 : index
    %c0_65 = arith.constant 0 : index
    %151 = vector.load %arg13[%c0_63, %c0_64, %c0_65] : memref<1x256x128xbf16, #tpu.memory_space<vmem>>, vector<1x256x128xbf16>
    %152 = vector.shape_cast %151 : vector<1x256x128xbf16> to vector<256x128xbf16>
    %cst_66 = arith.constant dense<0.000000e+00> : vector<16x128xf32>
    %153 = tpu.matmul %150, %152, %cst_66 {dimension_numbers = #tpu.dot_dimension_numbers<[1], [0], [0], [1], [0, 0, 1, 1], [], []>} : vector<16x256xbf16>, vector<256x128xbf16>, vector<16x128xf32> -> vector<16x128xf32>
    %c0_67 = arith.constant 0 : index
    %c0_68 = arith.constant 0 : index
    %c0_69 = arith.constant 0 : index
    %154 = vector.load %arg14[%c0_67, %c0_68, %c0_69] : memref<1x1x128xf32, #tpu.memory_space<vmem>>, vector<1x1x128xf32>
    %155 = vector.shape_cast %154 : vector<1x1x128xf32> to vector<1x128xf32>
    %156 = vector.broadcast %155 : vector<1x128xf32> to vector<16x128xf32>
    %157 = arith.addf %153, %156 : vector<16x128xf32>
    %158 = arith.addf %157, %128 : vector<16x128xf32>
    %c0_70 = arith.constant 0 : index
    %c0_71 = arith.constant 0 : index
    %c0_72 = arith.constant 0 : index
    %159 = vector.load %arg15[%c0_70, %c0_71, %c0_72] : memref<1x1x128xf32, #tpu.memory_space<vmem>>, vector<1x1x128xf32>
    %160 = vector.shape_cast %159 : vector<1x1x128xf32> to vector<1x128xf32>
    %c0_73 = arith.constant 0 : index
    %c0_74 = arith.constant 0 : index
    %c0_75 = arith.constant 0 : index
    %161 = vector.load %arg16[%c0_73, %c0_74, %c0_75] : memref<1x1x128xf32, #tpu.memory_space<vmem>>, vector<1x1x128xf32>
    %162 = vector.shape_cast %161 : vector<1x1x128xf32> to vector<1x128xf32>
    %cst_76 = arith.constant dense<0.000000e+00> : vector<16xf32>
    %163 = vector.multi_reduction <add>, %158, %cst_76 [1] : vector<16x128xf32> to vector<16xf32>
    %164 = vector.shape_cast %163 : vector<16xf32> to vector<16x1xf32>
    %cst_77 = arith.constant 1.280000e+02 : f32
    %165 = vector.broadcast %cst_77 : f32 to vector<16x1xf32>
    %166 = arith.divf %164, %165 : vector<16x1xf32>
    %167 = vector.broadcast %166 : vector<16x1xf32> to vector<16x128xf32>
    %168 = arith.subf %158, %167 : vector<16x128xf32>
    %169 = arith.mulf %168, %168 : vector<16x128xf32>
    %cst_78 = arith.constant dense<0.000000e+00> : vector<16xf32>
    %170 = vector.multi_reduction <add>, %169, %cst_78 [1] : vector<16x128xf32> to vector<16xf32>
    %171 = vector.shape_cast %170 : vector<16xf32> to vector<16x1xf32>
    %cst_79 = arith.constant 1.280000e+02 : f32
    %172 = vector.broadcast %cst_79 : f32 to vector<16x1xf32>
    %173 = arith.divf %171, %172 : vector<16x1xf32>
    %cst_80 = arith.constant 9.99999996E-13 : f32
    %174 = vector.broadcast %cst_80 : f32 to vector<16x1xf32>
    %175 = arith.addf %173, %174 : vector<16x1xf32>
    %176 = math.rsqrt %175 : vector<16x1xf32>
    %177 = vector.broadcast %176 : vector<16x1xf32> to vector<16x128xf32>
    %178 = arith.mulf %168, %177 : vector<16x128xf32>
    %179 = vector.broadcast %160 : vector<1x128xf32> to vector<16x128xf32>
    %180 = arith.mulf %178, %179 : vector<16x128xf32>
    %181 = vector.broadcast %162 : vector<1x128xf32> to vector<16x128xf32>
    %182 = arith.addf %180, %181 : vector<16x128xf32>
    %c0_81 = arith.constant 0 : index
    %c0_82 = arith.constant 0 : index
    %183 = vector.load %arg22[%c0_81, %c0_82] : memref<16x128xf32, #tpu.memory_space<vmem>>, vector<16x128xf32>
    tpu.vector_store %arg22[%c0_81, %c0_82], %182 {strides = array<i32>} : memref<16x128xf32, #tpu.memory_space<vmem>>, vector<16x128xf32>,
    %c1_i32 = arith.constant 1 : i32
    %184 = arith.cmpi eq, %arg0, %c1_i32 : i32
    %185 = arith.extui %184 : i1 to i32
    %c0_i32_83 = arith.constant 0 : i32
    %186 = arith.cmpi ne, %185, %c0_i32_83 : i32
    scf.if %186 {
      %c0_84 = arith.constant 0 : index
      %c0_85 = arith.constant 0 : index
      %187 = tpu.strided_load %arg22[%c0_84, %c0_85] {strides = array<i32: 8, 1>} : memref<16x128xf32, #tpu.memory_space<vmem>>, vector<2x128xf32>
      %188 = arith.truncf %187 : vector<2x128xf32> to vector<2x128xbf16>
      %c0_86 = arith.constant 0 : index
      %c0_87 = arith.constant 0 : index
      %189 = vector.load %arg17[%c0_86, %c0_87] : memref<128x128xbf16, #tpu.memory_space<vmem>>, vector<128x128xbf16>
      %cst_88 = arith.constant dense<0.000000e+00> : vector<2x128xf32>
      %190 = tpu.matmul %188, %189, %cst_88 {dimension_numbers = #tpu.dot_dimension_numbers<[1], [0], [0], [1], [0, 0, 1, 1], [], []>} : vector<2x128xbf16>, vector<128x128xbf16>, vector<2x128xf32> -> vector<2x128xf32>
      %c0_89 = arith.constant 0 : index
      %c0_90 = arith.constant 0 : index
      %191 = vector.load %arg18[%c0_89, %c0_90] : memref<1x128xf32, #tpu.memory_space<vmem>>, vector<1x128xf32>
      %192 = vector.broadcast %191 : vector<1x128xf32> to vector<2x128xf32>
      %193 = arith.addf %190, %192 : vector<2x128xf32>
      %194 = math.tanh %193 : vector<2x128xf32>
      %195 = arith.truncf %194 : vector<2x128xf32> to vector<2x128xbf16>
      %c0_91 = arith.constant 0 : index
      %c0_92 = arith.constant 0 : index
      %196 = vector.load %arg19[%c0_91, %c0_92] : memref<128x128xbf16, #tpu.memory_space<vmem>>, vector<128x128xbf16>
      %cst_93 = arith.constant dense<0.000000e+00> : vector<2x128xf32>
      %197 = tpu.matmul %195, %196, %cst_93 {dimension_numbers = #tpu.dot_dimension_numbers<[1], [0], [0], [1], [0, 0, 1, 1], [], []>} : vector<2x128xbf16>, vector<128x128xbf16>, vector<2x128xf32> -> vector<2x128xf32>
      %c0_94 = arith.constant 0 : index
      %c0_95 = arith.constant 0 : index
      %198 = vector.load %arg20[%c0_94, %c0_95] : memref<1x128xf32, #tpu.memory_space<vmem>>, vector<1x128xf32>
      %199 = vector.broadcast %198 : vector<1x128xf32> to vector<2x128xf32>
      %200 = arith.addf %197, %199 : vector<2x128xf32>
      %c0_96 = arith.constant 0 : index
      %c0_97 = arith.constant 0 : index
      %201 = vector.load %arg21[%c0_96, %c0_97] : memref<2x128xf32, #tpu.memory_space<vmem>>, vector<2x128xf32>
      tpu.vector_store %arg21[%c0_96, %c0_97], %200 {strides = array<i32>} : memref<2x128xf32, #tpu.memory_space<vmem>>, vector<2x128xf32>,
    } else {
    }
    return
  }
  func.func @transform_0(%arg0: i32) -> (i32, i32) {
    %c0_i32 = arith.constant 0 : i32
    %c0_i32_0 = arith.constant 0 : i32
    %c0_i32_1 = arith.constant 0 : i32
    return %c0_i32, %c0_i32_0 : i32, i32
  }
  func.func @transform_1(%arg0: i32) -> (i32, i32) {
    %c0_i32 = arith.constant 0 : i32
    %c0_i32_0 = arith.constant 0 : i32
    %c0_i32_1 = arith.constant 0 : i32
    return %c0_i32, %c0_i32_0 : i32, i32
  }
  func.func @transform_2(%arg0: i32) -> (i32, i32) {
    %c0_i32 = arith.constant 0 : i32
    %c0_i32_0 = arith.constant 0 : i32
    %c0_i32_1 = arith.constant 0 : i32
    return %c0_i32, %c0_i32_0 : i32, i32
  }
  func.func @transform_3(%arg0: i32) -> (i32, i32) {
    %c0_i32 = arith.constant 0 : i32
    %c0_i32_0 = arith.constant 0 : i32
    %c0_i32_1 = arith.constant 0 : i32
    return %c0_i32, %c0_i32_0 : i32, i32
  }
  func.func @transform_4(%arg0: i32) -> (i32, i32, i32) {
    %c0_i32 = arith.constant 0 : i32
    %c0_i32_0 = arith.constant 0 : i32
    %c0_i32_1 = arith.constant 0 : i32
    return %arg0, %c0_i32, %c0_i32_0 : i32, i32, i32
  }
  func.func @transform_5(%arg0: i32) -> (i32, i32, i32) {
    %c0_i32 = arith.constant 0 : i32
    %c0_i32_0 = arith.constant 0 : i32
    %c0_i32_1 = arith.constant 0 : i32
    return %arg0, %c0_i32, %c0_i32_0 : i32, i32, i32
  }
  func.func @transform_6(%arg0: i32) -> (i32, i32, i32) {
    %c0_i32 = arith.constant 0 : i32
    %c0_i32_0 = arith.constant 0 : i32
    %c0_i32_1 = arith.constant 0 : i32
    return %arg0, %c0_i32, %c0_i32_0 : i32, i32, i32
  }
  func.func @transform_7(%arg0: i32) -> (i32, i32, i32) {
    %c0_i32 = arith.constant 0 : i32
    %c0_i32_0 = arith.constant 0 : i32
    %c0_i32_1 = arith.constant 0 : i32
    return %arg0, %c0_i32, %c0_i32_0 : i32, i32, i32
  }
  func.func @transform_8(%arg0: i32) -> (i32, i32, i32) {
    %c0_i32 = arith.constant 0 : i32
    %c0_i32_0 = arith.constant 0 : i32
    %c0_i32_1 = arith.constant 0 : i32
    return %arg0, %c0_i32, %c0_i32_0 : i32, i32, i32
  }
  func.func @transform_9(%arg0: i32) -> (i32, i32, i32) {
    %c0_i32 = arith.constant 0 : i32
    %c0_i32_0 = arith.constant 0 : i32
    %c0_i32_1 = arith.constant 0 : i32
    return %arg0, %c0_i32, %c0_i32_0 : i32, i32, i32
  }
  func.func @transform_10(%arg0: i32) -> (i32, i32, i32) {
    %c0_i32 = arith.constant 0 : i32
    %c0_i32_0 = arith.constant 0 : i32
    %c0_i32_1 = arith.constant 0 : i32
    return %arg0, %c0_i32, %c0_i32_0 : i32, i32, i32
  }
  func.func @transform_11(%arg0: i32) -> (i32, i32, i32) {
    %c0_i32 = arith.constant 0 : i32
    %c0_i32_0 = arith.constant 0 : i32
    %c0_i32_1 = arith.constant 0 : i32
    return %arg0, %c0_i32, %c0_i32_0 : i32, i32, i32
  }
  func.func @transform_12(%arg0: i32) -> (i32, i32, i32) {
    %c0_i32 = arith.constant 0 : i32
    %c0_i32_0 = arith.constant 0 : i32
    %c0_i32_1 = arith.constant 0 : i32
    return %arg0, %c0_i32, %c0_i32_0 : i32, i32, i32
  }
  func.func @transform_13(%arg0: i32) -> (i32, i32, i32) {
    %c0_i32 = arith.constant 0 : i32
    %c0_i32_0 = arith.constant 0 : i32
    %c0_i32_1 = arith.constant 0 : i32
    return %arg0, %c0_i32, %c0_i32_0 : i32, i32, i32
  }
  func.func @transform_14(%arg0: i32) -> (i32, i32, i32) {
    %c0_i32 = arith.constant 0 : i32
    %c0_i32_0 = arith.constant 0 : i32
    %c0_i32_1 = arith.constant 0 : i32
    return %arg0, %c0_i32, %c0_i32_0 : i32, i32, i32
  }
  func.func @transform_15(%arg0: i32) -> (i32, i32, i32) {
    %c0_i32 = arith.constant 0 : i32
    %c0_i32_0 = arith.constant 0 : i32
    %c0_i32_1 = arith.constant 0 : i32
    return %arg0, %c0_i32, %c0_i32_0 : i32, i32, i32
  }
  func.func @transform_16(%arg0: i32) -> (i32, i32) {
    %c0_i32 = arith.constant 0 : i32
    %c0_i32_0 = arith.constant 0 : i32
    %c0_i32_1 = arith.constant 0 : i32
    return %c0_i32, %c0_i32_0 : i32, i32
  }
  func.func @transform_17(%arg0: i32) -> (i32, i32) {
    %c0_i32 = arith.constant 0 : i32
    %c0_i32_0 = arith.constant 0 : i32
    %c0_i32_1 = arith.constant 0 : i32
    return %c0_i32, %c0_i32_0 : i32, i32
  }
  func.func @transform_18(%arg0: i32) -> (i32, i32) {
    %c0_i32 = arith.constant 0 : i32
    %c0_i32_0 = arith.constant 0 : i32
    %c0_i32_1 = arith.constant 0 : i32
    return %c0_i32, %c0_i32_0 : i32, i32
  }
  func.func @transform_19(%arg0: i32) -> (i32, i32) {
    %c0_i32 = arith.constant 0 : i32
    %c0_i32_0 = arith.constant 0 : i32
    %c0_i32_1 = arith.constant 0 : i32
    return %c0_i32, %c0_i32_0 : i32, i32
  }
  func.func @transform_20(%arg0: i32) -> (i32, i32) {
    %c0_i32 = arith.constant 0 : i32
    %c0_i32_0 = arith.constant 0 : i32
    %c0_i32_1 = arith.constant 0 : i32
    return %c0_i32, %c0_i32_0 : i32, i32
  }
}

</mosaic_0001>

<llo_original>
// kernel: bert_sst2_forward.1
$region0: #{bert_sst2_forward.1}
  #allocation0 [shape = 'u32[]', space=smem, size = 0x4, offset = 0x4, fixed_abs, tag = 'smem constant byte address 0x4 - core index']
  #allocation1 [shape = 'u32[144,128]{1,0:T(1,128)}', space=vmem, size = 0x12000, scoped, tag = 'internal scratch']
  #allocation2 [shape = 'f32[16,128]{1,0:T(8,128)}', space=vmem, size = 0x2000, scoped, tag = 'scratch operand']
  #allocation3 [shape = 'f32[16,256]{1,0:T(8,128)}', space=vmem, size = 0x4000, scoped, tag = 'scratch operand']
  %s0 = inlined_call_operand.vmem [shape: f32[16,128], index: 0, kind: input, shape index: {}]
  %s1 = inlined_call_operand.vmem [shape: f32[2,8], index: 1, kind: input, shape index: {}]
  %s2 = inlined_call_operand.vmem [shape: f32[1,128], index: 2, kind: input, shape index: {}]
  %s3 = inlined_call_operand.vmem [shape: f32[1,128], index: 3, kind: input, shape index: {}]
  %s4 = inlined_call_operand.hbm [shape: bf16[2,128,768], index: 4, kind: input, shape index: {}]
  %s5 = inlined_call_operand.vmem [shape: f32[2,1,768], index: 5, kind: input, shape index: {}]
  %s6 = inlined_call_operand.vmem [shape: bf16[2,256,128], index: 6, kind: input, shape index: {}]
  %s7 = inlined_call_operand.vmem [shape: f32[2,1,128], index: 7, kind: input, shape index: {}]
  %s8 = inlined_call_operand.vmem [shape: f32[2,1,128], index: 8, kind: input, shape index: {}]
  %s9 = inlined_call_operand.vmem [shape: f32[2,1,128], index: 9, kind: input, shape index: {}]
  %s10 = inlined_call_operand.hbm [shape: bf16[2,128,256], index: 10, kind: input, shape index: {}]
  %s11 = inlined_call_operand.vmem [shape: f32[2,1,256], index: 11, kind: input, shape index: {}]
  %s12 = inlined_call_operand.hbm [shape: bf16[2,256,128], index: 12, kind: input, shape index: {}]
  %s13 = inlined_call_operand.vmem [shape: f32[2,1,128], index: 13, kind: input, shape index: {}]
  %s14 = inlined_call_operand.vmem [shape: f32[2,1,128], index: 14, kind: input, shape index: {}]
  %s15 = inlined_call_operand.vmem [shape: f32[2,1,128], index: 15, kind: input, shape index: {}]
  %s16 = inlined_call_operand.vmem [shape: bf16[128,128], index: 16, kind: input, shape index: {}]
  %s17 = inlined_call_operand.vmem [shape: f32[1,128], index: 17, kind: input, shape index: {}]
  %s18 = inlined_call_operand.vmem [shape: bf16[128,128], index: 18, kind: input, shape index: {}]
  %s19 = inlined_call_operand.vmem [shape: f32[1,128], index: 19, kind: input, shape index: {}]
  %s20 = inlined_call_operand.hbm [shape: f32[2,128], index: 20, kind: output, shape index: {}]
  %s21 = sld [smem:[#allocation0]]
  $region133: #{bert_sst2_forward.1} parent=0
    _
  %s23 = ssub.s32 1, %s21
  %s24 = scalar_select 0, %s23, %s21
  $region1: #{bert_sst2_forward.1} parent=0
    #allocation4 [shape = 'u8[393216]{0}', space=vmem, size = 0x60000, scoped, tag = 'input window, operand 4']
    #allocation5 [shape = 's32[2]{0}', space=sflag, size = 0x8, scoped, tag = 'scoped memory for bert_sst2_forward.1']
    #allocation6 [shape = 's32[2]{0}', space=sflag, size = 0x8, scoped, tag = 'scoped memory for bert_sst2_forward.1']
    #allocation7 [shape = 'u8[131072]{0}', space=vmem, size = 0x20000, scoped, tag = 'input window, operand 10']
    #allocation8 [shape = 's32[2]{0}', space=sflag, size = 0x8, scoped, tag = 'scoped memory for bert_sst2_forward.1']
    #allocation9 [shape = 'u8[131072]{0}', space=vmem, size = 0x20000, scoped, tag = 'input window, operand 12']
    #allocation10 [shape = 'u8[1024]{0}', space=vmem, size = 0x400, scoped, tag = 'output window, operand 0, single buffered']
    %25 = vsyncpa [#allocation5], 0
    %s26 = scalar_lea.sflag [#allocation5], 1
    %27 = vsyncpa %s26, 0
    %28 = vsyncpa [#allocation8], 0
    %s29 = scalar_lea.sflag [#allocation8], 1
    %30 = vsyncpa %s29, 0
    %31 = vsyncpa [#allocation6], 0
    loop: start=0, step=1, limit=4
    $region2: #{bert_sst2_forward.1} parent=1 // loop_pre_header
      _
    $region3: #{bert_sst2_forward.1} parent=1 // loop_header
      %s33 = sphi 0, %s37
      %p34 = scmp.ge.s32.totalorder %s33, 4
      %s41 = sphi 0, %s41
      %s43 = sphi 0, %s41
      %s44 = sphi 0, %s43
      %s58 = sphi 0, %s44
      %s62 = sphi 0, %s62
      %s64 = sphi 0, %s62
      %s65 = sphi 0, %s64
      %s79 = sphi 0, %s65
      %s83 = sphi 0, %s83
      %s85 = sphi 0, %s83
      %s86 = sphi 0, %s85
      %s100 = sphi 0, %s86
      %s104 = sphi 0, %s104
      %s106 = sphi 0, %s104
      %s107 = sphi 0, %s106
      %s121 = sphi 0, %s107
      %s127 = sphi 0, %s129
      %s130 = sphi 0, %s127
      %s131 = sphi 0, %s130
      %s147 = sphi 0, %s131
      %s153 = sphi 0, %s155
      %s156 = sphi 0, %s153
      %s157 = sphi 0, %s156
      %s173 = sphi 0, %s157
      %s179 = sphi 0, %s181
      %s182 = sphi 0, %s179
      %s183 = sphi 0, %s182
      %s199 = sphi 0, %s183
      %s205 = sphi 0, %s207
      %s208 = sphi 0, %s205
      %s209 = sphi 0, %s208
      %s225 = sphi 0, %s209
      %s231 = sphi 0, %s233
      %s234 = sphi 0, %s231
      %s235 = sphi 0, %s234
      %s251 = sphi 0, %s235
      %s257 = sphi 0, %s259
      %s260 = sphi 0, %s257
      %s261 = sphi 0, %s260
      %s277 = sphi 0, %s261
      %s283 = sphi 0, %s285
      %s286 = sphi 0, %s283
      %s287 = sphi 0, %s286
      %s303 = sphi 0, %s287
      %s309 = sphi 0, %s311
      %s312 = sphi 0, %s309
      %s313 = sphi 0, %s312
      %s329 = sphi 0, %s313
      %s335 = sphi 0, %s337
      %s338 = sphi 0, %s335
      %s339 = sphi 0, %s338
      %s355 = sphi 0, %s339
      %s361 = sphi 0, %s363
      %s364 = sphi 0, %s361
      %s365 = sphi 0, %s364
      %s381 = sphi 0, %s365
      %s387 = sphi 0, %s389
      %s390 = sphi 0, %s387
      %s391 = sphi 0, %s390
      %s407 = sphi 0, %s391
      %s413 = sphi 0, %s415
      %s416 = sphi 0, %s413
      %s417 = sphi 0, %s416
      %s433 = sphi 0, %s417
      %s437 = sphi 0, %s437
      %s439 = sphi 0, %s437
      %s440 = sphi 0, %s439
      %s454 = sphi 0, %s440
      %s458 = sphi 0, %s458
      %s460 = sphi 0, %s458
      %s461 = sphi 0, %s460
      %s475 = sphi 0, %s461
      %s479 = sphi 0, %s479
      %s481 = sphi 0, %s479
      %s482 = sphi 0, %s481
      %s496 = sphi 0, %s482
      %s500 = sphi 0, %s500
      %s502 = sphi 0, %s500
      %s503 = sphi 0, %s502
      %s517 = sphi 0, %s503
      %s521 = sphi 0, %s521
      %s523 = sphi 0, %s521
      %s524 = sphi 0, %s523
      %s538 = sphi 0, %s524
    $region4: #{bert_sst2_forward.1} parent=1 // loop_header_branch
      %36 = sbr.rel (%p34) target = $region8
    $region5: #{bert_sst2_forward.1} parent=1 // loop_body
      %s38 = ssub.s32 %s33, 1
      %s39 = ssub.s32 %s33, 2
      %s40 = sadd.s32 %s33, 1
      %s42 = sadd.s32 %s41, 1
      %p45 = scmp.eq.s32.totalorder %s33, 1
      %p46 = scmp.ne.s32.totalorder %s41, %s43
      %p47 = scmp.eq.s32.totalorder %s33, 0
      %p48 = por %p46, %p47
      %p49 = scmp.ne.s32.totalorder %s41, %s43
      %p50 = scmp.eq.s32.totalorder %s38, 1
      %p51 = por %p49, %p50
      %p52 = scmp.ne.s32.totalorder %s43, %s44
      %p53 = scmp.eq.s32.totalorder %s38, 0
      %p54 = por %p52, %p53
      %p55 = scmp.ne.s32.totalorder %s43, %s44
      %p56 = scmp.eq.s32.totalorder %s39, 1
      %p57 = por %p55, %p56
      %p59 = scmp.ne.s32.totalorder %s44, %s58
      %p60 = scmp.eq.s32.totalorder %s39, 0
      %p61 = por %p59, %p60
      %s63 = sadd.s32 %s62, 1
      %p66 = scmp.eq.s32.totalorder %s33, 1
      %p67 = scmp.ne.s32.totalorder %s62, %s64
      %p68 = scmp.eq.s32.totalorder %s33, 0
      %p69 = por %p67, %p68
      %p70 = scmp.ne.s32.totalorder %s62, %s64
      %p71 = scmp.eq.s32.totalorder %s38, 1
      %p72 = por %p70, %p71
      %p73 = scmp.ne.s32.totalorder %s64, %s65
      %p74 = scmp.eq.s32.totalorder %s38, 0
      %p75 = por %p73, %p74
      %p76 = scmp.ne.s32.totalorder %s64, %s65
      %p77 = scmp.eq.s32.totalorder %s39, 1
      %p78 = por %p76, %p77
      %p80 = scmp.ne.s32.totalorder %s65, %s79
      %p81 = scmp.eq.s32.totalorder %s39, 0
      %p82 = por %p80, %p81
      %s84 = sadd.s32 %s83, 1
      %p87 = scmp.eq.s32.totalorder %s33, 1
      %p88 = scmp.ne.s32.totalorder %s83, %s85
      %p89 = scmp.eq.s32.totalorder %s33, 0
      %p90 = por %p88, %p89
      %p91 = scmp.ne.s32.totalorder %s83, %s85
      %p92 = scmp.eq.s32.totalorder %s38, 1
      %p93 = por %p91, %p92
      %p94 = scmp.ne.s32.totalorder %s85, %s86
      %p95 = scmp.eq.s32.totalorder %s38, 0
      %p96 = por %p94, %p95
      %p97 = scmp.ne.s32.totalorder %s85, %s86
      %p98 = scmp.eq.s32.totalorder %s39, 1
      %p99 = por %p97, %p98
      %p101 = scmp.ne.s32.totalorder %s86, %s100
      %p102 = scmp.eq.s32.totalorder %s39, 0
      %p103 = por %p101, %p102
      %s105 = sadd.s32 %s104, 1
      %p108 = scmp.eq.s32.totalorder %s33, 1
      %p109 = scmp.ne.s32.totalorder %s104, %s106
      %p110 = scmp.eq.s32.totalorder %s33, 0
      %p111 = por %p109, %p110
      %p112 = scmp.ne.s32.totalorder %s104, %s106
      %p113 = scmp.eq.s32.totalorder %s38, 1
      %p114 = por %p112, %p113
      %p115 = scmp.ne.s32.totalorder %s106, %s107
      %p116 = scmp.eq.s32.totalorder %s38, 0
      %p117 = por %p115, %p116
      %p118 = scmp.ne.s32.totalorder %s106, %s107
      %p119 = scmp.eq.s32.totalorder %s39, 1
      %p120 = por %p118, %p119
      %p122 = scmp.ne.s32.totalorder %s107, %s121
      %p123 = scmp.eq.s32.totalorder %s39, 0
      %p124 = por %p122, %p123
      %s125 = ssub.s32 %s33, %s40
      %p126 = scmp.eq.s32.totalorder %s125, 0
      %s128 = sadd.s32 %s127, 1
      %s129 = scalar_select %p126, %s127, %s128
      %p132 = pneg %p126
      %p133 = scmp.eq.s32.totalorder %s33, 1
      %p134 = por %p132, %p133
      %p135 = scmp.ne.s32.totalorder %s127, %s130
      %p136 = scmp.eq.s32.totalorder %s33, 0
      %p137 = por %p135, %p136
      %p138 = scmp.ne.s32.totalorder %s127, %s130
      %p139 = scmp.eq.s32.totalorder %s38, 1
      %p140 = por %p138, %p139
      %p141 = scmp.ne.s32.totalorder %s130, %s131
      %p142 = scmp.eq.s32.totalorder %s38, 0
      %p143 = por %p141, %p142
      %p144 = scmp.ne.s32.totalorder %s130, %s131
      %p145 = scmp.eq.s32.totalorder %s39, 1
      %p146 = por %p144, %p145
      %p148 = scmp.ne.s32.totalorder %s131, %s147
      %p149 = scmp.eq.s32.totalorder %s39, 0
      %p150 = por %p148, %p149
      %s151 = ssub.s32 %s33, %s40
      %p152 = scmp.eq.s32.totalorder %s151, 0
      %s154 = sadd.s32 %s153, 1
      %s155 = scalar_select %p152, %s153, %s154
      %p158 = pneg %p152
      %p159 = scmp.eq.s32.totalorder %s33, 1
      %p160 = por %p158, %p159
      %p161 = scmp.ne.s32.totalorder %s153, %s156
      %p162 = scmp.eq.s32.totalorder %s33, 0
      %p163 = por %p161, %p162
      %p164 = scmp.ne.s32.totalorder %s153, %s156
      %p165 = scmp.eq.s32.totalorder %s38, 1
      %p166 = por %p164, %p165
      %p167 = scmp.ne.s32.totalorder %s156, %s157
      %p168 = scmp.eq.s32.totalorder %s38, 0
      %p169 = por %p167, %p168
      %p170 = scmp.ne.s32.totalorder %s156, %s157
      %p171 = scmp.eq.s32.totalorder %s39, 1
      %p172 = por %p170, %p171
      %p174 = scmp.ne.s32.totalorder %s157, %s173
      %p175 = scmp.eq.s32.totalorder %s39, 0
      %p176 = por %p174, %p175
      %s177 = ssub.s32 %s33, %s40
      %p178 = scmp.eq.s32.totalorder %s177, 0
      %s180 = sadd.s32 %s179, 1
      %s181 = scalar_select %p178, %s179, %s180
      %p184 = pneg %p178
      %p185 = scmp.eq.s32.totalorder %s33, 1
      %p186 = por %p184, %p185
      %p187 = scmp.ne.s32.totalorder %s179, %s182
      %p188 = scmp.eq.s32.totalorder %s33, 0
      %p189 = por %p187, %p188
      %p190 = scmp.ne.s32.totalorder %s179, %s182
      %p191 = scmp.eq.s32.totalorder %s38, 1
      %p192 = por %p190, %p191
      %p193 = scmp.ne.s32.totalorder %s182, %s183
      %p194 = scmp.eq.s32.totalorder %s38, 0
      %p195 = por %p193, %p194
      %p196 = scmp.ne.s32.totalorder %s182, %s183
      %p197 = scmp.eq.s32.totalorder %s39, 1
      %p198 = por %p196, %p197
      %p200 = scmp.ne.s32.totalorder %s183, %s199
      %p201 = scmp.eq.s32.totalorder %s39, 0
      %p202 = por %p200, %p201
      %s203 = ssub.s32 %s33, %s40
      %p204 = scmp.eq.s32.totalorder %s203, 0
      %s206 = sadd.s32 %s205, 1
      %s207 = scalar_select %p204, %s205, %s206
      %p210 = pneg %p204
      %p211 = scmp.eq.s32.totalorder %s33, 1
      %p212 = por %p210, %p211
      %p213 = scmp.ne.s32.totalorder %s205, %s208
      %p214 = scmp.eq.s32.totalorder %s33, 0
      %p215 = por %p213, %p214
      %p216 = scmp.ne.s32.totalorder %s205, %s208
      %p217 = scmp.eq.s32.totalorder %s38, 1
      %p218 = por %p216, %p217
      %p219 = scmp.ne.s32.totalorder %s208, %s209
      %p220 = scmp.eq.s32.totalorder %s38, 0
      %p221 = por %p219, %p220
      %p222 = scmp.ne.s32.totalorder %s208, %s209
      %p223 = scmp.eq.s32.totalorder %s39, 1
      %p224 = por %p222, %p223
      %p226 = scmp.ne.s32.totalorder %s209, %s225
      %p227 = scmp.eq.s32.totalorder %s39, 0
      %p228 = por %p226, %p227
      %s229 = ssub.s32 %s33, %s40
      %p230 = scmp.eq.s32.totalorder %s229, 0
      %s232 = sadd.s32 %s231, 1
      %s233 = scalar_select %p230, %s231, %s232
      %p236 = pneg %p230
      %p237 = scmp.eq.s32.totalorder %s33, 1
      %p238 = por %p236, %p237
      %p239 = scmp.ne.s32.totalorder %s231, %s234
      %p240 = scmp.eq.s32.totalorder %s33, 0
      %p241 = por %p239, %p240
      %p242 = scmp.ne.s32.totalorder %s231, %s234
      %p243 = scmp.eq.s32.totalorder %s38, 1
      %p244 = por %p242, %p243
      %p245 = scmp.ne.s32.totalorder %s234, %s235
      %p246 = scmp.eq.s32.totalorder %s38, 0
      %p247 = por %p245, %p246
      %p248 = scmp.ne.s32.totalorder %s234, %s235
      %p249 = scmp.eq.s32.totalorder %s39, 1
      %p250 = por %p248, %p249
      %p252 = scmp.ne.s32.totalorder %s235, %s251
      %p253 = scmp.eq.s32.totalorder %s39, 0
      %p254 = por %p252, %p253
      %s255 = ssub.s32 %s33, %s40
      %p256 = scmp.eq.s32.totalorder %s255, 0
      %s258 = sadd.s32 %s257, 1
      %s259 = scalar_select %p256, %s257, %s258
      %p262 = pneg %p256
      %p263 = scmp.eq.s32.totalorder %s33, 1
      %p264 = por %p262, %p263
      %p265 = scmp.ne.s32.totalorder %s257, %s260
      %p266 = scmp.eq.s32.totalorder %s33, 0
      %p267 = por %p265, %p266
      %p268 = scmp.ne.s32.totalorder %s257, %s260
      %p269 = scmp.eq.s32.totalorder %s38, 1
      %p270 = por %p268, %p269
      %p271 = scmp.ne.s32.totalorder %s260, %s261
      %p272 = scmp.eq.s32.totalorder %s38, 0
      %p273 = por %p271, %p272
      %p274 = scmp.ne.s32.totalorder %s260, %s261
      %p275 = scmp.eq.s32.totalorder %s39, 1
      %p276 = por %p274, %p275
      %p278 = scmp.ne.s32.totalorder %s261, %s277
      %p279 = scmp.eq.s32.totalorder %s39, 0
      %p280 = por %p278, %p279
      %s281 = ssub.s32 %s33, %s40
      %p282 = scmp.eq.s32.totalorder %s281, 0
      %s284 = sadd.s32 %s283, 1
      %s285 = scalar_select %p282, %s283, %s284
      %p288 = pneg %p282
      %p289 = scmp.eq.s32.totalorder %s33, 1
      %p290 = por %p288, %p289
      %p291 = scmp.ne.s32.totalorder %s283, %s286
      %p292 = scmp.eq.s32.totalorder %s33, 0
      %p293 = por %p291, %p292
      %p294 = scmp.ne.s32.totalorder %s283, %s286
      %p295 = scmp.eq.s32.totalorder %s38, 1
      %p296 = por %p294, %p295
      %p297 = scmp.ne.s32.totalorder %s286, %s287
      %p298 = scmp.eq.s32.totalorder %s38, 0
      %p299 = por %p297, %p298
      %p300 = scmp.ne.s32.totalorder %s286, %s287
      %p301 = scmp.eq.s32.totalorder %s39, 1
      %p302 = por %p300, %p301
      %p304 = scmp.ne.s32.totalorder %s287, %s303
      %p305 = scmp.eq.s32.totalorder %s39, 0
      %p306 = por %p304, %p305
      %s307 = ssub.s32 %s33, %s40
      %p308 = scmp.eq.s32.totalorder %s307, 0
      %s310 = sadd.s32 %s309, 1
      %s311 = scalar_select %p308, %s309, %s310
      %p314 = pneg %p308
      %p315 = scmp.eq.s32.totalorder %s33, 1
      %p316 = por %p314, %p315
      %p317 = scmp.ne.s32.totalorder %s309, %s312
      %p318 = scmp.eq.s32.totalorder %s33, 0
      %p319 = por %p317, %p318
      %p320 = scmp.ne.s32.totalorder %s309, %s312
      %p321 = scmp.eq.s32.totalorder %s38, 1
      %p322 = por %p320, %p321
      %p323 = scmp.ne.s32.totalorder %s312, %s313
      %p324 = scmp.eq.s32.totalorder %s38, 0
      %p325 = por %p323, %p324
      %p326 = scmp.ne.s32.totalorder %s312, %s313
      %p327 = scmp.eq.s32.totalorder %s39, 1
      %p328 = por %p326, %p327
      %p330 = scmp.ne.s32.totalorder %s313, %s329
      %p331 = scmp.eq.s32.totalorder %s39, 0
      %p332 = por %p330, %p331
      %s333 = ssub.s32 %s33, %s40
      %p334 = scmp.eq.s32.totalorder %s333, 0
      %s336 = sadd.s32 %s335, 1
      %s337 = scalar_select %p334, %s335, %s336
      %p340 = pneg %p334
      %p341 = scmp.eq.s32.totalorder %s33, 1
      %p342 = por %p340, %p341
      %p343 = scmp.ne.s32.totalorder %s335, %s338
      %p344 = scmp.eq.s32.totalorder %s33, 0
      %p345 = por %p343, %p344
      %p346 = scmp.ne.s32.totalorder %s335, %s338
      %p347 = scmp.eq.s32.totalorder %s38, 1
      %p348 = por %p346, %p347
      %p349 = scmp.ne.s32.totalorder %s338, %s339
      %p350 = scmp.eq.s32.totalorder %s38, 0
      %p351 = por %p349, %p350
      %p352 = scmp.ne.s32.totalorder %s338, %s339
      %p353 = scmp.eq.s32.totalorder %s39, 1
      %p354 = por %p352, %p353
      %p356 = scmp.ne.s32.totalorder %s339, %s355
      %p357 = scmp.eq.s32.totalorder %s39, 0
      %p358 = por %p356, %p357
      %s359 = ssub.s32 %s33, %s40
      %p360 = scmp.eq.s32.totalorder %s359, 0
      %s362 = sadd.s32 %s361, 1
      %s363 = scalar_select %p360, %s361, %s362
      %p366 = pneg %p360
      %p367 = scmp.eq.s32.totalorder %s33, 1
      %p368 = por %p366, %p367
      %p369 = scmp.ne.s32.totalorder %s361, %s364
      %p370 = scmp.eq.s32.totalorder %s33, 0
      %p371 = por %p369, %p370
      %p372 = scmp.ne.s32.totalorder %s361, %s364
      %p373 = scmp.eq.s32.totalorder %s38, 1
      %p374 = por %p372, %p373
      %p375 = scmp.ne.s32.totalorder %s364, %s365
      %p376 = scmp.eq.s32.totalorder %s38, 0
      %p377 = por %p375, %p376
      %p378 = scmp.ne.s32.totalorder %s364, %s365
      %p379 = scmp.eq.s32.totalorder %s39, 1
      %p380 = por %p378, %p379
      %p382 = scmp.ne.s32.totalorder %s365, %s381
      %p383 = scmp.eq.s32.totalorder %s39, 0
      %p384 = por %p382, %p383
      %s385 = ssub.s32 %s33, %s40
      %p386 = scmp.eq.s32.totalorder %s385, 0
      %s388 = sadd.s32 %s387, 1
      %s389 = scalar_select %p386, %s387, %s388
      %p392 = pneg %p386
      %p393 = scmp.eq.s32.totalorder %s33, 1
      %p394 = por %p392, %p393
      %p395 = scmp.ne.s32.totalorder %s387, %s390
      %p396 = scmp.eq.s32.totalorder %s33, 0
      %p397 = por %p395, %p396
      %p398 = scmp.ne.s32.totalorder %s387, %s390
      %p399 = scmp.eq.s32.totalorder %s38, 1
      %p400 = por %p398, %p399
      %p401 = scmp.ne.s32.totalorder %s390, %s391
      %p402 = scmp.eq.s32.totalorder %s38, 0
      %p403 = por %p401, %p402
      %p404 = scmp.ne.s32.totalorder %s390, %s391
      %p405 = scmp.eq.s32.totalorder %s39, 1
      %p406 = por %p404, %p405
      %p408 = scmp.ne.s32.totalorder %s391, %s407
      %p409 = scmp.eq.s32.totalorder %s39, 0
      %p410 = por %p408, %p409
      %s411 = ssub.s32 %s33, %s40
      %p412 = scmp.eq.s32.totalorder %s411, 0
      %s414 = sadd.s32 %s413, 1
      %s415 = scalar_select %p412, %s413, %s414
      %p418 = pneg %p412
      %p419 = scmp.eq.s32.totalorder %s33, 1
      %p420 = por %p418, %p419
      %p421 = scmp.ne.s32.totalorder %s413, %s416
      %p422 = scmp.eq.s32.totalorder %s33, 0
      %p423 = por %p421, %p422
      %p424 = scmp.ne.s32.totalorder %s413, %s416
      %p425 = scmp.eq.s32.totalorder %s38, 1
      %p426 = por %p424, %p425
      %p427 = scmp.ne.s32.totalorder %s416, %s417
      %p428 = scmp.eq.s32.totalorder %s38, 0
      %p429 = por %p427, %p428
      %p430 = scmp.ne.s32.totalorder %s416, %s417
      %p431 = scmp.eq.s32.totalorder %s39, 1
      %p432 = por %p430, %p431
      %p434 = scmp.ne.s32.totalorder %s417, %s433
      %p435 = scmp.eq.s32.totalorder %s39, 0
      %p436 = por %p434, %p435
      %s438 = sadd.s32 %s437, 1
      %p441 = scmp.eq.s32.totalorder %s33, 1
      %p442 = scmp.ne.s32.totalorder %s437, %s439
      %p443 = scmp.eq.s32.totalorder %s33, 0
      %p444 = por %p442, %p443
      %p445 = scmp.ne.s32.totalorder %s437, %s439
      %p446 = scmp.eq.s32.totalorder %s38, 1
      %p447 = por %p445, %p446
      %p448 = scmp.ne.s32.totalorder %s439, %s440
      %p449 = scmp.eq.s32.totalorder %s38, 0
      %p450 = por %p448, %p449
      %p451 = scmp.ne.s32.totalorder %s439, %s440
      %p452 = scmp.eq.s32.totalorder %s39, 1
      %p453 = por %p451, %p452
      %p455 = scmp.ne.s32.totalorder %s440, %s454
      %p456 = scmp.eq.s32.totalorder %s39, 0
      %p457 = por %p455, %p456
      %s459 = sadd.s32 %s458, 1
      %p462 = scmp.eq.s32.totalorder %s33, 1
      %p463 = scmp.ne.s32.totalorder %s458, %s460
      %p464 = scmp.eq.s32.totalorder %s33, 0
      %p465 = por %p463, %p464
      %p466 = scmp.ne.s32.totalorder %s458, %s460
      %p467 = scmp.eq.s32.totalorder %s38, 1
      %p468 = por %p466, %p467
      %p469 = scmp.ne.s32.totalorder %s460, %s461
      %p470 = scmp.eq.s32.totalorder %s38, 0
      %p471 = por %p469, %p470
      %p472 = scmp.ne.s32.totalorder %s460, %s461
      %p473 = scmp.eq.s32.totalorder %s39, 1
      %p474 = por %p472, %p473
      %p476 = scmp.ne.s32.totalorder %s461, %s475
      %p477 = scmp.eq.s32.totalorder %s39, 0
      %p478 = por %p476, %p477
      %s480 = sadd.s32 %s479, 1
      %p483 = scmp.eq.s32.totalorder %s33, 1
      %p484 = scmp.ne.s32.totalorder %s479, %s481
      %p485 = scmp.eq.s32.totalorder %s33, 0
      %p486 = por %p484, %p485
      %p487 = scmp.ne.s32.totalorder %s479, %s481
      %p488 = scmp.eq.s32.totalorder %s38, 1
      %p489 = por %p487, %p488
      %p490 = scmp.ne.s32.totalorder %s481, %s482
      %p491 = scmp.eq.s32.totalorder %s38, 0
      %p492 = por %p490, %p491
      %p493 = scmp.ne.s32.totalorder %s481, %s482
      %p494 = scmp.eq.s32.totalorder %s39, 1
      %p495 = por %p493, %p494
      %p497 = scmp.ne.s32.totalorder %s482, %s496
      %p498 = scmp.eq.s32.totalorder %s39, 0
      %p499 = por %p497, %p498
      %s501 = sadd.s32 %s500, 1
      %p504 = scmp.eq.s32.totalorder %s33, 1
      %p505 = scmp.ne.s32.totalorder %s500, %s502
      %p506 = scmp.eq.s32.totalorder %s33, 0
      %p507 = por %p505, %p506
      %p508 = scmp.ne.s32.totalorder %s500, %s502
      %p509 = scmp.eq.s32.totalorder %s38, 1
      %p510 = por %p508, %p509
      %p511 = scmp.ne.s32.totalorder %s502, %s503
      %p512 = scmp.eq.s32.totalorder %s38, 0
      %p513 = por %p511, %p512
      %p514 = scmp.ne.s32.totalorder %s502, %s503
      %p515 = scmp.eq.s32.totalorder %s39, 1
      %p516 = por %p514, %p515
      %p518 = scmp.ne.s32.totalorder %s503, %s517
      %p519 = scmp.eq.s32.totalorder %s39, 0
      %p520 = por %p518, %p519
      %s522 = sadd.s32 %s521, 1
      %p525 = scmp.eq.s32.totalorder %s33, 1
      %p526 = scmp.ne.s32.totalorder %s521, %s523
      %p527 = scmp.eq.s32.totalorder %s33, 0
      %p528 = por %p526, %p527
      %p529 = scmp.ne.s32.totalorder %s521, %s523
      %p530 = scmp.eq.s32.totalorder %s38, 1
      %p531 = por %p529, %p530
      %p532 = scmp.ne.s32.totalorder %s523, %s524
      %p533 = scmp.eq.s32.totalorder %s38, 0
      %p534 = por %p532, %p533
      %p535 = scmp.ne.s32.totalorder %s523, %s524
      %p536 = scmp.eq.s32.totalorder %s39, 1
      %p537 = por %p535, %p536
      %p539 = scmp.ne.s32.totalorder %s524, %s538
      %p540 = scmp.eq.s32.totalorder %s39, 0
      %p541 = por %p539, %p540
      %p542 = scmp.le.s32.totalorder 1, %s33
      %p543 = scmp.lt.s32.totalorder %s33, 3
      %p544 = pnand %p542, %p543
      %p545 = pneg %p544
      // Predicated region
      $region9: #{bert_sst2_forward.1} parent=5 // pred_check
        _
      $region10: #{bert_sst2_forward.1} parent=5 // pred_check_branch
        %547 = sbr.rel (%p544) target = $region12
      $region11: #{bert_sst2_forward.1} parent=5 // pred_region
        %s548 = ssub.s32 %s33, 1
        // Predicated region
        $region13: #{bert_sst2_forward.1} parent=11 // pred_check
          %p549 = pneg %p54
        $region14: #{bert_sst2_forward.1} parent=11 // pred_check_branch
          %551 = sbr.rel (%p549) target = $region16
        $region15: #{bert_sst2_forward.1} parent=11 // pred_region
          _
        $region16: #{bert_sst2_forward.1} parent=11 // pred_fallthru
          _
        // Predicated region
        $region17: #{bert_sst2_forward.1} parent=11 // pred_check
          %p552 = pneg %p75
        $region18: #{bert_sst2_forward.1} parent=11 // pred_check_branch
          %554 = sbr.rel (%p552) target = $region20
        $region19: #{bert_sst2_forward.1} parent=11 // pred_region
          _
        $region20: #{bert_sst2_forward.1} parent=11 // pred_fallthru
          _
        // Predicated region
        $region21: #{bert_sst2_forward.1} parent=11 // pred_check
          %p555 = pneg %p96
        $region22: #{bert_sst2_forward.1} parent=11 // pred_check_branch
          %557 = sbr.rel (%p555) target = $region24
        $region23: #{bert_sst2_forward.1} parent=11 // pred_region
          _
        $region24: #{bert_sst2_forward.1} parent=11 // pred_fallthru
          _
        // Predicated region
        $region25: #{bert_sst2_forward.1} parent=11 // pred_check
          %p558 = pneg %p117
        $region26: #{bert_sst2_forward.1} parent=11 // pred_check_branch
          %560 = sbr.rel (%p558) target = $region28
        $region27: #{bert_sst2_forward.1} parent=11 // pred_region
          _
        $region28: #{bert_sst2_forward.1} parent=11 // pred_fallthru
          _
        // Predicated region
        $region29: #{bert_sst2_forward.1} parent=11 // pred_check
          %p561 = pneg %p450
        $region30: #{bert_sst2_forward.1} parent=11 // pred_check_branch
          %563 = sbr.rel (%p561) target = $region32
        $region31: #{bert_sst2_forward.1} parent=11 // pred_region
          _
        $region32: #{bert_sst2_forward.1} parent=11 // pred_fallthru
          _
        // Predicated region
        $region33: #{bert_sst2_forward.1} parent=11 // pred_check
          %p564 = pneg %p471
        $region34: #{bert_sst2_forward.1} parent=11 // pred_check_branch
          %566 = sbr.rel (%p564) target = $region36
        $region35: #{bert_sst2_forward.1} parent=11 // pred_region
          _
        $region36: #{bert_sst2_forward.1} parent=11 // pred_fallthru
          _
        // Predicated region
        $region37: #{bert_sst2_forward.1} parent=11 // pred_check
          %p567 = pneg %p492
        $region38: #{bert_sst2_forward.1} parent=11 // pred_check_branch
          %569 = sbr.rel (%p567) target = $region40
        $region39: #{bert_sst2_forward.1} parent=11 // pred_region
          _
        $region40: #{bert_sst2_forward.1} parent=11 // pred_fallthru
          _
        // Predicated region
        $region41: #{bert_sst2_forward.1} parent=11 // pred_check
          %p570 = pneg %p513
        $region42: #{bert_sst2_forward.1} parent=11 // pred_check_branch
          %572 = sbr.rel (%p570) target = $region44
        $region43: #{bert_sst2_forward.1} parent=11 // pred_region
          _
        $region44: #{bert_sst2_forward.1} parent=11 // pred_fallthru
          _
      $region12: #{bert_sst2_forward.1} parent=5 // pred_fallthru
        _
      %p573 = scmp.lt.s32.totalorder %s33, 2
      // Predicated region
      $region45: #{bert_sst2_forward.1} parent=5 // pred_check
        %p574 = pneg %p573
      $region46: #{bert_sst2_forward.1} parent=5 // pred_check_branch
        %576 = sbr.rel (%p574) target = $region48
      $region47: #{bert_sst2_forward.1} parent=5 // pred_region
        // Predicated region
        $region49: #{bert_sst2_forward.1} parent=47 // pred_check
          %p577 = pneg %p137
        $region50: #{bert_sst2_forward.1} parent=47 // pred_check_branch
          %579 = sbr.rel (%p577) target = $region52
        $region51: #{bert_sst2_forward.1} parent=47 // pred_region
          %s580 = sand.u32 %s127, 1
          %s581 = scalar_lea.sflag [#allocation5], %s580
          %s582 = sand.u32 %s127, 1
          %s583 = smul.addr %s582, 384
          %s584 = scalar_lea.vmem [#allocation4], %s583
          %s586 = ssub.s32 6144, 6144
          %587 = vsyncadd %s581, %s586
          %s588 = smul.addr %s33, 96
          %s589 = smul.addr %s588, 64
          %s590 = scalar_lea.hbm %s4, %s589
          %s591 = sshll.u32 %s584, 4
          %s592 = int_to_ptr.vmem [resolvable:$true] %s591
          %597 = dma.hbm_to_vmem [thread:$0]  %s590, 6144, %s592, %s581, 384, 384, 24
        $region52: #{bert_sst2_forward.1} parent=47 // pred_fallthru
          _
        // Predicated region
        $region53: #{bert_sst2_forward.1} parent=47 // pred_check
          %p598 = pneg %p163
        $region54: #{bert_sst2_forward.1} parent=47 // pred_check_branch
          %600 = sbr.rel (%p598) target = $region56
        $region55: #{bert_sst2_forward.1} parent=47 // pred_region
          %p601 = scmp.lt.s32.totalorder %s33, 1
          %s602 = scalar_select %p601, %s33, 1
          %s603 = smul.addr %s602, 6
          %s604 = scalar_lea.vmem %s5, %s603
        $region56: #{bert_sst2_forward.1} parent=47 // pred_fallthru
          _
        // Predicated region
        $region57: #{bert_sst2_forward.1} parent=47 // pred_check
          %p605 = pneg %p189
        $region58: #{bert_sst2_forward.1} parent=47 // pred_check_branch
          %607 = sbr.rel (%p605) target = $region60
        $region59: #{bert_sst2_forward.1} parent=47 // pred_region
          %p608 = scmp.lt.s32.totalorder %s33, 1
          %s609 = scalar_select %p608, %s33, 1
          %s610 = smul.addr %s609, 32
          %s611 = smul.addr %s610, 4
          %s612 = scalar_lea.vmem %s6, %s611
        $region60: #{bert_sst2_forward.1} parent=47 // pred_fallthru
          _
        // Predicated region
        $region61: #{bert_sst2_forward.1} parent=47 // pred_check
          %p613 = pneg %p215
        $region62: #{bert_sst2_forward.1} parent=47 // pred_check_branch
          %615 = sbr.rel (%p613) target = $region64
        $region63: #{bert_sst2_forward.1} parent=47 // pred_region
          %p616 = scmp.lt.s32.totalorder %s33, 1
          %s617 = scalar_select %p616, %s33, 1
          %s618 = scalar_lea.vmem %s7, %s617
        $region64: #{bert_sst2_forward.1} parent=47 // pred_fallthru
          _
        // Predicated region
        $region65: #{bert_sst2_forward.1} parent=47 // pred_check
          %p619 = pneg %p241
        $region66: #{bert_sst2_forward.1} parent=47 // pred_check_branch
          %621 = sbr.rel (%p619) target = $region68
        $region67: #{bert_sst2_forward.1} parent=47 // pred_region
          %p622 = scmp.lt.s32.totalorder %s33, 1
          %s623 = scalar_select %p622, %s33, 1
          %s624 = scalar_lea.vmem %s8, %s623
        $region68: #{bert_sst2_forward.1} parent=47 // pred_fallthru
          _
        // Predicated region
        $region69: #{bert_sst2_forward.1} parent=47 // pred_check
          %p625 = pneg %p267
        $region70: #{bert_sst2_forward.1} parent=47 // pred_check_branch
          %627 = sbr.rel (%p625) target = $region72
        $region71: #{bert_sst2_forward.1} parent=47 // pred_region
          %p628 = scmp.lt.s32.totalorder %s33, 1
          %s629 = scalar_select %p628, %s33, 1
          %s630 = scalar_lea.vmem %s9, %s629
        $region72: #{bert_sst2_forward.1} parent=47 // pred_fallthru
          _
        // Predicated region
        $region73: #{bert_sst2_forward.1} parent=47 // pred_check
          %p631 = pneg %p293
        $region74: #{bert_sst2_forward.1} parent=47 // pred_check_branch
          %633 = sbr.rel (%p631) target = $region76
        $region75: #{bert_sst2_forward.1} parent=47 // pred_region
          %s634 = sand.u32 %s33, 1
          %s635 = scalar_lea.sflag [#allocation8], %s634
          %s636 = sand.u32 %s283, 1
          %s637 = smul.addr %s636, 128
          %s638 = scalar_lea.vmem [#allocation7], %s637
          %s640 = ssub.s32 2048, 2048
          %641 = vsyncadd %s635, %s640
          %s642 = smul.addr %s33, 32
          %s643 = smul.addr %s642, 64
          %s644 = scalar_lea.hbm %s10, %s643
          %s645 = sshll.u32 %s638, 4
          %s646 = int_to_ptr.vmem [resolvable:$true] %s645
          %651 = dma.hbm_to_vmem [thread:$0]  %s644, 2048, %s646, %s635, 128, 128, 8
        $region76: #{bert_sst2_forward.1} parent=47 // pred_fallthru
          _
        // Predicated region
        $region77: #{bert_sst2_forward.1} parent=47 // pred_check
          %p652 = pneg %p319
        $region78: #{bert_sst2_forward.1} parent=47 // pred_check_branch
          %654 = sbr.rel (%p652) target = $region80
        $region79: #{bert_sst2_forward.1} parent=47 // pred_region
          %p655 = scmp.lt.s32.totalorder %s33, 1
          %s656 = scalar_select %p655, %s33, 1
          %s657 = smul.addr %s656, 2
          %s658 = scalar_lea.vmem %s11, %s657
        $region80: #{bert_sst2_forward.1} parent=47 // pred_fallthru
          _
        // Predicated region
        $region81: #{bert_sst2_forward.1} parent=47 // pred_check
          %p659 = pneg %p345
        $region82: #{bert_sst2_forward.1} parent=47 // pred_check_branch
          %661 = sbr.rel (%p659) target = $region84
        $region83: #{bert_sst2_forward.1} parent=47 // pred_region
          %s662 = sand.u32 %s33, 1
          %s663 = scalar_lea.sflag [#allocation8], %s662
          %s664 = sand.u32 %s335, 1
          %s665 = smul.addr %s664, 128
          %s666 = scalar_lea.vmem [#allocation9], %s665
          %s668 = ssub.s32 2048, 2048
          %669 = vsyncadd %s663, %s668
          %s670 = smul.addr %s33, 32
          %s671 = smul.addr %s670, 64
          %s672 = scalar_lea.hbm %s12, %s671
          %s673 = sshll.u32 %s666, 4
          %s674 = int_to_ptr.vmem [resolvable:$true] %s673
          %679 = dma.hbm_to_vmem [thread:$0]  %s672, 2048, %s674, %s663, 64, 64, 4
        $region84: #{bert_sst2_forward.1} parent=47 // pred_fallthru
          _
        // Predicated region
        $region85: #{bert_sst2_forward.1} parent=47 // pred_check
          %p680 = pneg %p371
        $region86: #{bert_sst2_forward.1} parent=47 // pred_check_branch
          %682 = sbr.rel (%p680) target = $region88
        $region87: #{bert_sst2_forward.1} parent=47 // pred_region
          %p683 = scmp.lt.s32.totalorder %s33, 1
          %s684 = scalar_select %p683, %s33, 1
          %s685 = scalar_lea.vmem %s13, %s684
        $region88: #{bert_sst2_forward.1} parent=47 // pred_fallthru
          _
        // Predicated region
        $region89: #{bert_sst2_forward.1} parent=47 // pred_check
          %p686 = pneg %p397
        $region90: #{bert_sst2_forward.1} parent=47 // pred_check_branch
          %688 = sbr.rel (%p686) target = $region92
        $region91: #{bert_sst2_forward.1} parent=47 // pred_region
          %p689 = scmp.lt.s32.totalorder %s33, 1
          %s690 = scalar_select %p689, %s33, 1
          %s691 = scalar_lea.vmem %s14, %s690
        $region92: #{bert_sst2_forward.1} parent=47 // pred_fallthru
          _
        // Predicated region
        $region93: #{bert_sst2_forward.1} parent=47 // pred_check
          %p692 = pneg %p423
        $region94: #{bert_sst2_forward.1} parent=47 // pred_check_branch
          %694 = sbr.rel (%p692) target = $region96
        $region95: #{bert_sst2_forward.1} parent=47 // pred_region
          %p695 = scmp.lt.s32.totalorder %s33, 1
          %s696 = scalar_select %p695, %s33, 1
          %s697 = scalar_lea.vmem %s15, %s696
        $region96: #{bert_sst2_forward.1} parent=47 // pred_fallthru
          _
      $region48: #{bert_sst2_forward.1} parent=5 // pred_fallthru
        _
      %p698 = scmp.le.s32.totalorder 1, %s33
      %p699 = scmp.lt.s32.totalorder %s33, 3
      %p700 = pnand %p698, %p699
      %p701 = pneg %p700
      // Predicated region
      $region97: #{bert_sst2_forward.1} parent=5 // pred_check
        _
      $region98: #{bert_sst2_forward.1} parent=5 // pred_check_branch
        %703 = sbr.rel (%p700) target = $region100
      $region99: #{bert_sst2_forward.1} parent=5 // pred_region
        %s704 = ssub.s32 %s33, 1
        %s705 = sand.u32 %s130, 1
        %s706 = scalar_lea.sflag [#allocation5], %s705
        %s707 = sand.u32 %s130, 1
        %s708 = smul.addr %s707, 384
        %s709 = scalar_lea.vmem [#allocation4], %s708
        // Predicated region
        $region101: #{bert_sst2_forward.1} parent=99 // pred_check
          %p710 = pneg %p143
        $region102: #{bert_sst2_forward.1} parent=99 // pred_check_branch
          %712 = sbr.rel (%p710) target = $region104
        $region103: #{bert_sst2_forward.1} parent=99 // pred_region
          %713 = dma.done %s706, 6144
        $region104: #{bert_sst2_forward.1} parent=99 // pred_fallthru
          _
        %s714 = sand.u32 %s38, 1
        %s715 = scalar_lea.sflag [#allocation8], %s714
        %s716 = sand.u32 %s286, 1
        %s717 = smul.addr %s716, 128
        %s718 = scalar_lea.vmem [#allocation7], %s717
        // Predicated region
        $region105: #{bert_sst2_forward.1} parent=99 // pred_check
          %p719 = pneg %p299
        $region106: #{bert_sst2_forward.1} parent=99 // pred_check_branch
          %721 = sbr.rel (%p719) target = $region108
        $region107: #{bert_sst2_forward.1} parent=99 // pred_region
          %722 = dma.done %s715, 2048
        $region108: #{bert_sst2_forward.1} parent=99 // pred_fallthru
          _
        %s723 = sand.u32 %s38, 1
        %s724 = scalar_lea.sflag [#allocation8], %s723
        %s725 = sand.u32 %s338, 1
        %s726 = smul.addr %s725, 128
        %s727 = scalar_lea.vmem [#allocation9], %s726
        // Predicated region
        $region109: #{bert_sst2_forward.1} parent=99 // pred_check
          %p728 = pneg %p351
        $region110: #{bert_sst2_forward.1} parent=99 // pred_check_branch
          %730 = sbr.rel (%p728) target = $region112
        $region111: #{bert_sst2_forward.1} parent=99 // pred_region
          %731 = dma.done %s724, 2048
        $region112: #{bert_sst2_forward.1} parent=99 // pred_fallthru
          _
        %p732 = pneg %p54
        %p733 = pneg %p51
        %p734 = pneg %p75
        %p735 = pneg %p72
        %p736 = pneg %p96
        %p737 = pneg %p93
        %p738 = pneg %p117
        %p739 = pneg %p114
        %s740 = sand.u32 %s130, 1
        %s741 = scalar_lea.sflag [#allocation5], %s740
        %s742 = sand.u32 %s130, 1
        %s743 = smul.addr %s742, 384
        %s744 = scalar_lea.vmem [#allocation4], %s743
        %p745 = pneg %p143
        %p746 = pneg %p140
        %p747 = scmp.lt.s32.totalorder %s38, 1
        %s748 = scalar_select %p747, %s38, 1
        %s749 = smul.addr %s748, 6
        %s750 = scalar_lea.vmem %s5, %s749
        %p751 = pneg %p169
        %p752 = pneg %p166
        %p753 = scmp.lt.s32.totalorder %s38, 1
        %s754 = scalar_select %p753, %s38, 1
        %s755 = smul.addr %s754, 32
        %s756 = smul.addr %s755, 4
        %s757 = scalar_lea.vmem %s6, %s756
        %p758 = pneg %p195
        %p759 = pneg %p192
        %p760 = scmp.lt.s32.totalorder %s38, 1
        %s761 = scalar_select %p760, %s38, 1
        %s762 = scalar_lea.vmem %s7, %s761
        %p763 = pneg %p221
        %p764 = pneg %p218
        %p765 = scmp.lt.s32.totalorder %s38, 1
        %s766 = scalar_select %p765, %s38, 1
        %s767 = scalar_lea.vmem %s8, %s766
        %p768 = pneg %p247
        %p769 = pneg %p244
        %p770 = scmp.lt.s32.totalorder %s38, 1
        %s771 = scalar_select %p770, %s38, 1
        %s772 = scalar_lea.vmem %s9, %s771
        %p773 = pneg %p273
        %p774 = pneg %p270
        %s775 = sand.u32 %s38, 1
        %s776 = scalar_lea.sflag [#allocation8], %s775
        %s777 = sand.u32 %s286, 1
        %s778 = smul.addr %s777, 128
        %s779 = scalar_lea.vmem [#allocation7], %s778
        %p780 = pneg %p299
        %p781 = pneg %p296
        %p782 = scmp.lt.s32.totalorder %s38, 1
        %s783 = scalar_select %p782, %s38, 1
        %s784 = smul.addr %s783, 2
        %s785 = scalar_lea.vmem %s11, %s784
        %p786 = pneg %p325
        %p787 = pneg %p322
        %s788 = sand.u32 %s38, 1
        %s789 = scalar_lea.sflag [#allocation8], %s788
        %s790 = sand.u32 %s338, 1
        %s791 = smul.addr %s790, 128
        %s792 = scalar_lea.vmem [#allocation9], %s791
        %p793 = pneg %p351
        %p794 = pneg %p348
        %p795 = scmp.lt.s32.totalorder %s38, 1
        %s796 = scalar_select %p795, %s38, 1
        %s797 = scalar_lea.vmem %s13, %s796
        %p798 = pneg %p377
        %p799 = pneg %p374
        %p800 = scmp.lt.s32.totalorder %s38, 1
        %s801 = scalar_select %p800, %s38, 1
        %s802 = scalar_lea.vmem %s14, %s801
        %p803 = pneg %p403
        %p804 = pneg %p400
        %p805 = scmp.lt.s32.totalorder %s38, 1
        %s806 = scalar_select %p805, %s38, 1
        %s807 = scalar_lea.vmem %s15, %s806
        %p808 = pneg %p429
        %p809 = pneg %p426
        %p810 = pneg %p450
        %p811 = pneg %p447
        %p812 = pneg %p471
        %p813 = pneg %p468
        %p814 = pneg %p492
        %p815 = pneg %p489
        %p816 = pneg %p513
        %p817 = pneg %p510
        %p818 = pneg %p534
        %p819 = pneg %p531
        %p820 = scmp.lt.s32.totalorder %s38, 1
        %s821 = scalar_select %p820, %s38, 1
        %s822 = smul.addr %s821, 6
        %s823 = scalar_lea.vmem %s5, %s822
        %p824 = scmp.lt.s32.totalorder %s38, 1
        %s825 = scalar_select %p824, %s38, 1
        %s826 = smul.addr %s825, 32
        %s827 = smul.addr %s826, 4
        %s828 = scalar_lea.vmem %s6, %s827
        %p829 = scmp.lt.s32.totalorder %s38, 1
        %s830 = scalar_select %p829, %s38, 1
        %s831 = scalar_lea.vmem %s7, %s830
        %p832 = scmp.lt.s32.totalorder %s38, 1
        %s833 = scalar_select %p832, %s38, 1
        %s834 = scalar_lea.vmem %s8, %s833
        %p835 = scmp.lt.s32.totalorder %s38, 1
        %s836 = scalar_select %p835, %s38, 1
        %s837 = scalar_lea.vmem %s9, %s836
        %p838 = scmp.lt.s32.totalorder %s38, 1
        %s839 = scalar_select %p838, %s38, 1
        %s840 = smul.addr %s839, 2
        %s841 = scalar_lea.vmem %s11, %s840
        %p842 = scmp.lt.s32.totalorder %s38, 1
        %s843 = scalar_select %p842, %s38, 1
        %s844 = scalar_lea.vmem %s13, %s843
        %p845 = scmp.lt.s32.totalorder %s38, 1
        %s846 = scalar_select %p845, %s38, 1
        %s847 = scalar_lea.vmem %s14, %s846
        %p848 = scmp.lt.s32.totalorder %s38, 1
        %s849 = scalar_select %p848, %s38, 1
        %s850 = scalar_lea.vmem %s15, %s849
        %p852 = scmp.eq.s32.totalorder %s38, 0
        // Predicated region
        $region113: #{bert_sst2_forward.1} parent=99 // pred_check
          %p853 = pneg %p852
        $region114: #{bert_sst2_forward.1} parent=99 // pred_check_branch
          %855 = sbr.rel (%p853) target = $region116
        $region115: #{bert_sst2_forward.1} parent=99 // pred_region
          %v856 = vld [vmem:[%s0] sm:$0xff]
          %v857 = vld [vmem:[%s0 + $0x8] sm:$0xff]
          %v858 = vld [vmem:[%s2] sm:$0x1]
          %v859 = vld [vmem:[%s3] sm:$0x1]
          %860 = vadd.xlane.f32.xlu0 %v856
          %v861 = vpop.xlane.xlu0 %860
          %862 = vadd.xlane.f32.xlu0 %v857
          %v863 = vpop.xlane.xlu0 %862
          %v864 = vrcp.pop 128.0
          %v865 = vmul.f32 %v861, %v864
          %v866 = vmul.f32 %v863, %v864
          %v867 = vsub.f32 %v856, %v865
          %v868 = vsub.f32 %v857, %v866
          %v869 = vmul.f32 %v867, %v867
          %v870 = vmul.f32 %v868, %v868
          %871 = vadd.xlane.f32.xlu0 %v869
          %v872 = vpop.xlane.xlu0 %871
          %873 = vadd.xlane.f32.xlu0 %v870
          %v874 = vpop.xlane.xlu0 %873
          %v875 = vmul.f32 %v872, %v864
          %v876 = vmul.f32 %v874, %v864
          %v877 = vadd.f32 %v875, 1e-12
          %v878 = vadd.f32 %v876, 1e-12
          %v879 = vrsqrt.pop %v877
          %v880 = vrsqrt.pop %v878
          %v881 = vmul.f32 %v867, %v879
          %v882 = vmul.f32 %v868, %v880
          %v884 = vlaneseq
          %v885 = vshrl.u32 %v884, 7
          %v886 = vsub.s32 0, %v885
          %v887 = vrot.slane %v858, %v886
          %v889 = vmul.f32 %v881, %v887
          %v890 = vmul.f32 %v882, %v887
          %v892 = vlaneseq
          %v893 = vshrl.u32 %v892, 7
          %v894 = vsub.s32 0, %v893
          %v895 = vrot.slane %v859, %v894
          %v897 = vadd.f32 %v889, %v895
          %v898 = vadd.f32 %v890, %v895
          %899 = vst [vmem:[#allocation2] sm:$0xff] %v897
          %900 = vst [vmem:[#allocation2 + $0x8] sm:$0xff] %v898
        $region116: #{bert_sst2_forward.1} parent=99 // pred_fallthru
          _
        %v901 = vld [vmem:[#allocation2] sm:$0xff]
        %v902 = vld [vmem:[#allocation2 + $0x8] sm:$0xff]
        %v903 = vld [vmem:[%s1] sm:$0x3]
        %v904 = vpack.c.bf16 %v902, %v901
        %v905 = vld [vmem:[%s709] sm:$0xff]
        %v906 = vld [vmem:[%s709 + $0x8] sm:$0xff]
        %v907 = vld [vmem:[%s709 + $0x10] sm:$0xff]
        %v908 = vld [vmem:[%s709 + $0x18] sm:$0xff]
        %v909 = vld [vmem:[%s709 + $0x20] sm:$0xff]
        %v910 = vld [vmem:[%s709 + $0x28] sm:$0xff]
        %v911 = vld [vmem:[%s709 + $0x30] sm:$0xff]
        %v912 = vld [vmem:[%s709 + $0x38] sm:$0xff]
        %v913 = vld [vmem:[%s709 + $0x40] sm:$0xff]
        %v914 = vld [vmem:[%s709 + $0x48] sm:$0xff]
        %v915 = vld [vmem:[%s709 + $0x50] sm:$0xff]
        %v916 = vld [vmem:[%s709 + $0x58] sm:$0xff]
        %v917 = vld [vmem:[%s709 + $0x60] sm:$0xff]
        %v918 = vld [vmem:[%s709 + $0x68] sm:$0xff]
        %v919 = vld [vmem:[%s709 + $0x70] sm:$0xff]
        %v920 = vld [vmem:[%s709 + $0x78] sm:$0xff]
        %v921 = vld [vmem:[%s709 + $0x80] sm:$0xff]
        %v922 = vld [vmem:[%s709 + $0x88] sm:$0xff]
        %v923 = vld [vmem:[%s709 + $0x90] sm:$0xff]
        %v924 = vld [vmem:[%s709 + $0x98] sm:$0xff]
        %v925 = vld [vmem:[%s709 + $0xa0] sm:$0xff]
        %v926 = vld [vmem:[%s709 + $0xa8] sm:$0xff]
        %v927 = vld [vmem:[%s709 + $0xb0] sm:$0xff]
        %v928 = vld [vmem:[%s709 + $0xb8] sm:$0xff]
        %v929 = vld [vmem:[%s709 + $0xc0] sm:$0xff]
        %v930 = vld [vmem:[%s709 + $0xc8] sm:$0xff]
        %v931 = vld [vmem:[%s709 + $0xd0] sm:$0xff]
        %v932 = vld [vmem:[%s709 + $0xd8] sm:$0xff]
        %v933 = vld [vmem:[%s709 + $0xe0] sm:$0xff]
        %v934 = vld [vmem:[%s709 + $0xe8] sm:$0xff]
        %v935 = vld [vmem:[%s709 + $0xf0] sm:$0xff]
        %v936 = vld [vmem:[%s709 + $0xf8] sm:$0xff]
        %v937 = vld [vmem:[%s709 + $0x100] sm:$0xff]
        %v938 = vld [vmem:[%s709 + $0x108] sm:$0xff]
        %v939 = vld [vmem:[%s709 + $0x110] sm:$0xff]
        %v940 = vld [vmem:[%s709 + $0x118] sm:$0xff]
        %v941 = vld [vmem:[%s709 + $0x120] sm:$0xff]
        %v942 = vld [vmem:[%s709 + $0x128] sm:$0xff]
        %v943 = vld [vmem:[%s709 + $0x130] sm:$0xff]
        %v944 = vld [vmem:[%s709 + $0x138] sm:$0xff]
        %v945 = vld [vmem:[%s709 + $0x140] sm:$0xff]
        %v946 = vld [vmem:[%s709 + $0x148] sm:$0xff]
        %v947 = vld [vmem:[%s709 + $0x150] sm:$0xff]
        %v948 = vld [vmem:[%s709 + $0x158] sm:$0xff]
        %v949 = vld [vmem:[%s709 + $0x160] sm:$0xff]
        %v950 = vld [vmem:[%s709 + $0x168] sm:$0xff]
        %v951 = vld [vmem:[%s709 + $0x170] sm:$0xff]
        %v952 = vld [vmem:[%s709 + $0x178] sm:$0xff]
        %v953 = vld [vmem:[%s823] sm:$0x3f]
        %v955 = vlaneseq
        %v956 = vshrl.u32 %v955, 7
        %v957 = vsub.s32 0, %v956
        %v958 = vrot.slane %v953, %v957
        %v959 = vlaneseq
        %v960 = vshrl.u32 %v959, 7
        %v961 = vsub.s32 1, %v960
        %v962 = vrot.slane %v953, %v961
        %v963 = vlaneseq
        %v964 = vshrl.u32 %v963, 7
        %v965 = vsub.s32 2, %v964
        %v966 = vrot.slane %v953, %v965
        %v967 = vlaneseq
        %v968 = vshrl.u32 %v967, 7
        %v969 = vsub.s32 3, %v968
        %v970 = vrot.slane %v953, %v969
        %v971 = vlaneseq
        %v972 = vshrl.u32 %v971, 7
        %v973 = vsub.s32 4, %v972
        %v974 = vrot.slane %v953, %v973
        %v975 = vlaneseq
        %v976 = vshrl.u32 %v975, 7
        %v977 = vsub.s32 5, %v976
        %v978 = vrot.slane %v953, %v977
        %v1033 = vunpack.c.l.b16 %v905
        %v1034 = vunpack.c.h.b16 %v905
        %v1035 = vunpack.c.l.b16 %v906
        %v1036 = vunpack.c.h.b16 %v906
        %v1037 = vunpack.c.l.b16 %v907
        %v1038 = vunpack.c.h.b16 %v907
        %v1039 = vunpack.c.l.b16 %v908
        %v1040 = vunpack.c.h.b16 %v908
        %v1041 = vunpack.c.l.b16 %v909
        %v1042 = vunpack.c.h.b16 %v909
        %v1043 = vunpack.c.l.b16 %v910
        %v1044 = vunpack.c.h.b16 %v910
        %v1045 = vunpack.c.l.b16 %v911
        %v1046 = vunpack.c.h.b16 %v911
        %v1047 = vunpack.c.l.b16 %v912
        %v1048 = vunpack.c.h.b16 %v912
        %v1049 = vunpack.c.l.b16 %v913
        %v1050 = vunpack.c.h.b16 %v913
        %v1051 = vunpack.c.l.b16 %v914
        %v1052 = vunpack.c.h.b16 %v914
        %v1053 = vunpack.c.l.b16 %v915
        %v1054 = vunpack.c.h.b16 %v915
        %v1055 = vunpack.c.l.b16 %v916
        %v1056 = vunpack.c.h.b16 %v916
        %v1057 = vunpack.c.l.b16 %v917
        %v1058 = vunpack.c.h.b16 %v917
        %v1059 = vunpack.c.l.b16 %v918
        %v1060 = vunpack.c.h.b16 %v918
        %v1061 = vunpack.c.l.b16 %v919
        %v1062 = vunpack.c.h.b16 %v919
        %v1063 = vunpack.c.l.b16 %v920
        %v1064 = vunpack.c.h.b16 %v920
        %v1065 = vunpack.c.l.b16 %v921
        %v1066 = vunpack.c.h.b16 %v921
        %v1067 = vunpack.c.l.b16 %v922
        %v1068 = vunpack.c.h.b16 %v922
        %v1069 = vunpack.c.l.b16 %v923
        %v1070 = vunpack.c.h.b16 %v923
        %v1071 = vunpack.c.l.b16 %v924
        %v1072 = vunpack.c.h.b16 %v924
        %v1073 = vunpack.c.l.b16 %v925
        %v1074 = vunpack.c.h.b16 %v925
        %v1075 = vunpack.c.l.b16 %v926
        %v1076 = vunpack.c.h.b16 %v926
        %v1077 = vunpack.c.l.b16 %v927
        %v1078 = vunpack.c.h.b16 %v927
        %v1079 = vunpack.c.l.b16 %v928
        %v1080 = vunpack.c.h.b16 %v928
        %v1081 = vunpack.c.l.b16 %v929
        %v1082 = vunpack.c.h.b16 %v929
        %v1083 = vunpack.c.l.b16 %v930
        %v1084 = vunpack.c.h.b16 %v930
        %v1085 = vunpack.c.l.b16 %v931
        %v1086 = vunpack.c.h.b16 %v931
        %v1087 = vunpack.c.l.b16 %v932
        %v1088 = vunpack.c.h.b16 %v932
        %v1089 = vunpack.c.l.b16 %v933
        %v1090 = vunpack.c.h.b16 %v933
        %v1091 = vunpack.c.l.b16 %v934
        %v1092 = vunpack.c.h.b16 %v934
        %v1093 = vunpack.c.l.b16 %v935
        %v1094 = vunpack.c.h.b16 %v935
        %v1095 = vunpack.c.l.b16 %v936
        %v1096 = vunpack.c.h.b16 %v936
        %v1097 = vunpack.c.l.b16 %v937
        %v1098 = vunpack.c.h.b16 %v937
        %v1099 = vunpack.c.l.b16 %v938
        %v1100 = vunpack.c.h.b16 %v938
        %v1101 = vunpack.c.l.b16 %v939
        %v1102 = vunpack.c.h.b16 %v939
        %v1103 = vunpack.c.l.b16 %v940
        %v1104 = vunpack.c.h.b16 %v940
        %v1105 = vunpack.c.l.b16 %v941
        %v1106 = vunpack.c.h.b16 %v941
        %v1107 = vunpack.c.l.b16 %v942
        %v1108 = vunpack.c.h.b16 %v942
        %v1109 = vunpack.c.l.b16 %v943
        %v1110 = vunpack.c.h.b16 %v943
        %v1111 = vunpack.c.l.b16 %v944
        %v1112 = vunpack.c.h.b16 %v944
        %v1113 = vunpack.c.l.b16 %v945
        %v1114 = vunpack.c.h.b16 %v945
        %v1115 = vunpack.c.l.b16 %v946
        %v1116 = vunpack.c.h.b16 %v946
        %v1117 = vunpack.c.l.b16 %v947
        %v1118 = vunpack.c.h.b16 %v947
        %v1119 = vunpack.c.l.b16 %v948
        %v1120 = vunpack.c.h.b16 %v948
        %v1121 = vunpack.c.l.b16 %v949
        %v1122 = vunpack.c.h.b16 %v949
        %v1123 = vunpack.c.l.b16 %v950
        %v1124 = vunpack.c.h.b16 %v950
        %v1125 = vunpack.c.l.b16 %v951
        %v1126 = vunpack.c.h.b16 %v951
        %v1127 = vunpack.c.l.b16 %v952
        %v1128 = vunpack.c.h.b16 %v952
        %v1129 = vpack.c.b16 %v1039, %v1033
        %v1130 = vpack.c.b16 %v1040, %v1034
        %v1131 = vpack.c.b16 %v1041, %v1035
        %v1132 = vpack.c.b16 %v1042, %v1036
        %v1133 = vpack.c.b16 %v1043, %v1037
        %v1134 = vpack.c.b16 %v1044, %v1038
        %v1135 = vpack.c.b16 %v1051, %v1045
        %v1136 = vpack.c.b16 %v1052, %v1046
        %v1137 = vpack.c.b16 %v1053, %v1047
        %v1138 = vpack.c.b16 %v1054, %v1048
        %v1139 = vpack.c.b16 %v1055, %v1049
        %v1140 = vpack.c.b16 %v1056, %v1050
        %v1141 = vpack.c.b16 %v1063, %v1057
        %v1142 = vpack.c.b16 %v1064, %v1058
        %v1143 = vpack.c.b16 %v1065, %v1059
        %v1144 = vpack.c.b16 %v1066, %v1060
        %v1145 = vpack.c.b16 %v1067, %v1061
        %v1146 = vpack.c.b16 %v1068, %v1062
        %v1147 = vpack.c.b16 %v1075, %v1069
        %v1148 = vpack.c.b16 %v1076, %v1070
        %v1149 = vpack.c.b16 %v1077, %v1071
        %v1150 = vpack.c.b16 %v1078, %v1072
        %v1151 = vpack.c.b16 %v1079, %v1073
        %v1152 = vpack.c.b16 %v1080, %v1074
        %v1153 = vpack.c.b16 %v1087, %v1081
        %v1154 = vpack.c.b16 %v1088, %v1082
        %v1155 = vpack.c.b16 %v1089, %v1083
        %v1156 = vpack.c.b16 %v1090, %v1084
        %v1157 = vpack.c.b16 %v1091, %v1085
        %v1158 = vpack.c.b16 %v1092, %v1086
        %v1159 = vpack.c.b16 %v1099, %v1093
        %v1160 = vpack.c.b16 %v1100, %v1094
        %v1161 = vpack.c.b16 %v1101, %v1095
        %v1162 = vpack.c.b16 %v1102, %v1096
        %v1163 = vpack.c.b16 %v1103, %v1097
        %v1164 = vpack.c.b16 %v1104, %v1098
        %v1165 = vpack.c.b16 %v1111, %v1105
        %v1166 = vpack.c.b16 %v1112, %v1106
        %v1167 = vpack.c.b16 %v1113, %v1107
        %v1168 = vpack.c.b16 %v1114, %v1108
        %v1169 = vpack.c.b16 %v1115, %v1109
        %v1170 = vpack.c.b16 %v1116, %v1110
        %v1171 = vpack.c.b16 %v1123, %v1117
        %v1172 = vpack.c.b16 %v1124, %v1118
        %v1173 = vpack.c.b16 %v1125, %v1119
        %v1174 = vpack.c.b16 %v1126, %v1120
        %v1175 = vpack.c.b16 %v1127, %v1121
        %v1176 = vpack.c.b16 %v1128, %v1122
        %1225 = vmatprep.subr.bf16.mxu0 %v1130
        %1226 = vmatpush1.bf16.msra.mxu0 %v1129
        %1227 = vmatprep.subr.bf16.mxu0 %v1136
        %1228 = vmatpush1.bf16.msra.mxu0 %v1135
        %1229 = vmatprep.subr.bf16.mxu0 %v1142
        %1230 = vmatpush1.bf16.msra.mxu0 %v1141
        %1231 = vmatprep.subr.bf16.mxu0 %v1148
        %1232 = vmatpush1.bf16.msra.mxu0 %v1147
        %1233 = vmatprep.subr.bf16.mxu0 %v1154
        %1234 = vmatpush1.bf16.msra.mxu0 %v1153
        %1235 = vmatprep.subr.bf16.mxu0 %v1160
        %1236 = vmatpush1.bf16.msra.mxu0 %v1159
        %1237 = vmatprep.subr.bf16.mxu0 %v1166
        %1238 = vmatpush1.bf16.msra.mxu0 %v1165
        %1239 = vmatprep.subr.bf16.mxu0 %v1172
        %1240 = vmatpush1.bf16.msra.mxu0 %v1171
        %1241 = vmatprep.subr.bf16.mxu0 0
        %1242 = vmatpush1.bf16.msra.mxu0 0
        %1243 = vmatprep.subr.bf16.mxu0 0
        %1244 = vmatpush1.bf16.msra.mxu0 0
        %1245 = vmatprep.subr.bf16.mxu0 0
        %1246 = vmatpush1.bf16.msra.mxu0 0
        %1247 = vmatprep.subr.bf16.mxu0 0
        %1248 = vmatpush1.bf16.msra.mxu0 0
        %1249 = vmatprep.subr.bf16.mxu0 0
        %1250 = vmatpush1.bf16.msra.mxu0 0
        %1251 = vmatprep.subr.bf16.mxu0 0
        %1252 = vmatpush1.bf16.msra.mxu0 0
        %1253 = vmatprep.subr.bf16.mxu0 0
        %1254 = vmatpush1.bf16.msra.mxu0 0
        %1255 = vmatprep.subr.bf16.mxu0 0
        %1256 = vmatpush1.bf16.msra.mxu0 0
        %1257 = vmatprep.mubr.bf16.mxu0 0
        %1258 = vmatmul.mubr.bf16.gmra.mrb[0].mxu0 %v904
        %v1259 = vpop.f32.mrb[0].mxu0
        %v1260 = vadd.f32 %v958, %v1259
        %v1261 = vpop.f32.mrb[0].mxu0
        %v1262 = vadd.f32 %v962, %v1261
        %v1263 = vpop.f32.mrb[0].mxu0
        %v1264 = vadd.f32 %v958, %v1263
        %v1265 = vpop.f32.mrb[0].mxu0
        %v1266 = vadd.f32 %v962, %v1265
        %1267 = vdwg.mxu0
        %1268 = vmatprep.subr.bf16.mxu0 %v1132
        %1269 = vmatpush1.bf16.msra.mxu0 %v1131
        %1270 = vmatprep.subr.bf16.mxu0 %v1138
        %1271 = vmatpush1.bf16.msra.mxu0 %v1137
        %1272 = vmatprep.subr.bf16.mxu0 %v1144
        %1273 = vmatpush1.bf16.msra.mxu0 %v1143
        %1274 = vmatprep.subr.bf16.mxu0 %v1150
        %1275 = vmatpush1.bf16.msra.mxu0 %v1149
        %1276 = vmatprep.subr.bf16.mxu0 %v1156
        %1277 = vmatpush1.bf16.msra.mxu0 %v1155
        %1278 = vmatprep.subr.bf16.mxu0 %v1162
        %1279 = vmatpush1.bf16.msra.mxu0 %v1161
        %1280 = vmatprep.subr.bf16.mxu0 %v1168
        %1281 = vmatpush1.bf16.msra.mxu0 %v1167
        %1282 = vmatprep.subr.bf16.mxu0 %v1174
        %1283 = vmatpush1.bf16.msra.mxu0 %v1173
        %1284 = vmatprep.subr.bf16.mxu0 0
        %1285 = vmatpush1.bf16.msra.mxu0 0
        %1286 = vmatprep.subr.bf16.mxu0 0
        %1287 = vmatpush1.bf16.msra.mxu0 0
        %1288 = vmatprep.subr.bf16.mxu0 0
        %1289 = vmatpush1.bf16.msra.mxu0 0
        %1290 = vmatprep.subr.bf16.mxu0 0
        %1291 = vmatpush1.bf16.msra.mxu0 0
        %1292 = vmatprep.subr.bf16.mxu0 0
        %1293 = vmatpush1.bf16.msra.mxu0 0
        %1294 = vmatprep.subr.bf16.mxu0 0
        %1295 = vmatpush1.bf16.msra.mxu0 0
        %1296 = vmatprep.subr.bf16.mxu0 0
        %1297 = vmatpush1.bf16.msra.mxu0 0
        %1298 = vmatprep.subr.bf16.mxu0 0
        %1299 = vmatpush1.bf16.msra.mxu0 0
        %1300 = vmatprep.mubr.bf16.mxu0 0
        %1301 = vmatmul.mubr.bf16.gmra.mrb[0].mxu0 %v904
        %v1302 = vpop.f32.mrb[0].mxu0
        %v1303 = vadd.f32 %v966, %v1302
        %v1304 = vpop.f32.mrb[0].mxu0
        %v1305 = vadd.f32 %v970, %v1304
        %v1306 = vpop.f32.mrb[0].mxu0
        %v1307 = vadd.f32 %v966, %v1306
        %v1308 = vpop.f32.mrb[0].mxu0
        %v1309 = vadd.f32 %v970, %v1308
        %1310 = vdwg.mxu0
        %1311 = vmatprep.subr.bf16.mxu0 %v1134
        %1312 = vmatpush1.bf16.msra.mxu0 %v1133
        %1313 = vmatprep.subr.bf16.mxu0 %v1140
        %1314 = vmatpush1.bf16.msra.mxu0 %v1139
        %1315 = vmatprep.subr.bf16.mxu0 %v1146
        %1316 = vmatpush1.bf16.msra.mxu0 %v1145
        %1317 = vmatprep.subr.bf16.mxu0 %v1152
        %1318 = vmatpush1.bf16.msra.mxu0 %v1151
        %1319 = vmatprep.subr.bf16.mxu0 %v1158
        %1320 = vmatpush1.bf16.msra.mxu0 %v1157
        %1321 = vmatprep.subr.bf16.mxu0 %v1164
        %1322 = vmatpush1.bf16.msra.mxu0 %v1163
        %1323 = vmatprep.subr.bf16.mxu0 %v1170
        %1324 = vmatpush1.bf16.msra.mxu0 %v1169
        %1325 = vmatprep.subr.bf16.mxu0 %v1176
        %1326 = vmatpush1.bf16.msra.mxu0 %v1175
        %1327 = vmatprep.subr.bf16.mxu0 0
        %1328 = vmatpush1.bf16.msra.mxu0 0
        %1329 = vmatprep.subr.bf16.mxu0 0
        %1330 = vmatpush1.bf16.msra.mxu0 0
        %1331 = vmatprep.subr.bf16.mxu0 0
        %1332 = vmatpush1.bf16.msra.mxu0 0
        %1333 = vmatprep.subr.bf16.mxu0 0
        %1334 = vmatpush1.bf16.msra.mxu0 0
        %1335 = vmatprep.subr.bf16.mxu0 0
        %1336 = vmatpush1.bf16.msra.mxu0 0
        %1337 = vmatprep.subr.bf16.mxu0 0
        %1338 = vmatpush1.bf16.msra.mxu0 0
        %1339 = vmatprep.subr.bf16.mxu0 0
        %1340 = vmatpush1.bf16.msra.mxu0 0
        %1341 = vmatprep.subr.bf16.mxu0 0
        %1342 = vmatpush1.bf16.msra.mxu0 0
        %1343 = vmatprep.mubr.bf16.mxu0 0
        %1344 = vmatmul.mubr.bf16.gmra.mrb[0].mxu0 %v904
        %v1345 = vpop.f32.mrb[0].mxu0
        %v1346 = vadd.f32 %v974, %v1345
        %v1347 = vpop.f32.mrb[0].mxu0
        %v1348 = vadd.f32 %v978, %v1347
        %v1349 = vpop.f32.mrb[0].mxu0
        %v1350 = vadd.f32 %v974, %v1349
        %v1351 = vpop.f32.mrb[0].mxu0
        %v1352 = vadd.f32 %v978, %v1351
        %1353 = vdwg.mxu0
        %v1354 = vpack.c.bf16 %v1260, %v1260
        %v1355 = vpack.c.bf16 %v1262, %v1262
        %1356 = vmatprep.subr.bf16.mxu0 0
        %1357 = vmatpush1.bf16.xpose.msra.mxu0 %v1355
        %1358 = vmatprep.subr.bf16.mxu0 0
        %1359 = vmatpush1.bf16.xpose.msra.mxu0 0
        %1360 = vmatprep.subr.bf16.mxu0 0
        %1361 = vmatpush1.bf16.xpose.msra.mxu0 0
        %1362 = vmatprep.subr.bf16.mxu0 0
        %1363 = vmatpush1.bf16.xpose.msra.mxu0 0
        %1364 = vmatprep.subr.bf16.mxu0 0
        %1365 = vmatpush1.bf16.xpose.msra.mxu0 0
        %1366 = vmatprep.subr.bf16.mxu0 0
        %1367 = vmatpush1.bf16.xpose.msra.mxu0 0
        %1368 = vmatprep.subr.bf16.mxu0 0
        %1369 = vmatpush1.bf16.xpose.msra.mxu0 0
        %1370 = vmatprep.subr.bf16.mxu0 0
        %1371 = vmatpush1.bf16.xpose.msra.mxu0 0
        %1372 = vmatprep.subr.bf16.mxu0 0
        %1373 = vmatpush1.bf16.xpose.msra.mxu0 0
        %1374 = vmatprep.subr.bf16.mxu0 0
        %1375 = vmatpush1.bf16.xpose.msra.mxu0 0
        %1376 = vmatprep.subr.bf16.mxu0 0
        %1377 = vmatpush1.bf16.xpose.msra.mxu0 0
        %1378 = vmatprep.subr.bf16.mxu0 0
        %1379 = vmatpush1.bf16.xpose.msra.mxu0 0
        %1380 = vmatprep.subr.bf16.mxu0 0
        %1381 = vmatpush1.bf16.xpose.msra.mxu0 0
        %1382 = vmatprep.subr.bf16.mxu0 0
        %1383 = vmatpush1.bf16.xpose.msra.mxu0 0
        %1384 = vmatprep.subr.bf16.mxu0 0
        %1385 = vmatpush1.bf16.xpose.msra.mxu0 0
        %1386 = vmatprep.subr.bf16.mxu0 0
        %1387 = vmatpush1.bf16.xpose.msra.mxu0 0
        %1388 = vmatprep.mubr.bf16.mxu0 0
        %1389 = vmatmul.mubr.bf16.gmra.mrb[0].mxu0 %v1354
        %v1390 = vpop.f32.mrb[0].mxu0
        %v1391 = vadd.f32 0.0, %v1390
        %v1392 = vpop.f32.mrb[0].mxu0
        %v1393 = vpop.f32.mrb[0].mxu0
        %v1394 = vpop.f32.mrb[0].mxu0
        %1395 = vdwg.mxu0
        %v1396 = vmul.f32 %v1391, 0.125
        %v1397 = vlaneseq
        %v1398 = vshrl.u32 %v1397, 7
        %v1399 = vsub.s32 0, %v1398
        %v1400 = vrot.slane %v903, %v1399
        %v1401 = vadd.f32 %v1396, %v1400
        %v1402 = vmul.f32 %v1401, 1.442695
        %v1403 = vpow.pop %v1402
        %vm1404 = vcmask 64512
        %v1405 = vsel %vm1404, %v1403, 0.0
        %1406 = vadd.xlane.f32.xlu0 %v1405
        %v1407 = vpop.xlane.xlu0 %1406
        %v1408 = vrcp.pop %v1407
        %v1409 = vmul.f32 %v1403, %v1408
        %v1410 = vpack.c.bf16 %v1409, %v1409
        %v1411 = vpack.c.bf16 %v1303, %v1303
        %v1413 = vsel %vm1404, %v1410, 0
        %vm1415 = vcmask 1043456
        %v1417 = vsel %vm1415, %v1411, 0
        %1419 = vmatprep.subr.bf16.mxu0 0
        %1420 = vmatpush1.bf16.msra.mxu0 %v1417
        %1421 = vmatprep.subr.bf16.mxu0 0
        %1422 = vmatpush1.bf16.msra.mxu0 0
        %1423 = vmatprep.subr.bf16.mxu0 0
        %1424 = vmatpush1.bf16.msra.mxu0 0
        %1425 = vmatprep.subr.bf16.mxu0 0
        %1426 = vmatpush1.bf16.msra.mxu0 0
        %1427 = vmatprep.subr.bf16.mxu0 0
        %1428 = vmatpush1.bf16.msra.mxu0 0
        %1429 = vmatprep.subr.bf16.mxu0 0
        %1430 = vmatpush1.bf16.msra.mxu0 0
        %1431 = vmatprep.subr.bf16.mxu0 0
        %1432 = vmatpush1.bf16.msra.mxu0 0
        %1433 = vmatprep.subr.bf16.mxu0 0
        %1434 = vmatpush1.bf16.msra.mxu0 0
        %1435 = vmatprep.subr.bf16.mxu0 0
        %1436 = vmatpush1.bf16.msra.mxu0 0
        %1437 = vmatprep.subr.bf16.mxu0 0
        %1438 = vmatpush1.bf16.msra.mxu0 0
        %1439 = vmatprep.subr.bf16.mxu0 0
        %1440 = vmatpush1.bf16.msra.mxu0 0
        %1441 = vmatprep.subr.bf16.mxu0 0
        %1442 = vmatpush1.bf16.msra.mxu0 0
        %1443 = vmatprep.subr.bf16.mxu0 0
        %1444 = vmatpush1.bf16.msra.mxu0 0
        %1445 = vmatprep.subr.bf16.mxu0 0
        %1446 = vmatpush1.bf16.msra.mxu0 0
        %1447 = vmatprep.subr.bf16.mxu0 0
        %1448 = vmatpush1.bf16.msra.mxu0 0
        %1449 = vmatprep.subr.bf16.mxu0 0
        %1450 = vmatpush1.bf16.msra.mxu0 0
        %1451 = vmatprep.mubr.bf16.mxu0 0
        %1452 = vmatmul.mubr.bf16.gmra.mrb[0].mxu0 %v1413
        %v1453 = vpop.f32.mrb[0].mxu0
        %v1454 = vadd.f32 0.0, %v1453
        %v1455 = vpop.f32.mrb[0].mxu0
        %v1456 = vpop.f32.mrb[0].mxu0
        %v1457 = vpop.f32.mrb[0].mxu0
        %1458 = vdwg.mxu0
        %1459 = vst [vmem:[#allocation3] sm:$0xff] %v1454
        %v1460 = vpack.c.bf16 %v1305, %v1305
        %v1461 = vpack.c.bf16 %v1346, %v1346
        %1462 = vmatprep.subr.bf16.mxu0 0
        %1463 = vmatpush1.bf16.xpose.msra.mxu0 %v1461
        %1464 = vmatprep.subr.bf16.mxu0 0
        %1465 = vmatpush1.bf16.xpose.msra.mxu0 0
        %1466 = vmatprep.subr.bf16.mxu0 0
        %1467 = vmatpush1.bf16.xpose.msra.mxu0 0
        %1468 = vmatprep.subr.bf16.mxu0 0
        %1469 = vmatpush1.bf16.xpose.msra.mxu0 0
        %1470 = vmatprep.subr.bf16.mxu0 0
        %1471 = vmatpush1.bf16.xpose.msra.mxu0 0
        %1472 = vmatprep.subr.bf16.mxu0 0
        %1473 = vmatpush1.bf16.xpose.msra.mxu0 0
        %1474 = vmatprep.subr.bf16.mxu0 0
        %1475 = vmatpush1.bf16.xpose.msra.mxu0 0
        %1476 = vmatprep.subr.bf16.mxu0 0
        %1477 = vmatpush1.bf16.xpose.msra.mxu0 0
        %1478 = vmatprep.subr.bf16.mxu0 0
        %1479 = vmatpush1.bf16.xpose.msra.mxu0 0
        %1480 = vmatprep.subr.bf16.mxu0 0
        %1481 = vmatpush1.bf16.xpose.msra.mxu0 0
        %1482 = vmatprep.subr.bf16.mxu0 0
        %1483 = vmatpush1.bf16.xpose.msra.mxu0 0
        %1484 = vmatprep.subr.bf16.mxu0 0
        %1485 = vmatpush1.bf16.xpose.msra.mxu0 0
        %1486 = vmatprep.subr.bf16.mxu0 0
        %1487 = vmatpush1.bf16.xpose.msra.mxu0 0
        %1488 = vmatprep.subr.bf16.mxu0 0
        %1489 = vmatpush1.bf16.xpose.msra.mxu0 0
        %1490 = vmatprep.subr.bf16.mxu0 0
        %1491 = vmatpush1.bf16.xpose.msra.mxu0 0
        %1492 = vmatprep.subr.bf16.mxu0 0
        %1493 = vmatpush1.bf16.xpose.msra.mxu0 0
        %1494 = vmatprep.mubr.bf16.mxu0 0
        %1495 = vmatmul.mubr.bf16.gmra.mrb[0].mxu0 %v1460
        %v1496 = vpop.f32.mrb[0].mxu0
        %v1497 = vadd.f32 0.0, %v1496
        %v1498 = vpop.f32.mrb[0].mxu0
        %v1499 = vpop.f32.mrb[0].mxu0
        %v1500 = vpop.f32.mrb[0].mxu0
        %1501 = vdwg.mxu0
        %v1502 = vmul.f32 %v1497, 0.125
        %v1503 = vadd.f32 %v1502, %v1400
        %v1504 = vmul.f32 %v1503, 1.442695
        %v1505 = vpow.pop %v1504
        %v1506 = vsel %vm1404, %v1505, 0.0
        %1507 = vadd.xlane.f32.xlu0 %v1506
        %v1508 = vpop.xlane.xlu0 %1507
        %v1509 = vrcp.pop %v1508
        %v1510 = vmul.f32 %v1505, %v1509
        %v1511 = vpack.c.bf16 %v1510, %v1510
        %v1512 = vpack.c.bf16 %v1348, %v1348
        %v1514 = vsel %vm1404, %v1511, 0
        %v1517 = vsel %vm1415, %v1512, 0
        %1519 = vmatprep.subr.bf16.mxu0 0
        %1520 = vmatpush1.bf16.msra.mxu0 %v1517
        %1521 = vmatprep.subr.bf16.mxu0 0
        %1522 = vmatpush1.bf16.msra.mxu0 0
        %1523 = vmatprep.subr.bf16.mxu0 0
        %1524 = vmatpush1.bf16.msra.mxu0 0
        %1525 = vmatprep.subr.bf16.mxu0 0
        %1526 = vmatpush1.bf16.msra.mxu0 0
        %1527 = vmatprep.subr.bf16.mxu0 0
        %1528 = vmatpush1.bf16.msra.mxu0 0
        %1529 = vmatprep.subr.bf16.mxu0 0
        %1530 = vmatpush1.bf16.msra.mxu0 0
        %1531 = vmatprep.subr.bf16.mxu0 0
        %1532 = vmatpush1.bf16.msra.mxu0 0
        %1533 = vmatprep.subr.bf16.mxu0 0
        %1534 = vmatpush1.bf16.msra.mxu0 0
        %1535 = vmatprep.subr.bf16.mxu0 0
        %1536 = vmatpush1.bf16.msra.mxu0 0
        %1537 = vmatprep.subr.bf16.mxu0 0
        %1538 = vmatpush1.bf16.msra.mxu0 0
        %1539 = vmatprep.subr.bf16.mxu0 0
        %1540 = vmatpush1.bf16.msra.mxu0 0
        %1541 = vmatprep.subr.bf16.mxu0 0
        %1542 = vmatpush1.bf16.msra.mxu0 0
        %1543 = vmatprep.subr.bf16.mxu0 0
        %1544 = vmatpush1.bf16.msra.mxu0 0
        %1545 = vmatprep.subr.bf16.mxu0 0
        %1546 = vmatpush1.bf16.msra.mxu0 0
        %1547 = vmatprep.subr.bf16.mxu0 0
        %1548 = vmatpush1.bf16.msra.mxu0 0
        %1549 = vmatprep.subr.bf16.mxu0 0
        %1550 = vmatpush1.bf16.msra.mxu0 0
        %1551 = vmatprep.mubr.bf16.mxu0 0
        %1552 = vmatmul.mubr.bf16.gmra.mrb[0].mxu0 %v1514
        %v1553 = vpop.f32.mrb[0].mxu0
        %v1554 = vadd.f32 0.0, %v1553
        %v1555 = vpop.f32.mrb[0].mxu0
        %v1556 = vpop.f32.mrb[0].mxu0
        %v1557 = vpop.f32.mrb[0].mxu0
        %1558 = vdwg.mxu0
        %1559 = vst [vmem:[#allocation3 + $0x8] sm:$0xff] %v1554
        %v1560 = vpack.c.bf16 %v1264, %v1264
        %v1561 = vpack.c.bf16 %v1266, %v1266
        %1562 = vmatprep.subr.bf16.mxu0 0
        %1563 = vmatpush1.bf16.xpose.msra.mxu0 %v1561
        %1564 = vmatprep.subr.bf16.mxu0 0
        %1565 = vmatpush1.bf16.xpose.msra.mxu0 0
        %1566 = vmatprep.subr.bf16.mxu0 0
        %1567 = vmatpush1.bf16.xpose.msra.mxu0 0
        %1568 = vmatprep.subr.bf16.mxu0 0
        %1569 = vmatpush1.bf16.xpose.msra.mxu0 0
        %1570 = vmatprep.subr.bf16.mxu0 0
        %1571 = vmatpush1.bf16.xpose.msra.mxu0 0
        %1572 = vmatprep.subr.bf16.mxu0 0
        %1573 = vmatpush1.bf16.xpose.msra.mxu0 0
        %1574 = vmatprep.subr.bf16.mxu0 0
        %1575 = vmatpush1.bf16.xpose.msra.mxu0 0
        %1576 = vmatprep.subr.bf16.mxu0 0
        %1577 = vmatpush1.bf16.xpose.msra.mxu0 0
        %1578 = vmatprep.subr.bf16.mxu0 0
        %1579 = vmatpush1.bf16.xpose.msra.mxu0 0
        %1580 = vmatprep.subr.bf16.mxu0 0
        %1581 = vmatpush1.bf16.xpose.msra.mxu0 0
        %1582 = vmatprep.subr.bf16.mxu0 0
        %1583 = vmatpush1.bf16.xpose.msra.mxu0 0
        %1584 = vmatprep.subr.bf16.mxu0 0
        %1585 = vmatpush1.bf16.xpose.msra.mxu0 0
        %1586 = vmatprep.subr.bf16.mxu0 0
        %1587 = vmatpush1.bf16.xpose.msra.mxu0 0
        %1588 = vmatprep.subr.bf16.mxu0 0
        %1589 = vmatpush1.bf16.xpose.msra.mxu0 0
        %1590 = vmatprep.subr.bf16.mxu0 0
        %1591 = vmatpush1.bf16.xpose.msra.mxu0 0
        %1592 = vmatprep.subr.bf16.mxu0 0
        %1593 = vmatpush1.bf16.xpose.msra.mxu0 0
        %1594 = vmatprep.mubr.bf16.mxu0 0
        %1595 = vmatmul.mubr.bf16.gmra.mrb[0].mxu0 %v1560
        %v1596 = vpop.f32.mrb[0].mxu0
        %v1597 = vadd.f32 0.0, %v1596
        %v1598 = vpop.f32.mrb[0].mxu0
        %v1599 = vpop.f32.mrb[0].mxu0
        %v1600 = vpop.f32.mrb[0].mxu0
        %1601 = vdwg.mxu0
        %v1602 = vmul.f32 %v1597, 0.125
        %v1603 = vlaneseq
        %v1604 = vshrl.u32 %v1603, 7
        %v1605 = vsub.s32 1, %v1604
        %v1606 = vrot.slane %v903, %v1605
        %v1607 = vadd.f32 %v1602, %v1606
        %v1608 = vmul.f32 %v1607, 1.442695
        %v1609 = vpow.pop %v1608
        %v1610 = vsel %vm1404, %v1609, 0.0
        %1611 = vadd.xlane.f32.xlu0 %v1610
        %v1612 = vpop.xlane.xlu0 %1611
        %v1613 = vrcp.pop %v1612
        %v1614 = vmul.f32 %v1609, %v1613
        %v1615 = vpack.c.bf16 %v1614, %v1614
        %v1616 = vpack.c.bf16 %v1307, %v1307
        %v1618 = vsel %vm1404, %v1615, 0
        %v1621 = vsel %vm1415, %v1616, 0
        %1623 = vmatprep.subr.bf16.mxu0 0
        %1624 = vmatpush1.bf16.msra.mxu0 %v1621
        %1625 = vmatprep.subr.bf16.mxu0 0
        %1626 = vmatpush1.bf16.msra.mxu0 0
        %1627 = vmatprep.subr.bf16.mxu0 0
        %1628 = vmatpush1.bf16.msra.mxu0 0
        %1629 = vmatprep.subr.bf16.mxu0 0
        %1630 = vmatpush1.bf16.msra.mxu0 0
        %1631 = vmatprep.subr.bf16.mxu0 0
        %1632 = vmatpush1.bf16.msra.mxu0 0
        %1633 = vmatprep.subr.bf16.mxu0 0
        %1634 = vmatpush1.bf16.msra.mxu0 0
        %1635 = vmatprep.subr.bf16.mxu0 0
        %1636 = vmatpush1.bf16.msra.mxu0 0
        %1637 = vmatprep.subr.bf16.mxu0 0
        %1638 = vmatpush1.bf16.msra.mxu0 0
        %1639 = vmatprep.subr.bf16.mxu0 0
        %1640 = vmatpush1.bf16.msra.mxu0 0
        %1641 = vmatprep.subr.bf16.mxu0 0
        %1642 = vmatpush1.bf16.msra.mxu0 0
        %1643 = vmatprep.subr.bf16.mxu0 0
        %1644 = vmatpush1.bf16.msra.mxu0 0
        %1645 = vmatprep.subr.bf16.mxu0 0
        %1646 = vmatpush1.bf16.msra.mxu0 0
        %1647 = vmatprep.subr.bf16.mxu0 0
        %1648 = vmatpush1.bf16.msra.mxu0 0
        %1649 = vmatprep.subr.bf16.mxu0 0
        %1650 = vmatpush1.bf16.msra.mxu0 0
        %1651 = vmatprep.subr.bf16.mxu0 0
        %1652 = vmatpush1.bf16.msra.mxu0 0
        %1653 = vmatprep.subr.bf16.mxu0 0
        %1654 = vmatpush1.bf16.msra.mxu0 0
        %1655 = vmatprep.mubr.bf16.mxu0 0
        %1656 = vmatmul.mubr.bf16.gmra.mrb[0].mxu0 %v1618
        %v1657 = vpop.f32.mrb[0].mxu0
        %v1658 = vadd.f32 0.0, %v1657
        %v1659 = vpop.f32.mrb[0].mxu0
        %v1660 = vpop.f32.mrb[0].mxu0
        %v1661 = vpop.f32.mrb[0].mxu0
        %1662 = vdwg.mxu0
        %1663 = vst [vmem:[#allocation3 + $0x10] sm:$0xff] %v1658
        %v1664 = vpack.c.bf16 %v1309, %v1309
        %v1665 = vpack.c.bf16 %v1350, %v1350
        %1666 = vmatprep.subr.bf16.mxu0 0
        %1667 = vmatpush1.bf16.xpose.msra.mxu0 %v1665
        %1668 = vmatprep.subr.bf16.mxu0 0
        %1669 = vmatpush1.bf16.xpose.msra.mxu0 0
        %1670 = vmatprep.subr.bf16.mxu0 0
        %1671 = vmatpush1.bf16.xpose.msra.mxu0 0
        %1672 = vmatprep.subr.bf16.mxu0 0
        %1673 = vmatpush1.bf16.xpose.msra.mxu0 0
        %1674 = vmatprep.subr.bf16.mxu0 0
        %1675 = vmatpush1.bf16.xpose.msra.mxu0 0
        %1676 = vmatprep.subr.bf16.mxu0 0
        %1677 = vmatpush1.bf16.xpose.msra.mxu0 0
        %1678 = vmatprep.subr.bf16.mxu0 0
        %1679 = vmatpush1.bf16.xpose.msra.mxu0 0
        %1680 = vmatprep.subr.bf16.mxu0 0
        %1681 = vmatpush1.bf16.xpose.msra.mxu0 0
        %1682 = vmatprep.subr.bf16.mxu0 0
        %1683 = vmatpush1.bf16.xpose.msra.mxu0 0
        %1684 = vmatprep.subr.bf16.mxu0 0
        %1685 = vmatpush1.bf16.xpose.msra.mxu0 0
        %1686 = vmatprep.subr.bf16.mxu0 0
        %1687 = vmatpush1.bf16.xpose.msra.mxu0 0
        %1688 = vmatprep.subr.bf16.mxu0 0
        %1689 = vmatpush1.bf16.xpose.msra.mxu0 0
        %1690 = vmatprep.subr.bf16.mxu0 0
        %1691 = vmatpush1.bf16.xpose.msra.mxu0 0
        %1692 = vmatprep.subr.bf16.mxu0 0
        %1693 = vmatpush1.bf16.xpose.msra.mxu0 0
        %1694 = vmatprep.subr.bf16.mxu0 0
        %1695 = vmatpush1.bf16.xpose.msra.mxu0 0
        %1696 = vmatprep.subr.bf16.mxu0 0
        %1697 = vmatpush1.bf16.xpose.msra.mxu0 0
        %1698 = vmatprep.mubr.bf16.mxu0 0
        %1699 = vmatmul.mubr.bf16.gmra.mrb[0].mxu0 %v1664
        %v1700 = vpop.f32.mrb[0].mxu0
        %v1701 = vadd.f32 0.0, %v1700
        %v1702 = vpop.f32.mrb[0].mxu0
        %v1703 = vpop.f32.mrb[0].mxu0
        %v1704 = vpop.f32.mrb[0].mxu0
        %1705 = vdwg.mxu0
        %v1706 = vmul.f32 %v1701, 0.125
        %v1707 = vadd.f32 %v1706, %v1606
        %v1708 = vmul.f32 %v1707, 1.442695
        %v1709 = vpow.pop %v1708
        %v1710 = vsel %vm1404, %v1709, 0.0
        %1711 = vadd.xlane.f32.xlu0 %v1710
        %v1712 = vpop.xlane.xlu0 %1711
        %v1713 = vrcp.pop %v1712
        %v1714 = vmul.f32 %v1709, %v1713
        %v1715 = vpack.c.bf16 %v1714, %v1714
        %v1716 = vpack.c.bf16 %v1352, %v1352
        %v1718 = vsel %vm1404, %v1715, 0
        %v1721 = vsel %vm1415, %v1716, 0
        %1723 = vmatprep.subr.bf16.mxu0 0
        %1724 = vmatpush1.bf16.msra.mxu0 %v1721
        %1725 = vmatprep.subr.bf16.mxu0 0
        %1726 = vmatpush1.bf16.msra.mxu0 0
        %1727 = vmatprep.subr.bf16.mxu0 0
        %1728 = vmatpush1.bf16.msra.mxu0 0
        %1729 = vmatprep.subr.bf16.mxu0 0
        %1730 = vmatpush1.bf16.msra.mxu0 0
        %1731 = vmatprep.subr.bf16.mxu0 0
        %1732 = vmatpush1.bf16.msra.mxu0 0
        %1733 = vmatprep.subr.bf16.mxu0 0
        %1734 = vmatpush1.bf16.msra.mxu0 0
        %1735 = vmatprep.subr.bf16.mxu0 0
        %1736 = vmatpush1.bf16.msra.mxu0 0
        %1737 = vmatprep.subr.bf16.mxu0 0
        %1738 = vmatpush1.bf16.msra.mxu0 0
        %1739 = vmatprep.subr.bf16.mxu0 0
        %1740 = vmatpush1.bf16.msra.mxu0 0
        %1741 = vmatprep.subr.bf16.mxu0 0
        %1742 = vmatpush1.bf16.msra.mxu0 0
        %1743 = vmatprep.subr.bf16.mxu0 0
        %1744 = vmatpush1.bf16.msra.mxu0 0
        %1745 = vmatprep.subr.bf16.mxu0 0
        %1746 = vmatpush1.bf16.msra.mxu0 0
        %1747 = vmatprep.subr.bf16.mxu0 0
        %1748 = vmatpush1.bf16.msra.mxu0 0
        %1749 = vmatprep.subr.bf16.mxu0 0
        %1750 = vmatpush1.bf16.msra.mxu0 0
        %1751 = vmatprep.subr.bf16.mxu0 0
        %1752 = vmatpush1.bf16.msra.mxu0 0
        %1753 = vmatprep.subr.bf16.mxu0 0
        %1754 = vmatpush1.bf16.msra.mxu0 0
        %1755 = vmatprep.mubr.bf16.mxu0 0
        %1756 = vmatmul.mubr.bf16.gmra.mrb[0].mxu0 %v1718
        %v1757 = vpop.f32.mrb[0].mxu0
        %v1758 = vadd.f32 0.0, %v1757
        %v1759 = vpop.f32.mrb[0].mxu0
        %v1760 = vpop.f32.mrb[0].mxu0
        %v1761 = vpop.f32.mrb[0].mxu0
        %1762 = vdwg.mxu0
        %1763 = vst [vmem:[#allocation3 + $0x18] sm:$0xff] %v1758
        %v1764 = vld [vmem:[#allocation3] sm:$0xff]
        %v1765 = vld [vmem:[#allocation3 + $0x8] sm:$0xff]
        %v1766 = vld [vmem:[#allocation3 + $0x10] sm:$0xff]
        %v1767 = vld [vmem:[#allocation3 + $0x18] sm:$0xff]
        %v1768 = vpack.c.bf16 %v1766, %v1764
        %v1769 = vpack.c.bf16 %v1767, %v1765
        %v1770 = vld [vmem:[%s828] sm:$0xf]
        %v1771 = vld [vmem:[%s828 + $0x4] sm:$0xf]
        %v1772 = vld [vmem:[%s828 + $0x8] sm:$0xf]
        %v1773 = vld [vmem:[%s828 + $0xc] sm:$0xf]
        %v1774 = vld [vmem:[%s828 + $0x10] sm:$0xf]
        %v1775 = vld [vmem:[%s828 + $0x14] sm:$0xf]
        %v1776 = vld [vmem:[%s828 + $0x18] sm:$0xf]
        %v1777 = vld [vmem:[%s828 + $0x1c] sm:$0xf]
        %v1778 = vld [vmem:[%s828 + $0x20] sm:$0xf]
        %v1779 = vld [vmem:[%s828 + $0x24] sm:$0xf]
        %v1780 = vld [vmem:[%s828 + $0x28] sm:$0xf]
        %v1781 = vld [vmem:[%s828 + $0x2c] sm:$0xf]
        %v1782 = vld [vmem:[%s828 + $0x30] sm:$0xf]
        %v1783 = vld [vmem:[%s828 + $0x34] sm:$0xf]
        %v1784 = vld [vmem:[%s828 + $0x38] sm:$0xf]
        %v1785 = vld [vmem:[%s828 + $0x3c] sm:$0xf]
        %v1786 = vld [vmem:[%s828 + $0x40] sm:$0xf]
        %v1787 = vld [vmem:[%s828 + $0x44] sm:$0xf]
        %v1788 = vld [vmem:[%s828 + $0x48] sm:$0xf]
        %v1789 = vld [vmem:[%s828 + $0x4c] sm:$0xf]
        %v1790 = vld [vmem:[%s828 + $0x50] sm:$0xf]
        %v1791 = vld [vmem:[%s828 + $0x54] sm:$0xf]
        %v1792 = vld [vmem:[%s828 + $0x58] sm:$0xf]
        %v1793 = vld [vmem:[%s828 + $0x5c] sm:$0xf]
        %v1794 = vld [vmem:[%s828 + $0x60] sm:$0xf]
        %v1795 = vld [vmem:[%s828 + $0x64] sm:$0xf]
        %v1796 = vld [vmem:[%s828 + $0x68] sm:$0xf]
        %v1797 = vld [vmem:[%s828 + $0x6c] sm:$0xf]
        %v1798 = vld [vmem:[%s828 + $0x70] sm:$0xf]
        %v1799 = vld [vmem:[%s828 + $0x74] sm:$0xf]
        %v1800 = vld [vmem:[%s828 + $0x78] sm:$0xf]
        %v1801 = vld [vmem:[%s828 + $0x7c] sm:$0xf]
        %v1802 = vld [vmem:[%s831] sm:$0x1]
        %v1804 = vlaneseq
        %v1805 = vshrl.u32 %v1804, 7
        %v1806 = vsub.s32 0, %v1805
        %v1807 = vrot.slane %v1802, %v1806
        %v1841 = vunpack.c.l.b16 %v1770
        %v1842 = vunpack.c.l.b16 %v1771
        %v1843 = vunpack.c.l.b16 %v1772
        %v1844 = vunpack.c.l.b16 %v1773
        %v1845 = vunpack.c.l.b16 %v1774
        %v1846 = vunpack.c.l.b16 %v1775
        %v1847 = vunpack.c.l.b16 %v1776
        %v1848 = vunpack.c.l.b16 %v1777
        %v1849 = vunpack.c.l.b16 %v1778
        %v1850 = vunpack.c.l.b16 %v1779
        %v1851 = vunpack.c.l.b16 %v1780
        %v1852 = vunpack.c.l.b16 %v1781
        %v1853 = vunpack.c.l.b16 %v1782
        %v1854 = vunpack.c.l.b16 %v1783
        %v1855 = vunpack.c.l.b16 %v1784
        %v1856 = vunpack.c.l.b16 %v1785
        %v1857 = vunpack.c.l.b16 %v1786
        %v1858 = vunpack.c.l.b16 %v1787
        %v1859 = vunpack.c.l.b16 %v1788
        %v1860 = vunpack.c.l.b16 %v1789
        %v1861 = vunpack.c.l.b16 %v1790
        %v1862 = vunpack.c.l.b16 %v1791
        %v1863 = vunpack.c.l.b16 %v1792
        %v1864 = vunpack.c.l.b16 %v1793
        %v1865 = vunpack.c.l.b16 %v1794
        %v1866 = vunpack.c.l.b16 %v1795
        %v1867 = vunpack.c.l.b16 %v1796
        %v1868 = vunpack.c.l.b16 %v1797
        %v1869 = vunpack.c.l.b16 %v1798
        %v1870 = vunpack.c.l.b16 %v1799
        %v1871 = vunpack.c.l.b16 %v1800
        %v1872 = vunpack.c.l.b16 %v1801
        %v1873 = vpack.c.b16 %v1842, %v1841
        %v1874 = vpack.c.b16 %v1844, %v1843
        %v1875 = vpack.c.b16 %v1846, %v1845
        %v1876 = vpack.c.b16 %v1848, %v1847
        %v1877 = vpack.c.b16 %v1850, %v1849
        %v1878 = vpack.c.b16 %v1852, %v1851
        %v1879 = vpack.c.b16 %v1854, %v1853
        %v1880 = vpack.c.b16 %v1856, %v1855
        %v1881 = vpack.c.b16 %v1858, %v1857
        %v1882 = vpack.c.b16 %v1860, %v1859
        %v1883 = vpack.c.b16 %v1862, %v1861
        %v1884 = vpack.c.b16 %v1864, %v1863
        %v1885 = vpack.c.b16 %v1866, %v1865
        %v1886 = vpack.c.b16 %v1868, %v1867
        %v1887 = vpack.c.b16 %v1870, %v1869
        %v1888 = vpack.c.b16 %v1872, %v1871
        %1905 = vmatprep.subr.bf16.mxu0 0
        %1906 = vmatpush1.bf16.msra.mxu0 %v1873
        %1907 = vmatprep.subr.bf16.mxu0 0
        %1908 = vmatpush1.bf16.msra.mxu0 %v1874
        %1909 = vmatprep.subr.bf16.mxu0 0
        %1910 = vmatpush1.bf16.msra.mxu0 %v1875
        %1911 = vmatprep.subr.bf16.mxu0 0
        %1912 = vmatpush1.bf16.msra.mxu0 %v1876
        %1913 = vmatprep.subr.bf16.mxu0 0
        %1914 = vmatpush1.bf16.msra.mxu0 %v1877
        %1915 = vmatprep.subr.bf16.mxu0 0
        %1916 = vmatpush1.bf16.msra.mxu0 %v1878
        %1917 = vmatprep.subr.bf16.mxu0 0
        %1918 = vmatpush1.bf16.msra.mxu0 %v1879
        %1919 = vmatprep.subr.bf16.mxu0 0
        %1920 = vmatpush1.bf16.msra.mxu0 %v1880
        %1921 = vmatprep.subr.bf16.mxu0 0
        %1922 = vmatpush1.bf16.msra.mxu0 %v1881
        %1923 = vmatprep.subr.bf16.mxu0 0
        %1924 = vmatpush1.bf16.msra.mxu0 %v1882
        %1925 = vmatprep.subr.bf16.mxu0 0
        %1926 = vmatpush1.bf16.msra.mxu0 %v1883
        %1927 = vmatprep.subr.bf16.mxu0 0
        %1928 = vmatpush1.bf16.msra.mxu0 %v1884
        %1929 = vmatprep.subr.bf16.mxu0 0
        %1930 = vmatpush1.bf16.msra.mxu0 %v1885
        %1931 = vmatprep.subr.bf16.mxu0 0
        %1932 = vmatpush1.bf16.msra.mxu0 %v1886
        %1933 = vmatprep.subr.bf16.mxu0 0
        %1934 = vmatpush1.bf16.msra.mxu0 %v1887
        %1935 = vmatprep.subr.bf16.mxu0 0
        %1936 = vmatpush1.bf16.msra.mxu0 %v1888
        %1937 = vmatprep.mubr.bf16.mxu0 %v1769
        %1938 = vmatmul.mubr.bf16.gmra.mrb[0].mxu0 %v1768
        %v1939 = vpop.f32.mrb[0].mxu0
        %v1940 = vadd.f32 %v1807, %v1939
        %v1941 = vpop.f32.mrb[0].mxu0
        %v1942 = vpop.f32.mrb[0].mxu0
        %v1943 = vadd.f32 %v1807, %v1942
        %v1944 = vpop.f32.mrb[0].mxu0
        %1945 = vdwg.mxu0
        %v1946 = vadd.f32 %v1940, %v901
        %v1947 = vadd.f32 %v1943, %v902
        %v1948 = vld [vmem:[%s834] sm:$0x1]
        %v1949 = vld [vmem:[%s837] sm:$0x1]
        %1950 = vadd.xlane.f32.xlu0 %v1946
        %v1951 = vpop.xlane.xlu0 %1950
        %1952 = vadd.xlane.f32.xlu0 %v1947
        %v1953 = vpop.xlane.xlu0 %1952
        %v1954 = vrcp.pop 128.0
        %v1955 = vmul.f32 %v1951, %v1954
        %v1956 = vmul.f32 %v1953, %v1954
        %v1957 = vsub.f32 %v1946, %v1955
        %v1958 = vsub.f32 %v1947, %v1956
        %v1959 = vmul.f32 %v1957, %v1957
        %v1960 = vmul.f32 %v1958, %v1958
        %1961 = vadd.xlane.f32.xlu0 %v1959
        %v1962 = vpop.xlane.xlu0 %1961
        %1963 = vadd.xlane.f32.xlu0 %v1960
        %v1964 = vpop.xlane.xlu0 %1963
        %v1965 = vmul.f32 %v1962, %v1954
        %v1966 = vmul.f32 %v1964, %v1954
        %v1967 = vadd.f32 %v1965, 1e-12
        %v1968 = vadd.f32 %v1966, 1e-12
        %v1969 = vrsqrt.pop %v1967
        %v1970 = vrsqrt.pop %v1968
        %v1971 = vmul.f32 %v1957, %v1969
        %v1972 = vmul.f32 %v1958, %v1970
        %v1974 = vlaneseq
        %v1975 = vshrl.u32 %v1974, 7
        %v1976 = vsub.s32 0, %v1975
        %v1977 = vrot.slane %v1948, %v1976
        %v1979 = vmul.f32 %v1971, %v1977
        %v1980 = vmul.f32 %v1972, %v1977
        %v1982 = vlaneseq
        %v1983 = vshrl.u32 %v1982, 7
        %v1984 = vsub.s32 0, %v1983
        %v1985 = vrot.slane %v1949, %v1984
        %v1987 = vadd.f32 %v1979, %v1985
        %v1988 = vadd.f32 %v1980, %v1985
        %v1989 = vpack.c.bf16 %v1988, %v1987
        %v1990 = vld [vmem:[%s718] sm:$0xff]
        %v1991 = vld [vmem:[%s718 + $0x8] sm:$0xff]
        %v1992 = vld [vmem:[%s718 + $0x10] sm:$0xff]
        %v1993 = vld [vmem:[%s718 + $0x18] sm:$0xff]
        %v1994 = vld [vmem:[%s718 + $0x20] sm:$0xff]
        %v1995 = vld [vmem:[%s718 + $0x28] sm:$0xff]
        %v1996 = vld [vmem:[%s718 + $0x30] sm:$0xff]
        %v1997 = vld [vmem:[%s718 + $0x38] sm:$0xff]
        %v1998 = vld [vmem:[%s718 + $0x40] sm:$0xff]
        %v1999 = vld [vmem:[%s718 + $0x48] sm:$0xff]
        %v2000 = vld [vmem:[%s718 + $0x50] sm:$0xff]
        %v2001 = vld [vmem:[%s718 + $0x58] sm:$0xff]
        %v2002 = vld [vmem:[%s718 + $0x60] sm:$0xff]
        %v2003 = vld [vmem:[%s718 + $0x68] sm:$0xff]
        %v2004 = vld [vmem:[%s718 + $0x70] sm:$0xff]
        %v2005 = vld [vmem:[%s718 + $0x78] sm:$0xff]
        %v2006 = vld [vmem:[%s841] sm:$0x3]
        %v2008 = vlaneseq
        %v2009 = vshrl.u32 %v2008, 7
        %v2010 = vsub.s32 0, %v2009
        %v2011 = vrot.slane %v2006, %v2010
        %v2012 = vlaneseq
        %v2013 = vshrl.u32 %v2012, 7
        %v2014 = vsub.s32 1, %v2013
        %v2015 = vrot.slane %v2006, %v2014
        %v2034 = vunpack.c.l.b16 %v1990
        %v2035 = vunpack.c.h.b16 %v1990
        %v2036 = vunpack.c.l.b16 %v1991
        %v2037 = vunpack.c.h.b16 %v1991
        %v2038 = vunpack.c.l.b16 %v1992
        %v2039 = vunpack.c.h.b16 %v1992
        %v2040 = vunpack.c.l.b16 %v1993
        %v2041 = vunpack.c.h.b16 %v1993
        %v2042 = vunpack.c.l.b16 %v1994
        %v2043 = vunpack.c.h.b16 %v1994
        %v2044 = vunpack.c.l.b16 %v1995
        %v2045 = vunpack.c.h.b16 %v1995
        %v2046 = vunpack.c.l.b16 %v1996
        %v2047 = vunpack.c.h.b16 %v1996
        %v2048 = vunpack.c.l.b16 %v1997
        %v2049 = vunpack.c.h.b16 %v1997
        %v2050 = vunpack.c.l.b16 %v1998
        %v2051 = vunpack.c.h.b16 %v1998
        %v2052 = vunpack.c.l.b16 %v1999
        %v2053 = vunpack.c.h.b16 %v1999
        %v2054 = vunpack.c.l.b16 %v2000
        %v2055 = vunpack.c.h.b16 %v2000
        %v2056 = vunpack.c.l.b16 %v2001
        %v2057 = vunpack.c.h.b16 %v2001
        %v2058 = vunpack.c.l.b16 %v2002
        %v2059 = vunpack.c.h.b16 %v2002
        %v2060 = vunpack.c.l.b16 %v2003
        %v2061 = vunpack.c.h.b16 %v2003
        %v2062 = vunpack.c.l.b16 %v2004
        %v2063 = vunpack.c.h.b16 %v2004
        %v2064 = vunpack.c.l.b16 %v2005
        %v2065 = vunpack.c.h.b16 %v2005
        %v2066 = vpack.c.b16 %v2036, %v2034
        %v2067 = vpack.c.b16 %v2037, %v2035
        %v2068 = vpack.c.b16 %v2040, %v2038
        %v2069 = vpack.c.b16 %v2041, %v2039
        %v2070 = vpack.c.b16 %v2044, %v2042
        %v2071 = vpack.c.b16 %v2045, %v2043
        %v2072 = vpack.c.b16 %v2048, %v2046
        %v2073 = vpack.c.b16 %v2049, %v2047
        %v2074 = vpack.c.b16 %v2052, %v2050
        %v2075 = vpack.c.b16 %v2053, %v2051
        %v2076 = vpack.c.b16 %v2056, %v2054
        %v2077 = vpack.c.b16 %v2057, %v2055
        %v2078 = vpack.c.b16 %v2060, %v2058
        %v2079 = vpack.c.b16 %v2061, %v2059
        %v2080 = vpack.c.b16 %v2064, %v2062
        %v2081 = vpack.c.b16 %v2065, %v2063
        %2098 = vmatprep.subr.bf16.mxu0 %v2067
        %2099 = vmatpush1.bf16.msra.mxu0 %v2066
        %2100 = vmatprep.subr.bf16.mxu0 %v2069
        %2101 = vmatpush1.bf16.msra.mxu0 %v2068
        %2102 = vmatprep.subr.bf16.mxu0 %v2071
        %2103 = vmatpush1.bf16.msra.mxu0 %v2070
        %2104 = vmatprep.subr.bf16.mxu0 %v2073
        %2105 = vmatpush1.bf16.msra.mxu0 %v2072
        %2106 = vmatprep.subr.bf16.mxu0 %v2075
        %2107 = vmatpush1.bf16.msra.mxu0 %v2074
        %2108 = vmatprep.subr.bf16.mxu0 %v2077
        %2109 = vmatpush1.bf16.msra.mxu0 %v2076
        %2110 = vmatprep.subr.bf16.mxu0 %v2079
        %2111 = vmatpush1.bf16.msra.mxu0 %v2078
        %2112 = vmatprep.subr.bf16.mxu0 %v2081
        %2113 = vmatpush1.bf16.msra.mxu0 %v2080
        %2114 = vmatprep.subr.bf16.mxu0 0
        %2115 = vmatpush1.bf16.msra.mxu0 0
        %2116 = vmatprep.subr.bf16.mxu0 0
        %2117 = vmatpush1.bf16.msra.mxu0 0
        %2118 = vmatprep.subr.bf16.mxu0 0
        %2119 = vmatpush1.bf16.msra.mxu0 0
        %2120 = vmatprep.subr.bf16.mxu0 0
        %2121 = vmatpush1.bf16.msra.mxu0 0
        %2122 = vmatprep.subr.bf16.mxu0 0
        %2123 = vmatpush1.bf16.msra.mxu0 0
        %2124 = vmatprep.subr.bf16.mxu0 0
        %2125 = vmatpush1.bf16.msra.mxu0 0
        %2126 = vmatprep.subr.bf16.mxu0 0
        %2127 = vmatpush1.bf16.msra.mxu0 0
        %2128 = vmatprep.subr.bf16.mxu0 0
        %2129 = vmatpush1.bf16.msra.mxu0 0
        %2130 = vmatprep.mubr.bf16.mxu0 0
        %2131 = vmatmul.mubr.bf16.gmra.mrb[0].mxu0 %v1989
        %v2132 = vpop.f32.mrb[0].mxu0
        %v2133 = vadd.f32 %v2011, %v2132
        %v2134 = vpop.f32.mrb[0].mxu0
        %v2135 = vadd.f32 %v2015, %v2134
        %v2136 = vpop.f32.mrb[0].mxu0
        %v2137 = vadd.f32 %v2011, %v2136
        %v2138 = vpop.f32.mrb[0].mxu0
        %v2139 = vadd.f32 %v2015, %v2138
        %2140 = vdwg.mxu0
        %v2141 = vmul.f32 %v2133, 0.5
        %v2142 = vmul.f32 %v2135, 0.5
        %v2143 = vmul.f32 %v2137, 0.5
        %v2144 = vmul.f32 %v2139, 0.5
        %v2145 = vmul.f32 %v2133, 0.044715
        %v2146 = vmul.f32 %v2135, 0.044715
        %v2147 = vmul.f32 %v2137, 0.044715
        %v2148 = vmul.f32 %v2139, 0.044715
        %v2149 = vmul.f32 %v2145, %v2133
        %v2150 = vmul.f32 %v2146, %v2135
        %v2151 = vmul.f32 %v2147, %v2137
        %v2152 = vmul.f32 %v2148, %v2139
        %v2153 = vmul.f32 %v2149, %v2133
        %v2154 = vmul.f32 %v2150, %v2135
        %v2155 = vmul.f32 %v2151, %v2137
        %v2156 = vmul.f32 %v2152, %v2139
        %v2157 = vadd.f32 %v2133, %v2153
        %v2158 = vadd.f32 %v2135, %v2154
        %v2159 = vadd.f32 %v2137, %v2155
        %v2160 = vadd.f32 %v2139, %v2156
        %v2161 = vmul.f32 %v2157, 0.7978846
        %v2162 = vmul.f32 %v2158, 0.7978846
        %v2163 = vmul.f32 %v2159, 0.7978846
        %v2164 = vmul.f32 %v2160, 0.7978846
        %v2165 = vtanh.pop %v2161
        %v2166 = vtanh.pop %v2162
        %v2167 = vtanh.pop %v2163
        %v2168 = vtanh.pop %v2164
        %v2169 = vadd.f32 %v2165, 1.0
        %v2170 = vadd.f32 %v2166, 1.0
        %v2171 = vadd.f32 %v2167, 1.0
        %v2172 = vadd.f32 %v2168, 1.0
        %v2173 = vmul.f32 %v2141, %v2169
        %v2174 = vmul.f32 %v2142, %v2170
        %v2175 = vmul.f32 %v2143, %v2171
        %v2176 = vmul.f32 %v2144, %v2172
        %v2177 = vpack.c.bf16 %v2175, %v2173
        %v2178 = vpack.c.bf16 %v2176, %v2174
        %v2179 = vld [vmem:[%s727] sm:$0xf]
        %v2180 = vld [vmem:[%s727 + $0x4] sm:$0xf]
        %v2181 = vld [vmem:[%s727 + $0x8] sm:$0xf]
        %v2182 = vld [vmem:[%s727 + $0xc] sm:$0xf]
        %v2183 = vld [vmem:[%s727 + $0x10] sm:$0xf]
        %v2184 = vld [vmem:[%s727 + $0x14] sm:$0xf]
        %v2185 = vld [vmem:[%s727 + $0x18] sm:$0xf]
        %v2186 = vld [vmem:[%s727 + $0x1c] sm:$0xf]
        %v2187 = vld [vmem:[%s727 + $0x20] sm:$0xf]
        %v2188 = vld [vmem:[%s727 + $0x24] sm:$0xf]
        %v2189 = vld [vmem:[%s727 + $0x28] sm:$0xf]
        %v2190 = vld [vmem:[%s727 + $0x2c] sm:$0xf]
        %v2191 = vld [vmem:[%s727 + $0x30] sm:$0xf]
        %v2192 = vld [vmem:[%s727 + $0x34] sm:$0xf]
        %v2193 = vld [vmem:[%s727 + $0x38] sm:$0xf]
        %v2194 = vld [vmem:[%s727 + $0x3c] sm:$0xf]
        %v2195 = vld [vmem:[%s727 + $0x40] sm:$0xf]
        %v2196 = vld [vmem:[%s727 + $0x44] sm:$0xf]
        %v2197 = vld [vmem:[%s727 + $0x48] sm:$0xf]
        %v2198 = vld [vmem:[%s727 + $0x4c] sm:$0xf]
        %v2199 = vld [vmem:[%s727 + $0x50] sm:$0xf]
        %v2200 = vld [vmem:[%s727 + $0x54] sm:$0xf]
        %v2201 = vld [vmem:[%s727 + $0x58] sm:$0xf]
        %v2202 = vld [vmem:[%s727 + $0x5c] sm:$0xf]
        %v2203 = vld [vmem:[%s727 + $0x60] sm:$0xf]
        %v2204 = vld [vmem:[%s727 + $0x64] sm:$0xf]
        %v2205 = vld [vmem:[%s727 + $0x68] sm:$0xf]
        %v2206 = vld [vmem:[%s727 + $0x6c] sm:$0xf]
        %v2207 = vld [vmem:[%s727 + $0x70] sm:$0xf]
        %v2208 = vld [vmem:[%s727 + $0x74] sm:$0xf]
        %v2209 = vld [vmem:[%s727 + $0x78] sm:$0xf]
        %v2210 = vld [vmem:[%s727 + $0x7c] sm:$0xf]
        %v2211 = vld [vmem:[%s844] sm:$0x1]
        %v2213 = vlaneseq
        %v2214 = vshrl.u32 %v2213, 7
        %v2215 = vsub.s32 0, %v2214
        %v2216 = vrot.slane %v2211, %v2215
        %v2250 = vunpack.c.l.b16 %v2179
        %v2251 = vunpack.c.l.b16 %v2180
        %v2252 = vunpack.c.l.b16 %v2181
        %v2253 = vunpack.c.l.b16 %v2182
        %v2254 = vunpack.c.l.b16 %v2183
        %v2255 = vunpack.c.l.b16 %v2184
        %v2256 = vunpack.c.l.b16 %v2185
        %v2257 = vunpack.c.l.b16 %v2186
        %v2258 = vunpack.c.l.b16 %v2187
        %v2259 = vunpack.c.l.b16 %v2188
        %v2260 = vunpack.c.l.b16 %v2189
        %v2261 = vunpack.c.l.b16 %v2190
        %v2262 = vunpack.c.l.b16 %v2191
        %v2263 = vunpack.c.l.b16 %v2192
        %v2264 = vunpack.c.l.b16 %v2193
        %v2265 = vunpack.c.l.b16 %v2194
        %v2266 = vunpack.c.l.b16 %v2195
        %v2267 = vunpack.c.l.b16 %v2196
        %v2268 = vunpack.c.l.b16 %v2197
        %v2269 = vunpack.c.l.b16 %v2198
        %v2270 = vunpack.c.l.b16 %v2199
        %v2271 = vunpack.c.l.b16 %v2200
        %v2272 = vunpack.c.l.b16 %v2201
        %v2273 = vunpack.c.l.b16 %v2202
        %v2274 = vunpack.c.l.b16 %v2203
        %v2275 = vunpack.c.l.b16 %v2204
        %v2276 = vunpack.c.l.b16 %v2205
        %v2277 = vunpack.c.l.b16 %v2206
        %v2278 = vunpack.c.l.b16 %v2207
        %v2279 = vunpack.c.l.b16 %v2208
        %v2280 = vunpack.c.l.b16 %v2209
        %v2281 = vunpack.c.l.b16 %v2210
        %v2282 = vpack.c.b16 %v2251, %v2250
        %v2283 = vpack.c.b16 %v2253, %v2252
        %v2284 = vpack.c.b16 %v2255, %v2254
        %v2285 = vpack.c.b16 %v2257, %v2256
        %v2286 = vpack.c.b16 %v2259, %v2258
        %v2287 = vpack.c.b16 %v2261, %v2260
        %v2288 = vpack.c.b16 %v2263, %v2262
        %v2289 = vpack.c.b16 %v2265, %v2264
        %v2290 = vpack.c.b16 %v2267, %v2266
        %v2291 = vpack.c.b16 %v2269, %v2268
        %v2292 = vpack.c.b16 %v2271, %v2270
        %v2293 = vpack.c.b16 %v2273, %v2272
        %v2294 = vpack.c.b16 %v2275, %v2274
        %v2295 = vpack.c.b16 %v2277, %v2276
        %v2296 = vpack.c.b16 %v2279, %v2278
        %v2297 = vpack.c.b16 %v2281, %v2280
        %2314 = vmatprep.subr.bf16.mxu0 0
        %2315 = vmatpush1.bf16.msra.mxu0 %v2282
        %2316 = vmatprep.subr.bf16.mxu0 0
        %2317 = vmatpush1.bf16.msra.mxu0 %v2283
        %2318 = vmatprep.subr.bf16.mxu0 0
        %2319 = vmatpush1.bf16.msra.mxu0 %v2284
        %2320 = vmatprep.subr.bf16.mxu0 0
        %2321 = vmatpush1.bf16.msra.mxu0 %v2285
        %2322 = vmatprep.subr.bf16.mxu0 0
        %2323 = vmatpush1.bf16.msra.mxu0 %v2286
        %2324 = vmatprep.subr.bf16.mxu0 0
        %2325 = vmatpush1.bf16.msra.mxu0 %v2287
        %2326 = vmatprep.subr.bf16.mxu0 0
        %2327 = vmatpush1.bf16.msra.mxu0 %v2288
        %2328 = vmatprep.subr.bf16.mxu0 0
        %2329 = vmatpush1.bf16.msra.mxu0 %v2289
        %2330 = vmatprep.subr.bf16.mxu0 0
        %2331 = vmatpush1.bf16.msra.mxu0 %v2290
        %2332 = vmatprep.subr.bf16.mxu0 0
        %2333 = vmatpush1.bf16.msra.mxu0 %v2291
        %2334 = vmatprep.subr.bf16.mxu0 0
        %2335 = vmatpush1.bf16.msra.mxu0 %v2292
        %2336 = vmatprep.subr.bf16.mxu0 0
        %2337 = vmatpush1.bf16.msra.mxu0 %v2293
        %2338 = vmatprep.subr.bf16.mxu0 0
        %2339 = vmatpush1.bf16.msra.mxu0 %v2294
        %2340 = vmatprep.subr.bf16.mxu0 0
        %2341 = vmatpush1.bf16.msra.mxu0 %v2295
        %2342 = vmatprep.subr.bf16.mxu0 0
        %2343 = vmatpush1.bf16.msra.mxu0 %v2296
        %2344 = vmatprep.subr.bf16.mxu0 0
        %2345 = vmatpush1.bf16.msra.mxu0 %v2297
        %2346 = vmatprep.mubr.bf16.mxu0 %v2178
        %2347 = vmatmul.mubr.bf16.gmra.mrb[0].mxu0 %v2177
        %v2348 = vpop.f32.mrb[0].mxu0
        %v2349 = vadd.f32 %v2216, %v2348
        %v2350 = vpop.f32.mrb[0].mxu0
        %v2351 = vpop.f32.mrb[0].mxu0
        %v2352 = vadd.f32 %v2216, %v2351
        %v2353 = vpop.f32.mrb[0].mxu0
        %2354 = vdwg.mxu0
        %v2355 = vadd.f32 %v2349, %v1987
        %v2356 = vadd.f32 %v2352, %v1988
        %v2357 = vld [vmem:[%s847] sm:$0x1]
        %v2358 = vld [vmem:[%s850] sm:$0x1]
        %2359 = vadd.xlane.f32.xlu0 %v2355
        %v2360 = vpop.xlane.xlu0 %2359
        %2361 = vadd.xlane.f32.xlu0 %v2356
        %v2362 = vpop.xlane.xlu0 %2361
        %v2363 = vmul.f32 %v2360, %v1954
        %v2364 = vmul.f32 %v2362, %v1954
        %v2365 = vsub.f32 %v2355, %v2363
        %v2366 = vsub.f32 %v2356, %v2364
        %v2367 = vmul.f32 %v2365, %v2365
        %v2368 = vmul.f32 %v2366, %v2366
        %2369 = vadd.xlane.f32.xlu0 %v2367
        %v2370 = vpop.xlane.xlu0 %2369
        %2371 = vadd.xlane.f32.xlu0 %v2368
        %v2372 = vpop.xlane.xlu0 %2371
        %v2373 = vmul.f32 %v2370, %v1954
        %v2374 = vmul.f32 %v2372, %v1954
        %v2375 = vadd.f32 %v2373, 1e-12
        %v2376 = vadd.f32 %v2374, 1e-12
        %v2377 = vrsqrt.pop %v2375
        %v2378 = vrsqrt.pop %v2376
        %v2379 = vmul.f32 %v2365, %v2377
        %v2380 = vmul.f32 %v2366, %v2378
        %v2382 = vlaneseq
        %v2383 = vshrl.u32 %v2382, 7
        %v2384 = vsub.s32 0, %v2383
        %v2385 = vrot.slane %v2357, %v2384
        %v2387 = vmul.f32 %v2379, %v2385
        %v2388 = vmul.f32 %v2380, %v2385
        %v2390 = vlaneseq
        %v2391 = vshrl.u32 %v2390, 7
        %v2392 = vsub.s32 0, %v2391
        %v2393 = vrot.slane %v2358, %v2392
        %v2395 = vadd.f32 %v2387, %v2393
        %v2396 = vadd.f32 %v2388, %v2393
        %2397 = vst [vmem:[#allocation2] sm:$0xff] %v2395
        %2398 = vst [vmem:[#allocation2 + $0x8] sm:$0xff] %v2396
        %p2399 = scmp.eq.s32.totalorder %s38, 1
        // Predicated region
        $region117: #{bert_sst2_forward.1} parent=99 // pred_check
          %p2400 = pneg %p2399
        $region118: #{bert_sst2_forward.1} parent=99 // pred_check_branch
          %2402 = sbr.rel (%p2400) target = $region120
        $region119: #{bert_sst2_forward.1} parent=99 // pred_region
          %v2403 = vld [vmem:[#allocation2] ss:$8 sm:$0x3]
          %v2404 = vpack.c.bf16 %v2403, %v2403
          %v2405 = vld [vmem:[%s16] sm:$0xf]
          %v2406 = vld [vmem:[%s16 + $0x4] sm:$0xf]
          %v2407 = vld [vmem:[%s16 + $0x8] sm:$0xf]
          %v2408 = vld [vmem:[%s16 + $0xc] sm:$0xf]
          %v2409 = vld [vmem:[%s16 + $0x10] sm:$0xf]
          %v2410 = vld [vmem:[%s16 + $0x14] sm:$0xf]
          %v2411 = vld [vmem:[%s16 + $0x18] sm:$0xf]
          %v2412 = vld [vmem:[%s16 + $0x1c] sm:$0xf]
          %v2413 = vld [vmem:[%s16 + $0x20] sm:$0xf]
          %v2414 = vld [vmem:[%s16 + $0x24] sm:$0xf]
          %v2415 = vld [vmem:[%s16 + $0x28] sm:$0xf]
          %v2416 = vld [vmem:[%s16 + $0x2c] sm:$0xf]
          %v2417 = vld [vmem:[%s16 + $0x30] sm:$0xf]
          %v2418 = vld [vmem:[%s16 + $0x34] sm:$0xf]
          %v2419 = vld [vmem:[%s16 + $0x38] sm:$0xf]
          %v2420 = vld [vmem:[%s16 + $0x3c] sm:$0xf]
          %v2421 = vld [vmem:[%s17] sm:$0x1]
          %v2423 = vlaneseq
          %v2424 = vshrl.u32 %v2423, 7
          %v2425 = vsub.s32 0, %v2424
          %v2426 = vrot.slane %v2421, %v2425
          %v2444 = vunpack.c.l.b16 %v2405
          %v2445 = vunpack.c.l.b16 %v2406
          %v2446 = vunpack.c.l.b16 %v2407
          %v2447 = vunpack.c.l.b16 %v2408
          %v2448 = vunpack.c.l.b16 %v2409
          %v2449 = vunpack.c.l.b16 %v2410
          %v2450 = vunpack.c.l.b16 %v2411
          %v2451 = vunpack.c.l.b16 %v2412
          %v2452 = vunpack.c.l.b16 %v2413
          %v2453 = vunpack.c.l.b16 %v2414
          %v2454 = vunpack.c.l.b16 %v2415
          %v2455 = vunpack.c.l.b16 %v2416
          %v2456 = vunpack.c.l.b16 %v2417
          %v2457 = vunpack.c.l.b16 %v2418
          %v2458 = vunpack.c.l.b16 %v2419
          %v2459 = vunpack.c.l.b16 %v2420
          %v2460 = vpack.c.b16 %v2445, %v2444
          %v2461 = vpack.c.b16 %v2447, %v2446
          %v2462 = vpack.c.b16 %v2449, %v2448
          %v2463 = vpack.c.b16 %v2451, %v2450
          %v2464 = vpack.c.b16 %v2453, %v2452
          %v2465 = vpack.c.b16 %v2455, %v2454
          %v2466 = vpack.c.b16 %v2457, %v2456
          %v2467 = vpack.c.b16 %v2459, %v2458
          %2476 = vmatprep.subr.bf16.mxu0 0
          %2477 = vmatpush1.bf16.msra.mxu0 %v2460
          %2478 = vmatprep.subr.bf16.mxu0 0
          %2479 = vmatpush1.bf16.msra.mxu0 %v2461
          %2480 = vmatprep.subr.bf16.mxu0 0
          %2481 = vmatpush1.bf16.msra.mxu0 %v2462
          %2482 = vmatprep.subr.bf16.mxu0 0
          %2483 = vmatpush1.bf16.msra.mxu0 %v2463
          %2484 = vmatprep.subr.bf16.mxu0 0
          %2485 = vmatpush1.bf16.msra.mxu0 %v2464
          %2486 = vmatprep.subr.bf16.mxu0 0
          %2487 = vmatpush1.bf16.msra.mxu0 %v2465
          %2488 = vmatprep.subr.bf16.mxu0 0
          %2489 = vmatpush1.bf16.msra.mxu0 %v2466
          %2490 = vmatprep.subr.bf16.mxu0 0
          %2491 = vmatpush1.bf16.msra.mxu0 %v2467
          %2492 = vmatprep.subr.bf16.mxu0 0
          %2493 = vmatpush1.bf16.msra.mxu0 0
          %2494 = vmatprep.subr.bf16.mxu0 0
          %2495 = vmatpush1.bf16.msra.mxu0 0
          %2496 = vmatprep.subr.bf16.mxu0 0
          %2497 = vmatpush1.bf16.msra.mxu0 0
          %2498 = vmatprep.subr.bf16.mxu0 0
          %2499 = vmatpush1.bf16.msra.mxu0 0
          %2500 = vmatprep.subr.bf16.mxu0 0
          %2501 = vmatpush1.bf16.msra.mxu0 0
          %2502 = vmatprep.subr.bf16.mxu0 0
          %2503 = vmatpush1.bf16.msra.mxu0 0
          %2504 = vmatprep.subr.bf16.mxu0 0
          %2505 = vmatpush1.bf16.msra.mxu0 0
          %2506 = vmatprep.subr.bf16.mxu0 0
          %2507 = vmatpush1.bf16.msra.mxu0 0
          %2508 = vmatprep.mubr.bf16.mxu0 0
          %2509 = vmatmul.mubr.bf16.gmra.mrb[0].mxu0 %v2404
          %v2510 = vpop.f32.mrb[0].mxu0
          %v2511 = vadd.f32 %v2426, %v2510
          %v2512 = vpop.f32.mrb[0].mxu0
          %v2513 = vpop.f32.mrb[0].mxu0
          %v2514 = vpop.f32.mrb[0].mxu0
          %2515 = vdwg.mxu0
          %v2516 = vtanh.pop %v2511
          %v2517 = vpack.c.bf16 %v2516, %v2516
          %v2518 = vld [vmem:[%s18] sm:$0xf]
          %v2519 = vld [vmem:[%s18 + $0x4] sm:$0xf]
          %v2520 = vld [vmem:[%s18 + $0x8] sm:$0xf]
          %v2521 = vld [vmem:[%s18 + $0xc] sm:$0xf]
          %v2522 = vld [vmem:[%s18 + $0x10] sm:$0xf]
          %v2523 = vld [vmem:[%s18 + $0x14] sm:$0xf]
          %v2524 = vld [vmem:[%s18 + $0x18] sm:$0xf]
          %v2525 = vld [vmem:[%s18 + $0x1c] sm:$0xf]
          %v2526 = vld [vmem:[%s18 + $0x20] sm:$0xf]
          %v2527 = vld [vmem:[%s18 + $0x24] sm:$0xf]
          %v2528 = vld [vmem:[%s18 + $0x28] sm:$0xf]
          %v2529 = vld [vmem:[%s18 + $0x2c] sm:$0xf]
          %v2530 = vld [vmem:[%s18 + $0x30] sm:$0xf]
          %v2531 = vld [vmem:[%s18 + $0x34] sm:$0xf]
          %v2532 = vld [vmem:[%s18 + $0x38] sm:$0xf]
          %v2533 = vld [vmem:[%s18 + $0x3c] sm:$0xf]
          %v2534 = vld [vmem:[%s19] sm:$0x1]
          %v2536 = vlaneseq
          %v2537 = vshrl.u32 %v2536, 7
          %v2538 = vsub.s32 0, %v2537
          %v2539 = vrot.slane %v2534, %v2538
          %v2557 = vunpack.c.l.b16 %v2518
          %v2558 = vunpack.c.l.b16 %v2519
          %v2559 = vunpack.c.l.b16 %v2520
          %v2560 = vunpack.c.l.b16 %v2521
          %v2561 = vunpack.c.l.b16 %v2522
          %v2562 = vunpack.c.l.b16 %v2523
          %v2563 = vunpack.c.l.b16 %v2524
          %v2564 = vunpack.c.l.b16 %v2525
          %v2565 = vunpack.c.l.b16 %v2526
          %v2566 = vunpack.c.l.b16 %v2527
          %v2567 = vunpack.c.l.b16 %v2528
          %v2568 = vunpack.c.l.b16 %v2529
          %v2569 = vunpack.c.l.b16 %v2530
          %v2570 = vunpack.c.l.b16 %v2531
          %v2571 = vunpack.c.l.b16 %v2532
          %v2572 = vunpack.c.l.b16 %v2533
          %v2573 = vpack.c.b16 %v2558, %v2557
          %v2574 = vpack.c.b16 %v2560, %v2559
          %v2575 = vpack.c.b16 %v2562, %v2561
          %v2576 = vpack.c.b16 %v2564, %v2563
          %v2577 = vpack.c.b16 %v2566, %v2565
          %v2578 = vpack.c.b16 %v2568, %v2567
          %v2579 = vpack.c.b16 %v2570, %v2569
          %v2580 = vpack.c.b16 %v2572, %v2571
          %2589 = vmatprep.subr.bf16.mxu0 0
          %2590 = vmatpush1.bf16.msra.mxu0 %v2573
          %2591 = vmatprep.subr.bf16.mxu0 0
          %2592 = vmatpush1.bf16.msra.mxu0 %v2574
          %2593 = vmatprep.subr.bf16.mxu0 0
          %2594 = vmatpush1.bf16.msra.mxu0 %v2575
          %2595 = vmatprep.subr.bf16.mxu0 0
          %2596 = vmatpush1.bf16.msra.mxu0 %v2576
          %2597 = vmatprep.subr.bf16.mxu0 0
          %2598 = vmatpush1.bf16.msra.mxu0 %v2577
          %2599 = vmatprep.subr.bf16.mxu0 0
          %2600 = vmatpush1.bf16.msra.mxu0 %v2578
          %2601 = vmatprep.subr.bf16.mxu0 0
          %2602 = vmatpush1.bf16.msra.mxu0 %v2579
          %2603 = vmatprep.subr.bf16.mxu0 0
          %2604 = vmatpush1.bf16.msra.mxu0 %v2580
          %2605 = vmatprep.subr.bf16.mxu0 0
          %2606 = vmatpush1.bf16.msra.mxu0 0
          %2607 = vmatprep.subr.bf16.mxu0 0
          %2608 = vmatpush1.bf16.msra.mxu0 0
          %2609 = vmatprep.subr.bf16.mxu0 0
          %2610 = vmatpush1.bf16.msra.mxu0 0
          %2611 = vmatprep.subr.bf16.mxu0 0
          %2612 = vmatpush1.bf16.msra.mxu0 0
          %2613 = vmatprep.subr.bf16.mxu0 0
          %2614 = vmatpush1.bf16.msra.mxu0 0
          %2615 = vmatprep.subr.bf16.mxu0 0
          %2616 = vmatpush1.bf16.msra.mxu0 0
          %2617 = vmatprep.subr.bf16.mxu0 0
          %2618 = vmatpush1.bf16.msra.mxu0 0
          %2619 = vmatprep.subr.bf16.mxu0 0
          %2620 = vmatpush1.bf16.msra.mxu0 0
          %2621 = vmatprep.mubr.bf16.mxu0 0
          %2622 = vmatmul.mubr.bf16.gmra.mrb[0].mxu0 %v2517
          %v2623 = vpop.f32.mrb[0].mxu0
          %v2624 = vadd.f32 %v2539, %v2623
          %v2625 = vpop.f32.mrb[0].mxu0
          %v2626 = vpop.f32.mrb[0].mxu0
          %v2627 = vpop.f32.mrb[0].mxu0
          %2628 = vdwg.mxu0
          %2629 = vst [vmem:[#allocation10] sm:$0x3] %v2624
        $region120: #{bert_sst2_forward.1} parent=99 // pred_fallthru
          _
        // Predicated region
        $region121: #{bert_sst2_forward.1} parent=99 // pred_check
          %p2630 = pneg %p531
        $region122: #{bert_sst2_forward.1} parent=99 // pred_check_branch
          %2632 = sbr.rel (%p2630) target = $region124
        $region123: #{bert_sst2_forward.1} parent=99 // pred_region
          %s2634 = ssub.s32 32, 32
          %2635 = vsyncadd [#allocation6], %s2634
          %s2637 = sshll.u32 [#allocation10], 4
          %s2638 = int_to_ptr.vmem [resolvable:$true] %s2637
          %2640 = dma.vmem_to_hbm [thread:$0]  %s2638, 32, %s20, [#allocation6]
        $region124: #{bert_sst2_forward.1} parent=99 // pred_fallthru
          _
        // Predicated region
        $region125: #{bert_sst2_forward.1} parent=99 // pred_check
          %p2641 = pneg %p531
        $region126: #{bert_sst2_forward.1} parent=99 // pred_check_branch
          %2643 = sbr.rel (%p2641) target = $region128
        $region127: #{bert_sst2_forward.1} parent=99 // pred_region
          %2644 = dma.done [#allocation6], 32
        $region128: #{bert_sst2_forward.1} parent=99 // pred_fallthru
          _
      $region100: #{bert_sst2_forward.1} parent=5 // pred_fallthru
        _
      %p2645 = scmp.le.s32.totalorder 2, %s33
      // Predicated region
      $region129: #{bert_sst2_forward.1} parent=5 // pred_check
        %p2646 = pneg %p2645
      $region130: #{bert_sst2_forward.1} parent=5 // pred_check_branch
        %2648 = sbr.rel (%p2646) target = $region132
      $region131: #{bert_sst2_forward.1} parent=5 // pred_region
        %s2649 = ssub.s32 %s33, 2
      $region132: #{bert_sst2_forward.1} parent=5 // pred_fallthru
        _
    $region6: #{bert_sst2_forward.1} parent=1 // loop_footer
      %s37 = sadd.s32 1, %s33
    $region7: #{bert_sst2_forward.1} parent=1 // loop_footer_branch
      %32 = sbr.rel target = $region3
    $region8: #{bert_sst2_forward.1} parent=1 // loop_exit
      _
    %2650 = vsyncpa [#allocation5], 1
    %s2651 = scalar_lea.sflag [#allocation5], 1
    %2652 = vsyncpa %s2651, 1
    %2653 = vsyncpa [#allocation8], 1
    %s2654 = scalar_lea.sflag [#allocation8], 1
    %2655 = vsyncpa %s2654, 1
    %2656 = vsyncpa [#allocation6], 1
    %s2657 = scalar_lea.sflag [#allocation6], 1
    %2658 = vsyncpa %s2657, 1

</llo_original>
